<compile_context>
chip_gen: v7x
topology: tpu7x:2x2x1
jax: 0.10.0
libtpu: 0.0.40
codegen_flags: <defaults>
</compile_context>

<pallas_src>
import functools

import jax
import jax.numpy as jnp
from jax import lax
from jax.experimental import pallas as pl
from jax.experimental.pallas import tpu as pltpu

LANE = 128


def _round_up(x, m):
    return ((x + m - 1) // m) * m


def _pad_last(a, n):
    pad = n - a.shape[-1]
    if pad == 0:
        return a
    return jnp.pad(a, [(0, 0)] * (a.ndim - 1) + [(0, pad)])


def _pad_second_last(a, n):
    pad = n - a.shape[-2]
    if pad == 0:
        return a
    return jnp.pad(a, [(0, 0)] * (a.ndim - 2) + [(0, pad), (0, 0)])


# --------------------------------------------------------------------------
# Kernel
# --------------------------------------------------------------------------
def generator_kernel(z_ref, t_ref,
                     w_ih0_ref, w_hh0_ref, b_gi0_ref, b_hhn0_ref,
                     w_ihr_ref, w_hhr_ref, b_gir_ref, b_hhnr_ref,
                     w_lin_ref, b_lin_ref, pad_row_ref,
                     o_ref,
                     gi_buf, h_buf,
                     *, num_layers, unroll):
    S, Bt, _ = z_ref.shape
    Hp = h_buf.shape[-1]

    def run_layer(x_2d, w_ih_t, b_gi, w_hh_t, b_hh_n):
        # Hoisted input projection: one big MXU matmul over the whole sequence
        # instead of S tiny per-step matmuls on the serial path.
        gi_all = jnp.dot(x_2d, w_ih_t, preferred_element_type=jnp.float32) + b_gi
        gi_buf[...] = gi_all.reshape(S, Bt, 3 * Hp)

        def step(s, h):
            gi = gi_buf[s]                                        # (Bt, 3Hp)
            gh = jnp.dot(h, w_hh_t, preferred_element_type=jnp.float32)
            r = jax.nn.sigmoid(gi[:, :Hp] + gh[:, :Hp])
            zg = jax.nn.sigmoid(gi[:, Hp:2 * Hp] + gh[:, Hp:2 * Hp])
            n = jnp.tanh(gi[:, 2 * Hp:] + r * (gh[:, 2 * Hp:] + b_hh_n))
            h_new = (1.0 - zg) * n + zg * h
            # Unconditional lane-dense store.  Values produced at padded
            # timesteps (s >= t[b]) never reach the returned output: they are
            # replaced by the precomputed pad row below, and by causality they
            # cannot influence any valid timestep of any layer.
            h_buf[s] = h_new
            return h_new

        lax.fori_loop(0, S, step, jnp.zeros((Bt, Hp), jnp.float32),
                      unroll=unroll)

    # ---- layer 0: input is z ----
    run_layer(z_ref[...].reshape(S * Bt, z_ref.shape[-1]),
              w_ih0_ref[...], b_gi0_ref[...], w_hh0_ref[...], b_hhn0_ref[...])

    # ---- layers 1..num_layers-1: input is the previous layer's output ----
    # The full h_buf is read into gi_buf before the loop overwrites it, so
    # there is no read-after-write hazard inside the step.
    for l in range(num_layers - 1):
        run_layer(h_buf[...].reshape(S * Bt, Hp),
                  w_ihr_ref[l], b_gir_ref[l], w_hhr_ref[l], b_hhnr_ref[l])

    # ---- Linear + Sigmoid; padded timesteps are a precomputed constant row ----
    h_seq = h_buf[...].reshape(S * Bt, Hp)
    logits = (jnp.dot(h_seq, w_lin_ref[...], preferred_element_type=jnp.float32)
              + b_lin_ref[...])
    out = jax.nn.sigmoid(logits).reshape(S, Bt, Hp)

    steps = lax.broadcasted_iota(jnp.int32, (S, Bt, 1), 0)
    valid = steps < t_ref[...].reshape(1, Bt, 1)
    o_ref[...] = jnp.where(valid, out, pad_row_ref[...].reshape(1, 1, Hp))


# --------------------------------------------------------------------------
# Wrapper-side weight preprocessing (one-time, plain JAX)
# --------------------------------------------------------------------------
def _prep_gru_layer(w_ih, w_hh, b_ih, b_hh, H, Hp, pad_input):
    """PyTorch GRU params -> pre-transposed, lane-padded, bias-folded tensors."""
    w_ih_g = [w_ih[g * H:(g + 1) * H] for g in range(3)]      # 3 x (H, in)
    w_hh_g = [w_hh[g * H:(g + 1) * H] for g in range(3)]      # 3 x (H, H)
    b_ih_g = [b_ih[:, g * H:(g + 1) * H] for g in range(3)]   # 3 x (1, H)
    b_hh_g = [b_hh[:, g * H:(g + 1) * H] for g in range(3)]

    w_ih_t = jnp.concatenate([_pad_last(g.T, Hp) for g in w_ih_g], axis=-1)
    if pad_input:                                              # (Hp, 3Hp)
        w_ih_t = _pad_second_last(w_ih_t, Hp)
    w_hh_t = jnp.concatenate([_pad_last(g.T, Hp) for g in w_hh_g], axis=-1)
    w_hh_t = _pad_second_last(w_hh_t, Hp)                      # (Hp, 3Hp)

    # Fold b_hh into the hoisted input projection for r and z gates; keep the
    # n-gate hidden bias separate (it sits inside r * (W_hn h + b_hn)).
    b_gi = jnp.concatenate([_pad_last(b_ih_g[0] + b_hh_g[0], Hp),
                            _pad_last(b_ih_g[1] + b_hh_g[1], Hp),
                            _pad_last(b_ih_g[2], Hp)], axis=-1)   # (1, 3Hp)
    b_hh_n = _pad_last(b_hh_g[2], Hp)                             # (1, Hp)
    return w_ih_t, w_hh_t, b_gi, b_hh_n


def generator_forward(z, t, params, *, num_layers, hidden_dim, padding_value,
                      max_seq, batch_tile=None):
    """z: (B, max_seq, latent_dim) f32, t: (B,) lengths -> (B, max_seq, H)."""
    B, S, L = z.shape
    assert S == max_seq
    H = hidden_dim
    Hp = _round_up(H, LANE)   # lane-dense hidden/gate width (zero-padded)

    # --- weight prep: pre-transpose, zero-pad to lane multiples, pre-sum biases
    w_ih0_t, w_hh0_t, b_gi0, b_hhn0 = _prep_gru_layer(
        params['w_ih0'], params['w_hh0'], params['b_ih0'], params['b_hh0'],
        H, Hp, pad_input=False)
    n_rest = params['w_ih_r'].shape[0]
    rest = [_prep_gru_layer(params['w_ih_r'][l], params['w_hh_r'][l],
                            params['b_ih_r'][l], params['b_hh_r'][l],
                            H, Hp, pad_input=True)
            for l in range(n_rest)]
    w_ihr_t = jnp.stack([r[0] for r in rest])
    w_hhr_t = jnp.stack([r[1] for r in rest])
    b_gir = jnp.stack([r[2] for r in rest])
    b_hhnr = jnp.stack([r[3] for r in rest])

    w_lin_t = _pad_second_last(_pad_last(params['w_lin'].T, Hp), Hp)  # (Hp, Hp)
    b_lin_p = _pad_last(params['b_lin'], Hp)                          # (1, Hp)

    # Padded GRU timesteps are the constant padding_value row, so their final
    # output is one precomputed row (no pad rows pushed through the kernel).
    pad_vec = jnp.full((H,), padding_value, jnp.float32)
    pad_row = jax.nn.sigmoid(pad_vec @ params['w_lin'].T + params['b_lin'][0])
    pad_row_p = _pad_last(pad_row.reshape(1, H), Hp)                  # (1, Hp)

    z_tm = jnp.transpose(z, (1, 0, 2)).astype(jnp.float32)            # (S, B, L)
    t2d = t.astype(jnp.int32).reshape(B, 1)

    # Batch grid ("parallel" -> shards across v7x's two TensorCores for big B).
    # batch_tile must divide B and be either B or a multiple of 8.
    Bt = batch_tile if batch_tile is not None else B
    assert B % Bt == 0
    grid = (B // Bt,)

    def _full(a):
        nd = a.ndim
        return pl.BlockSpec(a.shape, lambda i, _nd=nd: (0,) * _nd)

    kernel = functools.partial(generator_kernel,
                               num_layers=num_layers,
                               unroll=min(S, 8))

    out_tm = pl.pallas_call(
        kernel,
        out_shape=jax.ShapeDtypeStruct((S, B, Hp), jnp.float32),
        grid=grid,
        in_specs=[
            pl.BlockSpec((S, Bt, L), lambda i: (0, i, 0)),   # z (time-major)
            pl.BlockSpec((Bt, 1), lambda i: (i, 0)),         # lengths
            _full(w_ih0_t), _full(w_hh0_t), _full(b_gi0), _full(b_hhn0),
            _full(w_ihr_t), _full(w_hhr_t), _full(b_gir), _full(b_hhnr),
            _full(w_lin_t), _full(b_lin_p), _full(pad_row_p),
        ],
        out_specs=pl.BlockSpec((S, Bt, Hp), lambda i: (0, i, 0)),
        scratch_shapes=[pltpu.VMEM((S, Bt, 3 * Hp), jnp.float32),  # gi_buf
                        pltpu.VMEM((S, Bt, Hp), jnp.float32)],     # h_buf
        compiler_params=pltpu.CompilerParams(
            dimension_semantics=("parallel",),
            vmem_limit_bytes=48 * 1024 * 1024),
    )(z_tm, t2d,
      w_ih0_t, w_hh0_t, b_gi0, b_hhn0,
      w_ihr_t, w_hhr_t, b_gir, b_hhnr,
      w_lin_t, b_lin_p, pad_row_p)

    return jnp.transpose(out_tm[:, :, :H], (1, 0, 2))        # (B, S, H)


# --------------------------------------------------------------------------
# Pure-JAX reference (PyTorch semantics) + init
# --------------------------------------------------------------------------
def generator_reference(z, t, params, *, num_layers, hidden_dim, padding_value):
    B, S, _ = z.shape
    H = hidden_dim

    def gru_layer(x_seq, w_ih, w_hh, b_ih, b_hh):
        def cell(h, x):
            gi = x @ w_ih.T + b_ih
            gh = h @ w_hh.T + b_hh
            r = jax.nn.sigmoid(gi[:, :H] + gh[:, :H])
            zg = jax.nn.sigmoid(gi[:, H:2 * H] + gh[:, H:2 * H])
            n = jnp.tanh(gi[:, 2 * H:] + r * gh[:, 2 * H:])
            h_new = (1.0 - zg) * n + zg * h
            return h_new, h_new
        xs = jnp.transpose(x_seq, (1, 0, 2))
        _, ys = lax.scan(cell, jnp.zeros((B, H), jnp.float32), xs)
        return jnp.transpose(ys, (1, 0, 2))

    x = gru_layer(z, params['w_ih0'], params['w_hh0'],
                  params['b_ih0'], params['b_hh0'])
    for l in range(num_layers - 1):
        x = gru_layer(x, params['w_ih_r'][l], params['w_hh_r'][l],
                      params['b_ih_r'][l], params['b_hh_r'][l])
    valid = jnp.arange(S)[None, :, None] < t[:, None, None]
    h_o = jnp.where(valid, x, padding_value)
    return jax.nn.sigmoid(h_o @ params['w_lin'].T + params['b_lin'])


def xavier_uniform(key, shape):
    fan_out, fan_in = shape[-2], shape[-1]
    bound = (6.0 / (fan_in + fan_out)) ** 0.5
    return jax.random.uniform(key, shape, jnp.float32, -bound, bound)


def init_generator_params(key, latent_dim, hidden_dim, num_layers):
    H = hidden_dim
    keys = jax.random.split(key, 2 * num_layers + 1)
    w_ih0 = xavier_uniform(keys[0], (3 * H, latent_dim))
    w_hh0 = xavier_uniform(keys[1], (3 * H, H))
    b_ih0 = jnp.ones((1, 3 * H), jnp.float32)     # bias_ih filled with 1
    b_hh0 = jnp.zeros((1, 3 * H), jnp.float32)    # bias_hh filled with 0
    n_rest = max(num_layers - 1, 1)
    w_ih_r = jnp.stack([xavier_uniform(keys[2 + 2 * l], (3 * H, H))
                        for l in range(n_rest)])
    w_hh_r = jnp.stack([xavier_uniform(keys[3 + 2 * l], (3 * H, H))
                        for l in range(n_rest)])
    b_ih_r = jnp.ones((n_rest, 1, 3 * H), jnp.float32)
    b_hh_r = jnp.zeros((n_rest, 1, 3 * H), jnp.float32)
    w_lin = xavier_uniform(keys[-1], (H, H))
    b_lin = jnp.zeros((1, H), jnp.float32)
    return dict(w_ih0=w_ih0, w_hh0=w_hh0, b_ih0=b_ih0, b_hh0=b_hh0,
                w_ih_r=w_ih_r, w_hh_r=w_hh_r, b_ih_r=b_ih_r, b_hh_r=b_hh_r,
                w_lin=w_lin, b_lin=b_lin)


if __name__ == "__main__":
    latent_dim = 16
    hidden_dim = 32
    num_layers = 2
    padding_value = -1.0
    max_seq = 8
    batch = 2

    key = jax.random.PRNGKey(0)
    k_z, k_p = jax.random.split(key)
    z = jax.random.normal(k_z, (batch, max_seq, latent_dim), jnp.float32)
    t = jnp.array([max_seq, 5], jnp.int32)        # per-sequence valid lengths

    params = init_generator_params(k_p, latent_dim, hidden_dim, num_layers)

    H_out = generator_forward(z, t, params,
                              num_layers=num_layers,
                              hidden_dim=hidden_dim,
                              padding_value=padding_value,
                              max_seq=max_seq)
    H_out = jax.block_until_ready(H_out)

    assert H_out.shape == (batch, max_seq, hidden_dim)
    assert bool(jnp.all(jnp.isfinite(H_out)))

    # Padded timesteps (s >= t[b]) must equal sigmoid(linear(padding_value)).
    pad_row = jax.nn.sigmoid(
        jnp.full((hidden_dim,), padding_value) @ params['w_lin'].T
        + params['b_lin'][0])
    assert bool(jnp.allclose(H_out[1, 5:], pad_row, atol=1e-5))

    # Full pure-JAX reference of the PyTorch forward pass.
    H_ref = generator_reference(z, t, params,
                                num_layers=num_layers,
                                hidden_dim=hidden_dim,
                                padding_value=padding_value)
    assert bool(jnp.allclose(H_out, H_ref, atol=1e-3, rtol=1e-3))

    print("KERNEL_OK")
</pallas_src>

<mosaic_0001>
module attributes {stable_mosaic.version = 11 : i64} {
  func.func @generator_kernel(%arg0: i32, %arg1: memref<8x2x16xf32, #tpu.memory_space<vmem>>, %arg2: memref<2x1xi32, #tpu.memory_space<vmem>>, %arg3: memref<16x384xf32, #tpu.memory_space<vmem>>, %arg4: memref<128x384xf32, #tpu.memory_space<vmem>>, %arg5: memref<1x384xf32, #tpu.memory_space<vmem>>, %arg6: memref<1x128xf32, #tpu.memory_space<vmem>>, %arg7: memref<1x128x384xf32, #tpu.memory_space<vmem>>, %arg8: memref<1x128x384xf32, #tpu.memory_space<vmem>>, %arg9: memref<1x1x384xf32, #tpu.memory_space<vmem>>, %arg10: memref<1x1x128xf32, #tpu.memory_space<vmem>>, %arg11: memref<128x128xf32, #tpu.memory_space<vmem>>, %arg12: memref<1x128xf32, #tpu.memory_space<vmem>>, %arg13: memref<1x128xf32, #tpu.memory_space<vmem>>, %arg14: memref<8x2x128xf32, #tpu.memory_space<vmem>>, %arg15: memref<8x2x384xf32, #tpu.memory_space<vmem>>, %arg16: memref<8x2x128xf32, #tpu.memory_space<vmem>>) attributes {dimension_semantics = [#tpu.dimension_semantics<parallel>], iteration_bounds = array<i64: 1>, scalar_prefetch = 0 : i64, scratch_operands = 2 : i64, tpu.core_type = #tpu.core_type<tc>, window_params = [{transform_indices = @transform_0, window_bounds = array<i64: 8, 2, 16>}, {transform_indices = @transform_1, window_bounds = array<i64: 2, 1>}, {pipeline_mode = #tpu.pipeline_mode<synchronous>, transform_indices = @transform_2, window_bounds = array<i64: 16, 384>}, {pipeline_mode = #tpu.pipeline_mode<synchronous>, transform_indices = @transform_3, window_bounds = array<i64: 128, 384>}, {pipeline_mode = #tpu.pipeline_mode<synchronous>, transform_indices = @transform_4, window_bounds = array<i64: 1, 384>}, {pipeline_mode = #tpu.pipeline_mode<synchronous>, transform_indices = @transform_5, window_bounds = array<i64: 1, 128>}, {pipeline_mode = #tpu.pipeline_mode<synchronous>, transform_indices = @transform_6, window_bounds = array<i64: 1, 128, 384>}, {pipeline_mode = #tpu.pipeline_mode<synchronous>, transform_indices = @transform_7, window_bounds = array<i64: 1, 128, 384>}, {pipeline_mode = #tpu.pipeline_mode<synchronous>, transform_indices = @transform_8, window_bounds = array<i64: 1, 1, 384>}, {pipeline_mode = #tpu.pipeline_mode<synchronous>, transform_indices = @transform_9, window_bounds = array<i64: 1, 1, 128>}, {pipeline_mode = #tpu.pipeline_mode<synchronous>, transform_indices = @transform_10, window_bounds = array<i64: 128, 128>}, {pipeline_mode = #tpu.pipeline_mode<synchronous>, transform_indices = @transform_11, window_bounds = array<i64: 1, 128>}, {pipeline_mode = #tpu.pipeline_mode<synchronous>, transform_indices = @transform_12, window_bounds = array<i64: 1, 128>}, {transform_indices = @transform_13, window_bounds = array<i64: 8, 2, 128>}]} {
    %c0 = arith.constant 0 : index
    %c0_0 = arith.constant 0 : index
    %c0_1 = arith.constant 0 : index
    %0 = vector.load %arg1[%c0, %c0_0, %c0_1] : memref<8x2x16xf32, #tpu.memory_space<vmem>>, vector<8x2x16xf32>
    %1 = vector.shape_cast %0 : vector<8x2x16xf32> to vector<16x16xf32>
    %c0_2 = arith.constant 0 : index
    %c0_3 = arith.constant 0 : index
    %2 = vector.load %arg3[%c0_2, %c0_3] : memref<16x384xf32, #tpu.memory_space<vmem>>, vector<16x384xf32>
    %c0_4 = arith.constant 0 : index
    %c0_5 = arith.constant 0 : index
    %3 = vector.load %arg5[%c0_4, %c0_5] : memref<1x384xf32, #tpu.memory_space<vmem>>, vector<1x384xf32>
    %c0_6 = arith.constant 0 : index
    %c0_7 = arith.constant 0 : index
    %4 = vector.load %arg4[%c0_6, %c0_7] : memref<128x384xf32, #tpu.memory_space<vmem>>, vector<128x384xf32>
    %c0_8 = arith.constant 0 : index
    %c0_9 = arith.constant 0 : index
    %5 = vector.load %arg6[%c0_8, %c0_9] : memref<1x128xf32, #tpu.memory_space<vmem>>, vector<1x128xf32>
    %cst = arith.constant dense<0.000000e+00> : vector<16x384xf32>
    %6 = tpu.matmul %1, %2, %cst {dimension_numbers = #tpu.dot_dimension_numbers<[1], [0], [0], [1], [0, 0, 1, 1], [], []>} : vector<16x16xf32>, vector<16x384xf32>, vector<16x384xf32> -> vector<16x384xf32>
    %7 = vector.broadcast %3 : vector<1x384xf32> to vector<16x384xf32>
    %8 = arith.addf %6, %7 : vector<16x384xf32>
    %9 = vector.shape_cast %8 : vector<16x384xf32> to vector<8x2x384xf32>
    %c0_10 = arith.constant 0 : index
    %c0_11 = arith.constant 0 : index
    %c0_12 = arith.constant 0 : index
    %10 = vector.load %arg15[%c0_10, %c0_11, %c0_12] : memref<8x2x384xf32, #tpu.memory_space<vmem>>, vector<8x2x384xf32>
    tpu.vector_store %arg15[%c0_10, %c0_11, %c0_12], %9 {strides = array<i32>} : memref<8x2x384xf32, #tpu.memory_space<vmem>>, vector<8x2x384xf32>,
    %cst_13 = arith.constant 0.000000e+00 : f32
    %11 = vector.broadcast %cst_13 : f32 to vector<2x128xf32>
    %c0_i32 = arith.constant 0 : i32
    %12 = arith.index_cast %c0_i32 : i32 to index
    %c0_14 = arith.constant 0 : index
    %c0_15 = arith.constant 0 : index
    %13 = vector.load %arg15[%12, %c0_14, %c0_15] : memref<8x2x384xf32, #tpu.memory_space<vmem>>, vector<1x2x384xf32>
    %14 = vector.shape_cast %13 : vector<1x2x384xf32> to vector<2x384xf32>
    %cst_16 = arith.constant dense<0.000000e+00> : vector<2x384xf32>
    %15 = tpu.matmul %11, %4, %cst_16 {dimension_numbers = #tpu.dot_dimension_numbers<[1], [0], [0], [1], [0, 0, 1, 1], [], []>} : vector<2x128xf32>, vector<128x384xf32>, vector<2x384xf32> -> vector<2x384xf32>
    %16 = vector.extract_strided_slice %14 {offsets = [0, 0], sizes = [2, 128], strides = [1, 1]} : vector<2x384xf32> to vector<2x128xf32>
    %17 = vector.extract_strided_slice %15 {offsets = [0, 0], sizes = [2, 128], strides = [1, 1]} : vector<2x384xf32> to vector<2x128xf32>
    %18 = arith.addf %16, %17 : vector<2x128xf32>
    %19 = arith.negf %18 : vector<2x128xf32>
    %20 = math.exp %19 : vector<2x128xf32>
    %cst_17 = arith.constant 1.000000e+00 : f32
    %21 = vector.broadcast %cst_17 : f32 to vector<2x128xf32>
    %22 = arith.addf %21, %20 : vector<2x128xf32>
    %23 = arith.divf %21, %22 : vector<2x128xf32>
    %24 = vector.extract_strided_slice %14 {offsets = [0, 128], sizes = [2, 128], strides = [1, 1]} : vector<2x384xf32> to vector<2x128xf32>
    %25 = vector.extract_strided_slice %15 {offsets = [0, 128], sizes = [2, 128], strides = [1, 1]} : vector<2x384xf32> to vector<2x128xf32>
    %26 = arith.addf %24, %25 : vector<2x128xf32>
    %27 = arith.negf %26 : vector<2x128xf32>
    %28 = math.exp %27 : vector<2x128xf32>
    %cst_18 = arith.constant 1.000000e+00 : f32
    %29 = vector.broadcast %cst_18 : f32 to vector<2x128xf32>
    %30 = arith.addf %29, %28 : vector<2x128xf32>
    %31 = arith.divf %29, %30 : vector<2x128xf32>
    %32 = vector.extract_strided_slice %14 {offsets = [0, 256], sizes = [2, 128], strides = [1, 1]} : vector<2x384xf32> to vector<2x128xf32>
    %33 = vector.extract_strided_slice %15 {offsets = [0, 256], sizes = [2, 128], strides = [1, 1]} : vector<2x384xf32> to vector<2x128xf32>
    %34 = vector.broadcast %5 : vector<1x128xf32> to vector<2x128xf32>
    %35 = arith.addf %33, %34 : vector<2x128xf32>
    %36 = arith.mulf %23, %35 : vector<2x128xf32>
    %37 = arith.addf %32, %36 : vector<2x128xf32>
    %38 = math.tanh %37 : vector<2x128xf32>
    %cst_19 = arith.constant 1.000000e+00 : f32
    %39 = vector.broadcast %cst_19 : f32 to vector<2x128xf32>
    %40 = arith.subf %39, %31 : vector<2x128xf32>
    %41 = arith.mulf %40, %38 : vector<2x128xf32>
    %42 = arith.mulf %31, %11 : vector<2x128xf32>
    %43 = arith.addf %41, %42 : vector<2x128xf32>
    %44 = arith.index_cast %c0_i32 : i32 to index
    %c0_20 = arith.constant 0 : index
    %c0_21 = arith.constant 0 : index
    %45 = vector.load %arg16[%44, %c0_20, %c0_21] : memref<8x2x128xf32, #tpu.memory_space<vmem>>, vector<1x2x128xf32>
    %46 = vector.shape_cast %45 : vector<1x2x128xf32> to vector<2x128xf32>
    %47 = vector.shape_cast %43 : vector<2x128xf32> to vector<1x2x128xf32>
    tpu.vector_store %arg16[%44, %c0_20, %c0_21], %47 {strides = array<i32>} : memref<8x2x128xf32, #tpu.memory_space<vmem>>, vector<1x2x128xf32>,
    %c1_i32 = arith.constant 1 : i32
    %48 = arith.index_cast %c1_i32 : i32 to index
    %c0_22 = arith.constant 0 : index
    %c0_23 = arith.constant 0 : index
    %49 = vector.load %arg15[%48, %c0_22, %c0_23] : memref<8x2x384xf32, #tpu.memory_space<vmem>>, vector<1x2x384xf32>
    %50 = vector.shape_cast %49 : vector<1x2x384xf32> to vector<2x384xf32>
    %cst_24 = arith.constant dense<0.000000e+00> : vector<2x384xf32>
    %51 = tpu.matmul %43, %4, %cst_24 {dimension_numbers = #tpu.dot_dimension_numbers<[1], [0], [0], [1], [0, 0, 1, 1], [], []>} : vector<2x128xf32>, vector<128x384xf32>, vector<2x384xf32> -> vector<2x384xf32>
    %52 = vector.extract_strided_slice %50 {offsets = [0, 0], sizes = [2, 128], strides = [1, 1]} : vector<2x384xf32> to vector<2x128xf32>
    %53 = vector.extract_strided_slice %51 {offsets = [0, 0], sizes = [2, 128], strides = [1, 1]} : vector<2x384xf32> to vector<2x128xf32>
    %54 = arith.addf %52, %53 : vector<2x128xf32>
    %55 = arith.negf %54 : vector<2x128xf32>
    %56 = math.exp %55 : vector<2x128xf32>
    %cst_25 = arith.constant 1.000000e+00 : f32
    %57 = vector.broadcast %cst_25 : f32 to vector<2x128xf32>
    %58 = arith.addf %57, %56 : vector<2x128xf32>
    %59 = arith.divf %57, %58 : vector<2x128xf32>
    %60 = vector.extract_strided_slice %50 {offsets = [0, 128], sizes = [2, 128], strides = [1, 1]} : vector<2x384xf32> to vector<2x128xf32>
    %61 = vector.extract_strided_slice %51 {offsets = [0, 128], sizes = [2, 128], strides = [1, 1]} : vector<2x384xf32> to vector<2x128xf32>
    %62 = arith.addf %60, %61 : vector<2x128xf32>
    %63 = arith.negf %62 : vector<2x128xf32>
    %64 = math.exp %63 : vector<2x128xf32>
    %cst_26 = arith.constant 1.000000e+00 : f32
    %65 = vector.broadcast %cst_26 : f32 to vector<2x128xf32>
    %66 = arith.addf %65, %64 : vector<2x128xf32>
    %67 = arith.divf %65, %66 : vector<2x128xf32>
    %68 = vector.extract_strided_slice %50 {offsets = [0, 256], sizes = [2, 128], strides = [1, 1]} : vector<2x384xf32> to vector<2x128xf32>
    %69 = vector.extract_strided_slice %51 {offsets = [0, 256], sizes = [2, 128], strides = [1, 1]} : vector<2x384xf32> to vector<2x128xf32>
    %70 = vector.broadcast %5 : vector<1x128xf32> to vector<2x128xf32>
    %71 = arith.addf %69, %70 : vector<2x128xf32>
    %72 = arith.mulf %59, %71 : vector<2x128xf32>
    %73 = arith.addf %68, %72 : vector<2x128xf32>
    %74 = math.tanh %73 : vector<2x128xf32>
    %cst_27 = arith.constant 1.000000e+00 : f32
    %75 = vector.broadcast %cst_27 : f32 to vector<2x128xf32>
    %76 = arith.subf %75, %67 : vector<2x128xf32>
    %77 = arith.mulf %76, %74 : vector<2x128xf32>
    %78 = arith.mulf %67, %43 : vector<2x128xf32>
    %79 = arith.addf %77, %78 : vector<2x128xf32>
    %80 = arith.index_cast %c1_i32 : i32 to index
    %c0_28 = arith.constant 0 : index
    %c0_29 = arith.constant 0 : index
    %81 = vector.load %arg16[%80, %c0_28, %c0_29] : memref<8x2x128xf32, #tpu.memory_space<vmem>>, vector<1x2x128xf32>
    %82 = vector.shape_cast %81 : vector<1x2x128xf32> to vector<2x128xf32>
    %83 = vector.shape_cast %79 : vector<2x128xf32> to vector<1x2x128xf32>
    tpu.vector_store %arg16[%80, %c0_28, %c0_29], %83 {strides = array<i32>} : memref<8x2x128xf32, #tpu.memory_space<vmem>>, vector<1x2x128xf32>,
    %c2_i32 = arith.constant 2 : i32
    %84 = arith.index_cast %c2_i32 : i32 to index
    %c0_30 = arith.constant 0 : index
    %c0_31 = arith.constant 0 : index
    %85 = vector.load %arg15[%84, %c0_30, %c0_31] : memref<8x2x384xf32, #tpu.memory_space<vmem>>, vector<1x2x384xf32>
    %86 = vector.shape_cast %85 : vector<1x2x384xf32> to vector<2x384xf32>
    %cst_32 = arith.constant dense<0.000000e+00> : vector<2x384xf32>
    %87 = tpu.matmul %79, %4, %cst_32 {dimension_numbers = #tpu.dot_dimension_numbers<[1], [0], [0], [1], [0, 0, 1, 1], [], []>} : vector<2x128xf32>, vector<128x384xf32>, vector<2x384xf32> -> vector<2x384xf32>
    %88 = vector.extract_strided_slice %86 {offsets = [0, 0], sizes = [2, 128], strides = [1, 1]} : vector<2x384xf32> to vector<2x128xf32>
    %89 = vector.extract_strided_slice %87 {offsets = [0, 0], sizes = [2, 128], strides = [1, 1]} : vector<2x384xf32> to vector<2x128xf32>
    %90 = arith.addf %88, %89 : vector<2x128xf32>
    %91 = arith.negf %90 : vector<2x128xf32>
    %92 = math.exp %91 : vector<2x128xf32>
    %cst_33 = arith.constant 1.000000e+00 : f32
    %93 = vector.broadcast %cst_33 : f32 to vector<2x128xf32>
    %94 = arith.addf %93, %92 : vector<2x128xf32>
    %95 = arith.divf %93, %94 : vector<2x128xf32>
    %96 = vector.extract_strided_slice %86 {offsets = [0, 128], sizes = [2, 128], strides = [1, 1]} : vector<2x384xf32> to vector<2x128xf32>
    %97 = vector.extract_strided_slice %87 {offsets = [0, 128], sizes = [2, 128], strides = [1, 1]} : vector<2x384xf32> to vector<2x128xf32>
    %98 = arith.addf %96, %97 : vector<2x128xf32>
    %99 = arith.negf %98 : vector<2x128xf32>
    %100 = math.exp %99 : vector<2x128xf32>
    %cst_34 = arith.constant 1.000000e+00 : f32
    %101 = vector.broadcast %cst_34 : f32 to vector<2x128xf32>
    %102 = arith.addf %101, %100 : vector<2x128xf32>
    %103 = arith.divf %101, %102 : vector<2x128xf32>
    %104 = vector.extract_strided_slice %86 {offsets = [0, 256], sizes = [2, 128], strides = [1, 1]} : vector<2x384xf32> to vector<2x128xf32>
    %105 = vector.extract_strided_slice %87 {offsets = [0, 256], sizes = [2, 128], strides = [1, 1]} : vector<2x384xf32> to vector<2x128xf32>
    %106 = vector.broadcast %5 : vector<1x128xf32> to vector<2x128xf32>
    %107 = arith.addf %105, %106 : vector<2x128xf32>
    %108 = arith.mulf %95, %107 : vector<2x128xf32>
    %109 = arith.addf %104, %108 : vector<2x128xf32>
    %110 = math.tanh %109 : vector<2x128xf32>
    %cst_35 = arith.constant 1.000000e+00 : f32
    %111 = vector.broadcast %cst_35 : f32 to vector<2x128xf32>
    %112 = arith.subf %111, %103 : vector<2x128xf32>
    %113 = arith.mulf %112, %110 : vector<2x128xf32>
    %114 = arith.mulf %103, %79 : vector<2x128xf32>
    %115 = arith.addf %113, %114 : vector<2x128xf32>
    %116 = arith.index_cast %c2_i32 : i32 to index
    %c0_36 = arith.constant 0 : index
    %c0_37 = arith.constant 0 : index
    %117 = vector.load %arg16[%116, %c0_36, %c0_37] : memref<8x2x128xf32, #tpu.memory_space<vmem>>, vector<1x2x128xf32>
    %118 = vector.shape_cast %117 : vector<1x2x128xf32> to vector<2x128xf32>
    %119 = vector.shape_cast %115 : vector<2x128xf32> to vector<1x2x128xf32>
    tpu.vector_store %arg16[%116, %c0_36, %c0_37], %119 {strides = array<i32>} : memref<8x2x128xf32, #tpu.memory_space<vmem>>, vector<1x2x128xf32>,
    %c3_i32 = arith.constant 3 : i32
    %120 = arith.index_cast %c3_i32 : i32 to index
    %c0_38 = arith.constant 0 : index
    %c0_39 = arith.constant 0 : index
    %121 = vector.load %arg15[%120, %c0_38, %c0_39] : memref<8x2x384xf32, #tpu.memory_space<vmem>>, vector<1x2x384xf32>
    %122 = vector.shape_cast %121 : vector<1x2x384xf32> to vector<2x384xf32>
    %cst_40 = arith.constant dense<0.000000e+00> : vector<2x384xf32>
    %123 = tpu.matmul %115, %4, %cst_40 {dimension_numbers = #tpu.dot_dimension_numbers<[1], [0], [0], [1], [0, 0, 1, 1], [], []>} : vector<2x128xf32>, vector<128x384xf32>, vector<2x384xf32> -> vector<2x384xf32>
    %124 = vector.extract_strided_slice %122 {offsets = [0, 0], sizes = [2, 128], strides = [1, 1]} : vector<2x384xf32> to vector<2x128xf32>
    %125 = vector.extract_strided_slice %123 {offsets = [0, 0], sizes = [2, 128], strides = [1, 1]} : vector<2x384xf32> to vector<2x128xf32>
    %126 = arith.addf %124, %125 : vector<2x128xf32>
    %127 = arith.negf %126 : vector<2x128xf32>
    %128 = math.exp %127 : vector<2x128xf32>
    %cst_41 = arith.constant 1.000000e+00 : f32
    %129 = vector.broadcast %cst_41 : f32 to vector<2x128xf32>
    %130 = arith.addf %129, %128 : vector<2x128xf32>
    %131 = arith.divf %129, %130 : vector<2x128xf32>
    %132 = vector.extract_strided_slice %122 {offsets = [0, 128], sizes = [2, 128], strides = [1, 1]} : vector<2x384xf32> to vector<2x128xf32>
    %133 = vector.extract_strided_slice %123 {offsets = [0, 128], sizes = [2, 128], strides = [1, 1]} : vector<2x384xf32> to vector<2x128xf32>
    %134 = arith.addf %132, %133 : vector<2x128xf32>
    %135 = arith.negf %134 : vector<2x128xf32>
    %136 = math.exp %135 : vector<2x128xf32>
    %cst_42 = arith.constant 1.000000e+00 : f32
    %137 = vector.broadcast %cst_42 : f32 to vector<2x128xf32>
    %138 = arith.addf %137, %136 : vector<2x128xf32>
    %139 = arith.divf %137, %138 : vector<2x128xf32>
    %140 = vector.extract_strided_slice %122 {offsets = [0, 256], sizes = [2, 128], strides = [1, 1]} : vector<2x384xf32> to vector<2x128xf32>
    %141 = vector.extract_strided_slice %123 {offsets = [0, 256], sizes = [2, 128], strides = [1, 1]} : vector<2x384xf32> to vector<2x128xf32>
    %142 = vector.broadcast %5 : vector<1x128xf32> to vector<2x128xf32>
    %143 = arith.addf %141, %142 : vector<2x128xf32>
    %144 = arith.mulf %131, %143 : vector<2x128xf32>
    %145 = arith.addf %140, %144 : vector<2x128xf32>
    %146 = math.tanh %145 : vector<2x128xf32>
    %cst_43 = arith.constant 1.000000e+00 : f32
    %147 = vector.broadcast %cst_43 : f32 to vector<2x128xf32>
    %148 = arith.subf %147, %139 : vector<2x128xf32>
    %149 = arith.mulf %148, %146 : vector<2x128xf32>
    %150 = arith.mulf %139, %115 : vector<2x128xf32>
    %151 = arith.addf %149, %150 : vector<2x128xf32>
    %152 = arith.index_cast %c3_i32 : i32 to index
    %c0_44 = arith.constant 0 : index
    %c0_45 = arith.constant 0 : index
    %153 = vector.load %arg16[%152, %c0_44, %c0_45] : memref<8x2x128xf32, #tpu.memory_space<vmem>>, vector<1x2x128xf32>
    %154 = vector.shape_cast %153 : vector<1x2x128xf32> to vector<2x128xf32>
    %155 = vector.shape_cast %151 : vector<2x128xf32> to vector<1x2x128xf32>
    tpu.vector_store %arg16[%152, %c0_44, %c0_45], %155 {strides = array<i32>} : memref<8x2x128xf32, #tpu.memory_space<vmem>>, vector<1x2x128xf32>,
    %c4_i32 = arith.constant 4 : i32
    %156 = arith.index_cast %c4_i32 : i32 to index
    %c0_46 = arith.constant 0 : index
    %c0_47 = arith.constant 0 : index
    %157 = vector.load %arg15[%156, %c0_46, %c0_47] : memref<8x2x384xf32, #tpu.memory_space<vmem>>, vector<1x2x384xf32>
    %158 = vector.shape_cast %157 : vector<1x2x384xf32> to vector<2x384xf32>
    %cst_48 = arith.constant dense<0.000000e+00> : vector<2x384xf32>
    %159 = tpu.matmul %151, %4, %cst_48 {dimension_numbers = #tpu.dot_dimension_numbers<[1], [0], [0], [1], [0, 0, 1, 1], [], []>} : vector<2x128xf32>, vector<128x384xf32>, vector<2x384xf32> -> vector<2x384xf32>
    %160 = vector.extract_strided_slice %158 {offsets = [0, 0], sizes = [2, 128], strides = [1, 1]} : vector<2x384xf32> to vector<2x128xf32>
    %161 = vector.extract_strided_slice %159 {offsets = [0, 0], sizes = [2, 128], strides = [1, 1]} : vector<2x384xf32> to vector<2x128xf32>
    %162 = arith.addf %160, %161 : vector<2x128xf32>
    %163 = arith.negf %162 : vector<2x128xf32>
    %164 = math.exp %163 : vector<2x128xf32>
    %cst_49 = arith.constant 1.000000e+00 : f32
    %165 = vector.broadcast %cst_49 : f32 to vector<2x128xf32>
    %166 = arith.addf %165, %164 : vector<2x128xf32>
    %167 = arith.divf %165, %166 : vector<2x128xf32>
    %168 = vector.extract_strided_slice %158 {offsets = [0, 128], sizes = [2, 128], strides = [1, 1]} : vector<2x384xf32> to vector<2x128xf32>
    %169 = vector.extract_strided_slice %159 {offsets = [0, 128], sizes = [2, 128], strides = [1, 1]} : vector<2x384xf32> to vector<2x128xf32>
    %170 = arith.addf %168, %169 : vector<2x128xf32>
    %171 = arith.negf %170 : vector<2x128xf32>
    %172 = math.exp %171 : vector<2x128xf32>
    %cst_50 = arith.constant 1.000000e+00 : f32
    %173 = vector.broadcast %cst_50 : f32 to vector<2x128xf32>
    %174 = arith.addf %173, %172 : vector<2x128xf32>
    %175 = arith.divf %173, %174 : vector<2x128xf32>
    %176 = vector.extract_strided_slice %158 {offsets = [0, 256], sizes = [2, 128], strides = [1, 1]} : vector<2x384xf32> to vector<2x128xf32>
    %177 = vector.extract_strided_slice %159 {offsets = [0, 256], sizes = [2, 128], strides = [1, 1]} : vector<2x384xf32> to vector<2x128xf32>
    %178 = vector.broadcast %5 : vector<1x128xf32> to vector<2x128xf32>
    %179 = arith.addf %177, %178 : vector<2x128xf32>
    %180 = arith.mulf %167, %179 : vector<2x128xf32>
    %181 = arith.addf %176, %180 : vector<2x128xf32>
    %182 = math.tanh %181 : vector<2x128xf32>
    %cst_51 = arith.constant 1.000000e+00 : f32
    %183 = vector.broadcast %cst_51 : f32 to vector<2x128xf32>
    %184 = arith.subf %183, %175 : vector<2x128xf32>
    %185 = arith.mulf %184, %182 : vector<2x128xf32>
    %186 = arith.mulf %175, %151 : vector<2x128xf32>
    %187 = arith.addf %185, %186 : vector<2x128xf32>
    %188 = arith.index_cast %c4_i32 : i32 to index
    %c0_52 = arith.constant 0 : index
    %c0_53 = arith.constant 0 : index
    %189 = vector.load %arg16[%188, %c0_52, %c0_53] : memref<8x2x128xf32, #tpu.memory_space<vmem>>, vector<1x2x128xf32>
    %190 = vector.shape_cast %189 : vector<1x2x128xf32> to vector<2x128xf32>
    %191 = vector.shape_cast %187 : vector<2x128xf32> to vector<1x2x128xf32>
    tpu.vector_store %arg16[%188, %c0_52, %c0_53], %191 {strides = array<i32>} : memref<8x2x128xf32, #tpu.memory_space<vmem>>, vector<1x2x128xf32>,
    %c5_i32 = arith.constant 5 : i32
    %192 = arith.index_cast %c5_i32 : i32 to index
    %c0_54 = arith.constant 0 : index
    %c0_55 = arith.constant 0 : index
    %193 = vector.load %arg15[%192, %c0_54, %c0_55] : memref<8x2x384xf32, #tpu.memory_space<vmem>>, vector<1x2x384xf32>
    %194 = vector.shape_cast %193 : vector<1x2x384xf32> to vector<2x384xf32>
    %cst_56 = arith.constant dense<0.000000e+00> : vector<2x384xf32>
    %195 = tpu.matmul %187, %4, %cst_56 {dimension_numbers = #tpu.dot_dimension_numbers<[1], [0], [0], [1], [0, 0, 1, 1], [], []>} : vector<2x128xf32>, vector<128x384xf32>, vector<2x384xf32> -> vector<2x384xf32>
    %196 = vector.extract_strided_slice %194 {offsets = [0, 0], sizes = [2, 128], strides = [1, 1]} : vector<2x384xf32> to vector<2x128xf32>
    %197 = vector.extract_strided_slice %195 {offsets = [0, 0], sizes = [2, 128], strides = [1, 1]} : vector<2x384xf32> to vector<2x128xf32>
    %198 = arith.addf %196, %197 : vector<2x128xf32>
    %199 = arith.negf %198 : vector<2x128xf32>
    %200 = math.exp %199 : vector<2x128xf32>
    %cst_57 = arith.constant 1.000000e+00 : f32
    %201 = vector.broadcast %cst_57 : f32 to vector<2x128xf32>
    %202 = arith.addf %201, %200 : vector<2x128xf32>
    %203 = arith.divf %201, %202 : vector<2x128xf32>
    %204 = vector.extract_strided_slice %194 {offsets = [0, 128], sizes = [2, 128], strides = [1, 1]} : vector<2x384xf32> to vector<2x128xf32>
    %205 = vector.extract_strided_slice %195 {offsets = [0, 128], sizes = [2, 128], strides = [1, 1]} : vector<2x384xf32> to vector<2x128xf32>
    %206 = arith.addf %204, %205 : vector<2x128xf32>
    %207 = arith.negf %206 : vector<2x128xf32>
    %208 = math.exp %207 : vector<2x128xf32>
    %cst_58 = arith.constant 1.000000e+00 : f32
    %209 = vector.broadcast %cst_58 : f32 to vector<2x128xf32>
    %210 = arith.addf %209, %208 : vector<2x128xf32>
    %211 = arith.divf %209, %210 : vector<2x128xf32>
    %212 = vector.extract_strided_slice %194 {offsets = [0, 256], sizes = [2, 128], strides = [1, 1]} : vector<2x384xf32> to vector<2x128xf32>
    %213 = vector.extract_strided_slice %195 {offsets = [0, 256], sizes = [2, 128], strides = [1, 1]} : vector<2x384xf32> to vector<2x128xf32>
    %214 = vector.broadcast %5 : vector<1x128xf32> to vector<2x128xf32>
    %215 = arith.addf %213, %214 : vector<2x128xf32>
    %216 = arith.mulf %203, %215 : vector<2x128xf32>
    %217 = arith.addf %212, %216 : vector<2x128xf32>
    %218 = math.tanh %217 : vector<2x128xf32>
    %cst_59 = arith.constant 1.000000e+00 : f32
    %219 = vector.broadcast %cst_59 : f32 to vector<2x128xf32>
    %220 = arith.subf %219, %211 : vector<2x128xf32>
    %221 = arith.mulf %220, %218 : vector<2x128xf32>
    %222 = arith.mulf %211, %187 : vector<2x128xf32>
    %223 = arith.addf %221, %222 : vector<2x128xf32>
    %224 = arith.index_cast %c5_i32 : i32 to index
    %c0_60 = arith.constant 0 : index
    %c0_61 = arith.constant 0 : index
    %225 = vector.load %arg16[%224, %c0_60, %c0_61] : memref<8x2x128xf32, #tpu.memory_space<vmem>>, vector<1x2x128xf32>
    %226 = vector.shape_cast %225 : vector<1x2x128xf32> to vector<2x128xf32>
    %227 = vector.shape_cast %223 : vector<2x128xf32> to vector<1x2x128xf32>
    tpu.vector_store %arg16[%224, %c0_60, %c0_61], %227 {strides = array<i32>} : memref<8x2x128xf32, #tpu.memory_space<vmem>>, vector<1x2x128xf32>,
    %c6_i32 = arith.constant 6 : i32
    %228 = arith.index_cast %c6_i32 : i32 to index
    %c0_62 = arith.constant 0 : index
    %c0_63 = arith.constant 0 : index
    %229 = vector.load %arg15[%228, %c0_62, %c0_63] : memref<8x2x384xf32, #tpu.memory_space<vmem>>, vector<1x2x384xf32>
    %230 = vector.shape_cast %229 : vector<1x2x384xf32> to vector<2x384xf32>
    %cst_64 = arith.constant dense<0.000000e+00> : vector<2x384xf32>
    %231 = tpu.matmul %223, %4, %cst_64 {dimension_numbers = #tpu.dot_dimension_numbers<[1], [0], [0], [1], [0, 0, 1, 1], [], []>} : vector<2x128xf32>, vector<128x384xf32>, vector<2x384xf32> -> vector<2x384xf32>
    %232 = vector.extract_strided_slice %230 {offsets = [0, 0], sizes = [2, 128], strides = [1, 1]} : vector<2x384xf32> to vector<2x128xf32>
    %233 = vector.extract_strided_slice %231 {offsets = [0, 0], sizes = [2, 128], strides = [1, 1]} : vector<2x384xf32> to vector<2x128xf32>
    %234 = arith.addf %232, %233 : vector<2x128xf32>
    %235 = arith.negf %234 : vector<2x128xf32>
    %236 = math.exp %235 : vector<2x128xf32>
    %cst_65 = arith.constant 1.000000e+00 : f32
    %237 = vector.broadcast %cst_65 : f32 to vector<2x128xf32>
    %238 = arith.addf %237, %236 : vector<2x128xf32>
    %239 = arith.divf %237, %238 : vector<2x128xf32>
    %240 = vector.extract_strided_slice %230 {offsets = [0, 128], sizes = [2, 128], strides = [1, 1]} : vector<2x384xf32> to vector<2x128xf32>
    %241 = vector.extract_strided_slice %231 {offsets = [0, 128], sizes = [2, 128], strides = [1, 1]} : vector<2x384xf32> to vector<2x128xf32>
    %242 = arith.addf %240, %241 : vector<2x128xf32>
    %243 = arith.negf %242 : vector<2x128xf32>
    %244 = math.exp %243 : vector<2x128xf32>
    %cst_66 = arith.constant 1.000000e+00 : f32
    %245 = vector.broadcast %cst_66 : f32 to vector<2x128xf32>
    %246 = arith.addf %245, %244 : vector<2x128xf32>
    %247 = arith.divf %245, %246 : vector<2x128xf32>
    %248 = vector.extract_strided_slice %230 {offsets = [0, 256], sizes = [2, 128], strides = [1, 1]} : vector<2x384xf32> to vector<2x128xf32>
    %249 = vector.extract_strided_slice %231 {offsets = [0, 256], sizes = [2, 128], strides = [1, 1]} : vector<2x384xf32> to vector<2x128xf32>
    %250 = vector.broadcast %5 : vector<1x128xf32> to vector<2x128xf32>
    %251 = arith.addf %249, %250 : vector<2x128xf32>
    %252 = arith.mulf %239, %251 : vector<2x128xf32>
    %253 = arith.addf %248, %252 : vector<2x128xf32>
    %254 = math.tanh %253 : vector<2x128xf32>
    %cst_67 = arith.constant 1.000000e+00 : f32
    %255 = vector.broadcast %cst_67 : f32 to vector<2x128xf32>
    %256 = arith.subf %255, %247 : vector<2x128xf32>
    %257 = arith.mulf %256, %254 : vector<2x128xf32>
    %258 = arith.mulf %247, %223 : vector<2x128xf32>
    %259 = arith.addf %257, %258 : vector<2x128xf32>
    %260 = arith.index_cast %c6_i32 : i32 to index
    %c0_68 = arith.constant 0 : index
    %c0_69 = arith.constant 0 : index
    %261 = vector.load %arg16[%260, %c0_68, %c0_69] : memref<8x2x128xf32, #tpu.memory_space<vmem>>, vector<1x2x128xf32>
    %262 = vector.shape_cast %261 : vector<1x2x128xf32> to vector<2x128xf32>
    %263 = vector.shape_cast %259 : vector<2x128xf32> to vector<1x2x128xf32>
    tpu.vector_store %arg16[%260, %c0_68, %c0_69], %263 {strides = array<i32>} : memref<8x2x128xf32, #tpu.memory_space<vmem>>, vector<1x2x128xf32>,
    %c7_i32 = arith.constant 7 : i32
    %264 = arith.index_cast %c7_i32 : i32 to index
    %c0_70 = arith.constant 0 : index
    %c0_71 = arith.constant 0 : index
    %265 = vector.load %arg15[%264, %c0_70, %c0_71] : memref<8x2x384xf32, #tpu.memory_space<vmem>>, vector<1x2x384xf32>
    %266 = vector.shape_cast %265 : vector<1x2x384xf32> to vector<2x384xf32>
    %cst_72 = arith.constant dense<0.000000e+00> : vector<2x384xf32>
    %267 = tpu.matmul %259, %4, %cst_72 {dimension_numbers = #tpu.dot_dimension_numbers<[1], [0], [0], [1], [0, 0, 1, 1], [], []>} : vector<2x128xf32>, vector<128x384xf32>, vector<2x384xf32> -> vector<2x384xf32>
    %268 = vector.extract_strided_slice %266 {offsets = [0, 0], sizes = [2, 128], strides = [1, 1]} : vector<2x384xf32> to vector<2x128xf32>
    %269 = vector.extract_strided_slice %267 {offsets = [0, 0], sizes = [2, 128], strides = [1, 1]} : vector<2x384xf32> to vector<2x128xf32>
    %270 = arith.addf %268, %269 : vector<2x128xf32>
    %271 = arith.negf %270 : vector<2x128xf32>
    %272 = math.exp %271 : vector<2x128xf32>
    %cst_73 = arith.constant 1.000000e+00 : f32
    %273 = vector.broadcast %cst_73 : f32 to vector<2x128xf32>
    %274 = arith.addf %273, %272 : vector<2x128xf32>
    %275 = arith.divf %273, %274 : vector<2x128xf32>
    %276 = vector.extract_strided_slice %266 {offsets = [0, 128], sizes = [2, 128], strides = [1, 1]} : vector<2x384xf32> to vector<2x128xf32>
    %277 = vector.extract_strided_slice %267 {offsets = [0, 128], sizes = [2, 128], strides = [1, 1]} : vector<2x384xf32> to vector<2x128xf32>
    %278 = arith.addf %276, %277 : vector<2x128xf32>
    %279 = arith.negf %278 : vector<2x128xf32>
    %280 = math.exp %279 : vector<2x128xf32>
    %cst_74 = arith.constant 1.000000e+00 : f32
    %281 = vector.broadcast %cst_74 : f32 to vector<2x128xf32>
    %282 = arith.addf %281, %280 : vector<2x128xf32>
    %283 = arith.divf %281, %282 : vector<2x128xf32>
    %284 = vector.extract_strided_slice %266 {offsets = [0, 256], sizes = [2, 128], strides = [1, 1]} : vector<2x384xf32> to vector<2x128xf32>
    %285 = vector.extract_strided_slice %267 {offsets = [0, 256], sizes = [2, 128], strides = [1, 1]} : vector<2x384xf32> to vector<2x128xf32>
    %286 = vector.broadcast %5 : vector<1x128xf32> to vector<2x128xf32>
    %287 = arith.addf %285, %286 : vector<2x128xf32>
    %288 = arith.mulf %275, %287 : vector<2x128xf32>
    %289 = arith.addf %284, %288 : vector<2x128xf32>
    %290 = math.tanh %289 : vector<2x128xf32>
    %cst_75 = arith.constant 1.000000e+00 : f32
    %291 = vector.broadcast %cst_75 : f32 to vector<2x128xf32>
    %292 = arith.subf %291, %283 : vector<2x128xf32>
    %293 = arith.mulf %292, %290 : vector<2x128xf32>
    %294 = arith.mulf %283, %259 : vector<2x128xf32>
    %295 = arith.addf %293, %294 : vector<2x128xf32>
    %296 = arith.index_cast %c7_i32 : i32 to index
    %c0_76 = arith.constant 0 : index
    %c0_77 = arith.constant 0 : index
    %297 = vector.load %arg16[%296, %c0_76, %c0_77] : memref<8x2x128xf32, #tpu.memory_space<vmem>>, vector<1x2x128xf32>
    %298 = vector.shape_cast %297 : vector<1x2x128xf32> to vector<2x128xf32>
    %299 = vector.shape_cast %295 : vector<2x128xf32> to vector<1x2x128xf32>
    tpu.vector_store %arg16[%296, %c0_76, %c0_77], %299 {strides = array<i32>} : memref<8x2x128xf32, #tpu.memory_space<vmem>>, vector<1x2x128xf32>,
    %c8_i32 = arith.constant 8 : i32
    %c0_78 = arith.constant 0 : index
    %c0_79 = arith.constant 0 : index
    %c0_80 = arith.constant 0 : index
    %300 = vector.load %arg16[%c0_78, %c0_79, %c0_80] : memref<8x2x128xf32, #tpu.memory_space<vmem>>, vector<8x2x128xf32>
    %301 = vector.shape_cast %300 : vector<8x2x128xf32> to vector<16x128xf32>
    %c0_81 = arith.constant 0 : index
    %c0_82 = arith.constant 0 : index
    %c0_83 = arith.constant 0 : index
    %302 = vector.load %arg7[%c0_81, %c0_82, %c0_83] : memref<1x128x384xf32, #tpu.memory_space<vmem>>, vector<1x128x384xf32>
    %303 = vector.shape_cast %302 : vector<1x128x384xf32> to vector<128x384xf32>
    %c0_84 = arith.constant 0 : index
    %c0_85 = arith.constant 0 : index
    %c0_86 = arith.constant 0 : index
    %304 = vector.load %arg9[%c0_84, %c0_85, %c0_86] : memref<1x1x384xf32, #tpu.memory_space<vmem>>, vector<1x1x384xf32>
    %305 = vector.shape_cast %304 : vector<1x1x384xf32> to vector<1x384xf32>
    %c0_87 = arith.constant 0 : index
    %c0_88 = arith.constant 0 : index
    %c0_89 = arith.constant 0 : index
    %306 = vector.load %arg8[%c0_87, %c0_88, %c0_89] : memref<1x128x384xf32, #tpu.memory_space<vmem>>, vector<1x128x384xf32>
    %307 = vector.shape_cast %306 : vector<1x128x384xf32> to vector<128x384xf32>
    %c0_90 = arith.constant 0 : index
    %c0_91 = arith.constant 0 : index
    %c0_92 = arith.constant 0 : index
    %308 = vector.load %arg10[%c0_90, %c0_91, %c0_92] : memref<1x1x128xf32, #tpu.memory_space<vmem>>, vector<1x1x128xf32>
    %309 = vector.shape_cast %308 : vector<1x1x128xf32> to vector<1x128xf32>
    %cst_93 = arith.constant dense<0.000000e+00> : vector<16x384xf32>
    %310 = tpu.matmul %301, %303, %cst_93 {dimension_numbers = #tpu.dot_dimension_numbers<[1], [0], [0], [1], [0, 0, 1, 1], [], []>} : vector<16x128xf32>, vector<128x384xf32>, vector<16x384xf32> -> vector<16x384xf32>
    %311 = vector.broadcast %305 : vector<1x384xf32> to vector<16x384xf32>
    %312 = arith.addf %310, %311 : vector<16x384xf32>
    %313 = vector.shape_cast %312 : vector<16x384xf32> to vector<8x2x384xf32>
    %c0_94 = arith.constant 0 : index
    %c0_95 = arith.constant 0 : index
    %c0_96 = arith.constant 0 : index
    %314 = vector.load %arg15[%c0_94, %c0_95, %c0_96] : memref<8x2x384xf32, #tpu.memory_space<vmem>>, vector<8x2x384xf32>
    tpu.vector_store %arg15[%c0_94, %c0_95, %c0_96], %313 {strides = array<i32>} : memref<8x2x384xf32, #tpu.memory_space<vmem>>, vector<8x2x384xf32>,
    %cst_97 = arith.constant 0.000000e+00 : f32
    %315 = vector.broadcast %cst_97 : f32 to vector<2x128xf32>
    %c0_i32_98 = arith.constant 0 : i32
    %316 = arith.index_cast %c0_i32_98 : i32 to index
    %c0_99 = arith.constant 0 : index
    %c0_100 = arith.constant 0 : index
    %317 = vector.load %arg15[%316, %c0_99, %c0_100] : memref<8x2x384xf32, #tpu.memory_space<vmem>>, vector<1x2x384xf32>
    %318 = vector.shape_cast %317 : vector<1x2x384xf32> to vector<2x384xf32>
    %cst_101 = arith.constant dense<0.000000e+00> : vector<2x384xf32>
    %319 = tpu.matmul %315, %307, %cst_101 {dimension_numbers = #tpu.dot_dimension_numbers<[1], [0], [0], [1], [0, 0, 1, 1], [], []>} : vector<2x128xf32>, vector<128x384xf32>, vector<2x384xf32> -> vector<2x384xf32>
    %320 = vector.extract_strided_slice %318 {offsets = [0, 0], sizes = [2, 128], strides = [1, 1]} : vector<2x384xf32> to vector<2x128xf32>
    %321 = vector.extract_strided_slice %319 {offsets = [0, 0], sizes = [2, 128], strides = [1, 1]} : vector<2x384xf32> to vector<2x128xf32>
    %322 = arith.addf %320, %321 : vector<2x128xf32>
    %323 = arith.negf %322 : vector<2x128xf32>
    %324 = math.exp %323 : vector<2x128xf32>
    %cst_102 = arith.constant 1.000000e+00 : f32
    %325 = vector.broadcast %cst_102 : f32 to vector<2x128xf32>
    %326 = arith.addf %325, %324 : vector<2x128xf32>
    %327 = arith.divf %325, %326 : vector<2x128xf32>
    %328 = vector.extract_strided_slice %318 {offsets = [0, 128], sizes = [2, 128], strides = [1, 1]} : vector<2x384xf32> to vector<2x128xf32>
    %329 = vector.extract_strided_slice %319 {offsets = [0, 128], sizes = [2, 128], strides = [1, 1]} : vector<2x384xf32> to vector<2x128xf32>
    %330 = arith.addf %328, %329 : vector<2x128xf32>
    %331 = arith.negf %330 : vector<2x128xf32>
    %332 = math.exp %331 : vector<2x128xf32>
    %cst_103 = arith.constant 1.000000e+00 : f32
    %333 = vector.broadcast %cst_103 : f32 to vector<2x128xf32>
    %334 = arith.addf %333, %332 : vector<2x128xf32>
    %335 = arith.divf %333, %334 : vector<2x128xf32>
    %336 = vector.extract_strided_slice %318 {offsets = [0, 256], sizes = [2, 128], strides = [1, 1]} : vector<2x384xf32> to vector<2x128xf32>
    %337 = vector.extract_strided_slice %319 {offsets = [0, 256], sizes = [2, 128], strides = [1, 1]} : vector<2x384xf32> to vector<2x128xf32>
    %338 = vector.broadcast %309 : vector<1x128xf32> to vector<2x128xf32>
    %339 = arith.addf %337, %338 : vector<2x128xf32>
    %340 = arith.mulf %327, %339 : vector<2x128xf32>
    %341 = arith.addf %336, %340 : vector<2x128xf32>
    %342 = math.tanh %341 : vector<2x128xf32>
    %cst_104 = arith.constant 1.000000e+00 : f32
    %343 = vector.broadcast %cst_104 : f32 to vector<2x128xf32>
    %344 = arith.subf %343, %335 : vector<2x128xf32>
    %345 = arith.mulf %344, %342 : vector<2x128xf32>
    %346 = arith.mulf %335, %315 : vector<2x128xf32>
    %347 = arith.addf %345, %346 : vector<2x128xf32>
    %348 = arith.index_cast %c0_i32_98 : i32 to index
    %c0_105 = arith.constant 0 : index
    %c0_106 = arith.constant 0 : index
    %349 = vector.load %arg16[%348, %c0_105, %c0_106] : memref<8x2x128xf32, #tpu.memory_space<vmem>>, vector<1x2x128xf32>
    %350 = vector.shape_cast %349 : vector<1x2x128xf32> to vector<2x128xf32>
    %351 = vector.shape_cast %347 : vector<2x128xf32> to vector<1x2x128xf32>
    tpu.vector_store %arg16[%348, %c0_105, %c0_106], %351 {strides = array<i32>} : memref<8x2x128xf32, #tpu.memory_space<vmem>>, vector<1x2x128xf32>,
    %c1_i32_107 = arith.constant 1 : i32
    %352 = arith.index_cast %c1_i32_107 : i32 to index
    %c0_108 = arith.constant 0 : index
    %c0_109 = arith.constant 0 : index
    %353 = vector.load %arg15[%352, %c0_108, %c0_109] : memref<8x2x384xf32, #tpu.memory_space<vmem>>, vector<1x2x384xf32>
    %354 = vector.shape_cast %353 : vector<1x2x384xf32> to vector<2x384xf32>
    %cst_110 = arith.constant dense<0.000000e+00> : vector<2x384xf32>
    %355 = tpu.matmul %347, %307, %cst_110 {dimension_numbers = #tpu.dot_dimension_numbers<[1], [0], [0], [1], [0, 0, 1, 1], [], []>} : vector<2x128xf32>, vector<128x384xf32>, vector<2x384xf32> -> vector<2x384xf32>
    %356 = vector.extract_strided_slice %354 {offsets = [0, 0], sizes = [2, 128], strides = [1, 1]} : vector<2x384xf32> to vector<2x128xf32>
    %357 = vector.extract_strided_slice %355 {offsets = [0, 0], sizes = [2, 128], strides = [1, 1]} : vector<2x384xf32> to vector<2x128xf32>
    %358 = arith.addf %356, %357 : vector<2x128xf32>
    %359 = arith.negf %358 : vector<2x128xf32>
    %360 = math.exp %359 : vector<2x128xf32>
    %cst_111 = arith.constant 1.000000e+00 : f32
    %361 = vector.broadcast %cst_111 : f32 to vector<2x128xf32>
    %362 = arith.addf %361, %360 : vector<2x128xf32>
    %363 = arith.divf %361, %362 : vector<2x128xf32>
    %364 = vector.extract_strided_slice %354 {offsets = [0, 128], sizes = [2, 128], strides = [1, 1]} : vector<2x384xf32> to vector<2x128xf32>
    %365 = vector.extract_strided_slice %355 {offsets = [0, 128], sizes = [2, 128], strides = [1, 1]} : vector<2x384xf32> to vector<2x128xf32>
    %366 = arith.addf %364, %365 : vector<2x128xf32>
    %367 = arith.negf %366 : vector<2x128xf32>
    %368 = math.exp %367 : vector<2x128xf32>
    %cst_112 = arith.constant 1.000000e+00 : f32
    %369 = vector.broadcast %cst_112 : f32 to vector<2x128xf32>
    %370 = arith.addf %369, %368 : vector<2x128xf32>
    %371 = arith.divf %369, %370 : vector<2x128xf32>
    %372 = vector.extract_strided_slice %354 {offsets = [0, 256], sizes = [2, 128], strides = [1, 1]} : vector<2x384xf32> to vector<2x128xf32>
    %373 = vector.extract_strided_slice %355 {offsets = [0, 256], sizes = [2, 128], strides = [1, 1]} : vector<2x384xf32> to vector<2x128xf32>
    %374 = vector.broadcast %309 : vector<1x128xf32> to vector<2x128xf32>
    %375 = arith.addf %373, %374 : vector<2x128xf32>
    %376 = arith.mulf %363, %375 : vector<2x128xf32>
    %377 = arith.addf %372, %376 : vector<2x128xf32>
    %378 = math.tanh %377 : vector<2x128xf32>
    %cst_113 = arith.constant 1.000000e+00 : f32
    %379 = vector.broadcast %cst_113 : f32 to vector<2x128xf32>
    %380 = arith.subf %379, %371 : vector<2x128xf32>
    %381 = arith.mulf %380, %378 : vector<2x128xf32>
    %382 = arith.mulf %371, %347 : vector<2x128xf32>
    %383 = arith.addf %381, %382 : vector<2x128xf32>
    %384 = arith.index_cast %c1_i32_107 : i32 to index
    %c0_114 = arith.constant 0 : index
    %c0_115 = arith.constant 0 : index
    %385 = vector.load %arg16[%384, %c0_114, %c0_115] : memref<8x2x128xf32, #tpu.memory_space<vmem>>, vector<1x2x128xf32>
    %386 = vector.shape_cast %385 : vector<1x2x128xf32> to vector<2x128xf32>
    %387 = vector.shape_cast %383 : vector<2x128xf32> to vector<1x2x128xf32>
    tpu.vector_store %arg16[%384, %c0_114, %c0_115], %387 {strides = array<i32>} : memref<8x2x128xf32, #tpu.memory_space<vmem>>, vector<1x2x128xf32>,
    %c2_i32_116 = arith.constant 2 : i32
    %388 = arith.index_cast %c2_i32_116 : i32 to index
    %c0_117 = arith.constant 0 : index
    %c0_118 = arith.constant 0 : index
    %389 = vector.load %arg15[%388, %c0_117, %c0_118] : memref<8x2x384xf32, #tpu.memory_space<vmem>>, vector<1x2x384xf32>
    %390 = vector.shape_cast %389 : vector<1x2x384xf32> to vector<2x384xf32>
    %cst_119 = arith.constant dense<0.000000e+00> : vector<2x384xf32>
    %391 = tpu.matmul %383, %307, %cst_119 {dimension_numbers = #tpu.dot_dimension_numbers<[1], [0], [0], [1], [0, 0, 1, 1], [], []>} : vector<2x128xf32>, vector<128x384xf32>, vector<2x384xf32> -> vector<2x384xf32>
    %392 = vector.extract_strided_slice %390 {offsets = [0, 0], sizes = [2, 128], strides = [1, 1]} : vector<2x384xf32> to vector<2x128xf32>
    %393 = vector.extract_strided_slice %391 {offsets = [0, 0], sizes = [2, 128], strides = [1, 1]} : vector<2x384xf32> to vector<2x128xf32>
    %394 = arith.addf %392, %393 : vector<2x128xf32>
    %395 = arith.negf %394 : vector<2x128xf32>
    %396 = math.exp %395 : vector<2x128xf32>
    %cst_120 = arith.constant 1.000000e+00 : f32
    %397 = vector.broadcast %cst_120 : f32 to vector<2x128xf32>
    %398 = arith.addf %397, %396 : vector<2x128xf32>
    %399 = arith.divf %397, %398 : vector<2x128xf32>
    %400 = vector.extract_strided_slice %390 {offsets = [0, 128], sizes = [2, 128], strides = [1, 1]} : vector<2x384xf32> to vector<2x128xf32>
    %401 = vector.extract_strided_slice %391 {offsets = [0, 128], sizes = [2, 128], strides = [1, 1]} : vector<2x384xf32> to vector<2x128xf32>
    %402 = arith.addf %400, %401 : vector<2x128xf32>
    %403 = arith.negf %402 : vector<2x128xf32>
    %404 = math.exp %403 : vector<2x128xf32>
    %cst_121 = arith.constant 1.000000e+00 : f32
    %405 = vector.broadcast %cst_121 : f32 to vector<2x128xf32>
    %406 = arith.addf %405, %404 : vector<2x128xf32>
    %407 = arith.divf %405, %406 : vector<2x128xf32>
    %408 = vector.extract_strided_slice %390 {offsets = [0, 256], sizes = [2, 128], strides = [1, 1]} : vector<2x384xf32> to vector<2x128xf32>
    %409 = vector.extract_strided_slice %391 {offsets = [0, 256], sizes = [2, 128], strides = [1, 1]} : vector<2x384xf32> to vector<2x128xf32>
    %410 = vector.broadcast %309 : vector<1x128xf32> to vector<2x128xf32>
    %411 = arith.addf %409, %410 : vector<2x128xf32>
    %412 = arith.mulf %399, %411 : vector<2x128xf32>
    %413 = arith.addf %408, %412 : vector<2x128xf32>
    %414 = math.tanh %413 : vector<2x128xf32>
    %cst_122 = arith.constant 1.000000e+00 : f32
    %415 = vector.broadcast %cst_122 : f32 to vector<2x128xf32>
    %416 = arith.subf %415, %407 : vector<2x128xf32>
    %417 = arith.mulf %416, %414 : vector<2x128xf32>
    %418 = arith.mulf %407, %383 : vector<2x128xf32>
    %419 = arith.addf %417, %418 : vector<2x128xf32>
    %420 = arith.index_cast %c2_i32_116 : i32 to index
    %c0_123 = arith.constant 0 : index
    %c0_124 = arith.constant 0 : index
    %421 = vector.load %arg16[%420, %c0_123, %c0_124] : memref<8x2x128xf32, #tpu.memory_space<vmem>>, vector<1x2x128xf32>
    %422 = vector.shape_cast %421 : vector<1x2x128xf32> to vector<2x128xf32>
    %423 = vector.shape_cast %419 : vector<2x128xf32> to vector<1x2x128xf32>
    tpu.vector_store %arg16[%420, %c0_123, %c0_124], %423 {strides = array<i32>} : memref<8x2x128xf32, #tpu.memory_space<vmem>>, vector<1x2x128xf32>,
    %c3_i32_125 = arith.constant 3 : i32
    %424 = arith.index_cast %c3_i32_125 : i32 to index
    %c0_126 = arith.constant 0 : index
    %c0_127 = arith.constant 0 : index
    %425 = vector.load %arg15[%424, %c0_126, %c0_127] : memref<8x2x384xf32, #tpu.memory_space<vmem>>, vector<1x2x384xf32>
    %426 = vector.shape_cast %425 : vector<1x2x384xf32> to vector<2x384xf32>
    %cst_128 = arith.constant dense<0.000000e+00> : vector<2x384xf32>
    %427 = tpu.matmul %419, %307, %cst_128 {dimension_numbers = #tpu.dot_dimension_numbers<[1], [0], [0], [1], [0, 0, 1, 1], [], []>} : vector<2x128xf32>, vector<128x384xf32>, vector<2x384xf32> -> vector<2x384xf32>
    %428 = vector.extract_strided_slice %426 {offsets = [0, 0], sizes = [2, 128], strides = [1, 1]} : vector<2x384xf32> to vector<2x128xf32>
    %429 = vector.extract_strided_slice %427 {offsets = [0, 0], sizes = [2, 128], strides = [1, 1]} : vector<2x384xf32> to vector<2x128xf32>
    %430 = arith.addf %428, %429 : vector<2x128xf32>
    %431 = arith.negf %430 : vector<2x128xf32>
    %432 = math.exp %431 : vector<2x128xf32>
    %cst_129 = arith.constant 1.000000e+00 : f32
    %433 = vector.broadcast %cst_129 : f32 to vector<2x128xf32>
    %434 = arith.addf %433, %432 : vector<2x128xf32>
    %435 = arith.divf %433, %434 : vector<2x128xf32>
    %436 = vector.extract_strided_slice %426 {offsets = [0, 128], sizes = [2, 128], strides = [1, 1]} : vector<2x384xf32> to vector<2x128xf32>
    %437 = vector.extract_strided_slice %427 {offsets = [0, 128], sizes = [2, 128], strides = [1, 1]} : vector<2x384xf32> to vector<2x128xf32>
    %438 = arith.addf %436, %437 : vector<2x128xf32>
    %439 = arith.negf %438 : vector<2x128xf32>
    %440 = math.exp %439 : vector<2x128xf32>
    %cst_130 = arith.constant 1.000000e+00 : f32
    %441 = vector.broadcast %cst_130 : f32 to vector<2x128xf32>
    %442 = arith.addf %441, %440 : vector<2x128xf32>
    %443 = arith.divf %441, %442 : vector<2x128xf32>
    %444 = vector.extract_strided_slice %426 {offsets = [0, 256], sizes = [2, 128], strides = [1, 1]} : vector<2x384xf32> to vector<2x128xf32>
    %445 = vector.extract_strided_slice %427 {offsets = [0, 256], sizes = [2, 128], strides = [1, 1]} : vector<2x384xf32> to vector<2x128xf32>
    %446 = vector.broadcast %309 : vector<1x128xf32> to vector<2x128xf32>
    %447 = arith.addf %445, %446 : vector<2x128xf32>
    %448 = arith.mulf %435, %447 : vector<2x128xf32>
    %449 = arith.addf %444, %448 : vector<2x128xf32>
    %450 = math.tanh %449 : vector<2x128xf32>
    %cst_131 = arith.constant 1.000000e+00 : f32
    %451 = vector.broadcast %cst_131 : f32 to vector<2x128xf32>
    %452 = arith.subf %451, %443 : vector<2x128xf32>
    %453 = arith.mulf %452, %450 : vector<2x128xf32>
    %454 = arith.mulf %443, %419 : vector<2x128xf32>
    %455 = arith.addf %453, %454 : vector<2x128xf32>
    %456 = arith.index_cast %c3_i32_125 : i32 to index
    %c0_132 = arith.constant 0 : index
    %c0_133 = arith.constant 0 : index
    %457 = vector.load %arg16[%456, %c0_132, %c0_133] : memref<8x2x128xf32, #tpu.memory_space<vmem>>, vector<1x2x128xf32>
    %458 = vector.shape_cast %457 : vector<1x2x128xf32> to vector<2x128xf32>
    %459 = vector.shape_cast %455 : vector<2x128xf32> to vector<1x2x128xf32>
    tpu.vector_store %arg16[%456, %c0_132, %c0_133], %459 {strides = array<i32>} : memref<8x2x128xf32, #tpu.memory_space<vmem>>, vector<1x2x128xf32>,
    %c4_i32_134 = arith.constant 4 : i32
    %460 = arith.index_cast %c4_i32_134 : i32 to index
    %c0_135 = arith.constant 0 : index
    %c0_136 = arith.constant 0 : index
    %461 = vector.load %arg15[%460, %c0_135, %c0_136] : memref<8x2x384xf32, #tpu.memory_space<vmem>>, vector<1x2x384xf32>
    %462 = vector.shape_cast %461 : vector<1x2x384xf32> to vector<2x384xf32>
    %cst_137 = arith.constant dense<0.000000e+00> : vector<2x384xf32>
    %463 = tpu.matmul %455, %307, %cst_137 {dimension_numbers = #tpu.dot_dimension_numbers<[1], [0], [0], [1], [0, 0, 1, 1], [], []>} : vector<2x128xf32>, vector<128x384xf32>, vector<2x384xf32> -> vector<2x384xf32>
    %464 = vector.extract_strided_slice %462 {offsets = [0, 0], sizes = [2, 128], strides = [1, 1]} : vector<2x384xf32> to vector<2x128xf32>
    %465 = vector.extract_strided_slice %463 {offsets = [0, 0], sizes = [2, 128], strides = [1, 1]} : vector<2x384xf32> to vector<2x128xf32>
    %466 = arith.addf %464, %465 : vector<2x128xf32>
    %467 = arith.negf %466 : vector<2x128xf32>
    %468 = math.exp %467 : vector<2x128xf32>
    %cst_138 = arith.constant 1.000000e+00 : f32
    %469 = vector.broadcast %cst_138 : f32 to vector<2x128xf32>
    %470 = arith.addf %469, %468 : vector<2x128xf32>
    %471 = arith.divf %469, %470 : vector<2x128xf32>
    %472 = vector.extract_strided_slice %462 {offsets = [0, 128], sizes = [2, 128], strides = [1, 1]} : vector<2x384xf32> to vector<2x128xf32>
    %473 = vector.extract_strided_slice %463 {offsets = [0, 128], sizes = [2, 128], strides = [1, 1]} : vector<2x384xf32> to vector<2x128xf32>
    %474 = arith.addf %472, %473 : vector<2x128xf32>
    %475 = arith.negf %474 : vector<2x128xf32>
    %476 = math.exp %475 : vector<2x128xf32>
    %cst_139 = arith.constant 1.000000e+00 : f32
    %477 = vector.broadcast %cst_139 : f32 to vector<2x128xf32>
    %478 = arith.addf %477, %476 : vector<2x128xf32>
    %479 = arith.divf %477, %478 : vector<2x128xf32>
    %480 = vector.extract_strided_slice %462 {offsets = [0, 256], sizes = [2, 128], strides = [1, 1]} : vector<2x384xf32> to vector<2x128xf32>
    %481 = vector.extract_strided_slice %463 {offsets = [0, 256], sizes = [2, 128], strides = [1, 1]} : vector<2x384xf32> to vector<2x128xf32>
    %482 = vector.broadcast %309 : vector<1x128xf32> to vector<2x128xf32>
    %483 = arith.addf %481, %482 : vector<2x128xf32>
    %484 = arith.mulf %471, %483 : vector<2x128xf32>
    %485 = arith.addf %480, %484 : vector<2x128xf32>
    %486 = math.tanh %485 : vector<2x128xf32>
    %cst_140 = arith.constant 1.000000e+00 : f32
    %487 = vector.broadcast %cst_140 : f32 to vector<2x128xf32>
    %488 = arith.subf %487, %479 : vector<2x128xf32>
    %489 = arith.mulf %488, %486 : vector<2x128xf32>
    %490 = arith.mulf %479, %455 : vector<2x128xf32>
    %491 = arith.addf %489, %490 : vector<2x128xf32>
    %492 = arith.index_cast %c4_i32_134 : i32 to index
    %c0_141 = arith.constant 0 : index
    %c0_142 = arith.constant 0 : index
    %493 = vector.load %arg16[%492, %c0_141, %c0_142] : memref<8x2x128xf32, #tpu.memory_space<vmem>>, vector<1x2x128xf32>
    %494 = vector.shape_cast %493 : vector<1x2x128xf32> to vector<2x128xf32>
    %495 = vector.shape_cast %491 : vector<2x128xf32> to vector<1x2x128xf32>
    tpu.vector_store %arg16[%492, %c0_141, %c0_142], %495 {strides = array<i32>} : memref<8x2x128xf32, #tpu.memory_space<vmem>>, vector<1x2x128xf32>,
    %c5_i32_143 = arith.constant 5 : i32
    %496 = arith.index_cast %c5_i32_143 : i32 to index
    %c0_144 = arith.constant 0 : index
    %c0_145 = arith.constant 0 : index
    %497 = vector.load %arg15[%496, %c0_144, %c0_145] : memref<8x2x384xf32, #tpu.memory_space<vmem>>, vector<1x2x384xf32>
    %498 = vector.shape_cast %497 : vector<1x2x384xf32> to vector<2x384xf32>
    %cst_146 = arith.constant dense<0.000000e+00> : vector<2x384xf32>
    %499 = tpu.matmul %491, %307, %cst_146 {dimension_numbers = #tpu.dot_dimension_numbers<[1], [0], [0], [1], [0, 0, 1, 1], [], []>} : vector<2x128xf32>, vector<128x384xf32>, vector<2x384xf32> -> vector<2x384xf32>
    %500 = vector.extract_strided_slice %498 {offsets = [0, 0], sizes = [2, 128], strides = [1, 1]} : vector<2x384xf32> to vector<2x128xf32>
    %501 = vector.extract_strided_slice %499 {offsets = [0, 0], sizes = [2, 128], strides = [1, 1]} : vector<2x384xf32> to vector<2x128xf32>
    %502 = arith.addf %500, %501 : vector<2x128xf32>
    %503 = arith.negf %502 : vector<2x128xf32>
    %504 = math.exp %503 : vector<2x128xf32>
    %cst_147 = arith.constant 1.000000e+00 : f32
    %505 = vector.broadcast %cst_147 : f32 to vector<2x128xf32>
    %506 = arith.addf %505, %504 : vector<2x128xf32>
    %507 = arith.divf %505, %506 : vector<2x128xf32>
    %508 = vector.extract_strided_slice %498 {offsets = [0, 128], sizes = [2, 128], strides = [1, 1]} : vector<2x384xf32> to vector<2x128xf32>
    %509 = vector.extract_strided_slice %499 {offsets = [0, 128], sizes = [2, 128], strides = [1, 1]} : vector<2x384xf32> to vector<2x128xf32>
    %510 = arith.addf %508, %509 : vector<2x128xf32>
    %511 = arith.negf %510 : vector<2x128xf32>
    %512 = math.exp %511 : vector<2x128xf32>
    %cst_148 = arith.constant 1.000000e+00 : f32
    %513 = vector.broadcast %cst_148 : f32 to vector<2x128xf32>
    %514 = arith.addf %513, %512 : vector<2x128xf32>
    %515 = arith.divf %513, %514 : vector<2x128xf32>
    %516 = vector.extract_strided_slice %498 {offsets = [0, 256], sizes = [2, 128], strides = [1, 1]} : vector<2x384xf32> to vector<2x128xf32>
    %517 = vector.extract_strided_slice %499 {offsets = [0, 256], sizes = [2, 128], strides = [1, 1]} : vector<2x384xf32> to vector<2x128xf32>
    %518 = vector.broadcast %309 : vector<1x128xf32> to vector<2x128xf32>
    %519 = arith.addf %517, %518 : vector<2x128xf32>
    %520 = arith.mulf %507, %519 : vector<2x128xf32>
    %521 = arith.addf %516, %520 : vector<2x128xf32>
    %522 = math.tanh %521 : vector<2x128xf32>
    %cst_149 = arith.constant 1.000000e+00 : f32
    %523 = vector.broadcast %cst_149 : f32 to vector<2x128xf32>
    %524 = arith.subf %523, %515 : vector<2x128xf32>
    %525 = arith.mulf %524, %522 : vector<2x128xf32>
    %526 = arith.mulf %515, %491 : vector<2x128xf32>
    %527 = arith.addf %525, %526 : vector<2x128xf32>
    %528 = arith.index_cast %c5_i32_143 : i32 to index
    %c0_150 = arith.constant 0 : index
    %c0_151 = arith.constant 0 : index
    %529 = vector.load %arg16[%528, %c0_150, %c0_151] : memref<8x2x128xf32, #tpu.memory_space<vmem>>, vector<1x2x128xf32>
    %530 = vector.shape_cast %529 : vector<1x2x128xf32> to vector<2x128xf32>
    %531 = vector.shape_cast %527 : vector<2x128xf32> to vector<1x2x128xf32>
    tpu.vector_store %arg16[%528, %c0_150, %c0_151], %531 {strides = array<i32>} : memref<8x2x128xf32, #tpu.memory_space<vmem>>, vector<1x2x128xf32>,
    %c6_i32_152 = arith.constant 6 : i32
    %532 = arith.index_cast %c6_i32_152 : i32 to index
    %c0_153 = arith.constant 0 : index
    %c0_154 = arith.constant 0 : index
    %533 = vector.load %arg15[%532, %c0_153, %c0_154] : memref<8x2x384xf32, #tpu.memory_space<vmem>>, vector<1x2x384xf32>
    %534 = vector.shape_cast %533 : vector<1x2x384xf32> to vector<2x384xf32>
    %cst_155 = arith.constant dense<0.000000e+00> : vector<2x384xf32>
    %535 = tpu.matmul %527, %307, %cst_155 {dimension_numbers = #tpu.dot_dimension_numbers<[1], [0], [0], [1], [0, 0, 1, 1], [], []>} : vector<2x128xf32>, vector<128x384xf32>, vector<2x384xf32> -> vector<2x384xf32>
    %536 = vector.extract_strided_slice %534 {offsets = [0, 0], sizes = [2, 128], strides = [1, 1]} : vector<2x384xf32> to vector<2x128xf32>
    %537 = vector.extract_strided_slice %535 {offsets = [0, 0], sizes = [2, 128], strides = [1, 1]} : vector<2x384xf32> to vector<2x128xf32>
    %538 = arith.addf %536, %537 : vector<2x128xf32>
    %539 = arith.negf %538 : vector<2x128xf32>
    %540 = math.exp %539 : vector<2x128xf32>
    %cst_156 = arith.constant 1.000000e+00 : f32
    %541 = vector.broadcast %cst_156 : f32 to vector<2x128xf32>
    %542 = arith.addf %541, %540 : vector<2x128xf32>
    %543 = arith.divf %541, %542 : vector<2x128xf32>
    %544 = vector.extract_strided_slice %534 {offsets = [0, 128], sizes = [2, 128], strides = [1, 1]} : vector<2x384xf32> to vector<2x128xf32>
    %545 = vector.extract_strided_slice %535 {offsets = [0, 128], sizes = [2, 128], strides = [1, 1]} : vector<2x384xf32> to vector<2x128xf32>
    %546 = arith.addf %544, %545 : vector<2x128xf32>
    %547 = arith.negf %546 : vector<2x128xf32>
    %548 = math.exp %547 : vector<2x128xf32>
    %cst_157 = arith.constant 1.000000e+00 : f32
    %549 = vector.broadcast %cst_157 : f32 to vector<2x128xf32>
    %550 = arith.addf %549, %548 : vector<2x128xf32>
    %551 = arith.divf %549, %550 : vector<2x128xf32>
    %552 = vector.extract_strided_slice %534 {offsets = [0, 256], sizes = [2, 128], strides = [1, 1]} : vector<2x384xf32> to vector<2x128xf32>
    %553 = vector.extract_strided_slice %535 {offsets = [0, 256], sizes = [2, 128], strides = [1, 1]} : vector<2x384xf32> to vector<2x128xf32>
    %554 = vector.broadcast %309 : vector<1x128xf32> to vector<2x128xf32>
    %555 = arith.addf %553, %554 : vector<2x128xf32>
    %556 = arith.mulf %543, %555 : vector<2x128xf32>
    %557 = arith.addf %552, %556 : vector<2x128xf32>
    %558 = math.tanh %557 : vector<2x128xf32>
    %cst_158 = arith.constant 1.000000e+00 : f32
    %559 = vector.broadcast %cst_158 : f32 to vector<2x128xf32>
    %560 = arith.subf %559, %551 : vector<2x128xf32>
    %561 = arith.mulf %560, %558 : vector<2x128xf32>
    %562 = arith.mulf %551, %527 : vector<2x128xf32>
    %563 = arith.addf %561, %562 : vector<2x128xf32>
    %564 = arith.index_cast %c6_i32_152 : i32 to index
    %c0_159 = arith.constant 0 : index
    %c0_160 = arith.constant 0 : index
    %565 = vector.load %arg16[%564, %c0_159, %c0_160] : memref<8x2x128xf32, #tpu.memory_space<vmem>>, vector<1x2x128xf32>
    %566 = vector.shape_cast %565 : vector<1x2x128xf32> to vector<2x128xf32>
    %567 = vector.shape_cast %563 : vector<2x128xf32> to vector<1x2x128xf32>
    tpu.vector_store %arg16[%564, %c0_159, %c0_160], %567 {strides = array<i32>} : memref<8x2x128xf32, #tpu.memory_space<vmem>>, vector<1x2x128xf32>,
    %c7_i32_161 = arith.constant 7 : i32
    %568 = arith.index_cast %c7_i32_161 : i32 to index
    %c0_162 = arith.constant 0 : index
    %c0_163 = arith.constant 0 : index
    %569 = vector.load %arg15[%568, %c0_162, %c0_163] : memref<8x2x384xf32, #tpu.memory_space<vmem>>, vector<1x2x384xf32>
    %570 = vector.shape_cast %569 : vector<1x2x384xf32> to vector<2x384xf32>
    %cst_164 = arith.constant dense<0.000000e+00> : vector<2x384xf32>
    %571 = tpu.matmul %563, %307, %cst_164 {dimension_numbers = #tpu.dot_dimension_numbers<[1], [0], [0], [1], [0, 0, 1, 1], [], []>} : vector<2x128xf32>, vector<128x384xf32>, vector<2x384xf32> -> vector<2x384xf32>
    %572 = vector.extract_strided_slice %570 {offsets = [0, 0], sizes = [2, 128], strides = [1, 1]} : vector<2x384xf32> to vector<2x128xf32>
    %573 = vector.extract_strided_slice %571 {offsets = [0, 0], sizes = [2, 128], strides = [1, 1]} : vector<2x384xf32> to vector<2x128xf32>
    %574 = arith.addf %572, %573 : vector<2x128xf32>
    %575 = arith.negf %574 : vector<2x128xf32>
    %576 = math.exp %575 : vector<2x128xf32>
    %cst_165 = arith.constant 1.000000e+00 : f32
    %577 = vector.broadcast %cst_165 : f32 to vector<2x128xf32>
    %578 = arith.addf %577, %576 : vector<2x128xf32>
    %579 = arith.divf %577, %578 : vector<2x128xf32>
    %580 = vector.extract_strided_slice %570 {offsets = [0, 128], sizes = [2, 128], strides = [1, 1]} : vector<2x384xf32> to vector<2x128xf32>
    %581 = vector.extract_strided_slice %571 {offsets = [0, 128], sizes = [2, 128], strides = [1, 1]} : vector<2x384xf32> to vector<2x128xf32>
    %582 = arith.addf %580, %581 : vector<2x128xf32>
    %583 = arith.negf %582 : vector<2x128xf32>
    %584 = math.exp %583 : vector<2x128xf32>
    %cst_166 = arith.constant 1.000000e+00 : f32
    %585 = vector.broadcast %cst_166 : f32 to vector<2x128xf32>
    %586 = arith.addf %585, %584 : vector<2x128xf32>
    %587 = arith.divf %585, %586 : vector<2x128xf32>
    %588 = vector.extract_strided_slice %570 {offsets = [0, 256], sizes = [2, 128], strides = [1, 1]} : vector<2x384xf32> to vector<2x128xf32>
    %589 = vector.extract_strided_slice %571 {offsets = [0, 256], sizes = [2, 128], strides = [1, 1]} : vector<2x384xf32> to vector<2x128xf32>
    %590 = vector.broadcast %309 : vector<1x128xf32> to vector<2x128xf32>
    %591 = arith.addf %589, %590 : vector<2x128xf32>
    %592 = arith.mulf %579, %591 : vector<2x128xf32>
    %593 = arith.addf %588, %592 : vector<2x128xf32>
    %594 = math.tanh %593 : vector<2x128xf32>
    %cst_167 = arith.constant 1.000000e+00 : f32
    %595 = vector.broadcast %cst_167 : f32 to vector<2x128xf32>
    %596 = arith.subf %595, %587 : vector<2x128xf32>
    %597 = arith.mulf %596, %594 : vector<2x128xf32>
    %598 = arith.mulf %587, %563 : vector<2x128xf32>
    %599 = arith.addf %597, %598 : vector<2x128xf32>
    %600 = arith.index_cast %c7_i32_161 : i32 to index
    %c0_168 = arith.constant 0 : index
    %c0_169 = arith.constant 0 : index
    %601 = vector.load %arg16[%600, %c0_168, %c0_169] : memref<8x2x128xf32, #tpu.memory_space<vmem>>, vector<1x2x128xf32>
    %602 = vector.shape_cast %601 : vector<1x2x128xf32> to vector<2x128xf32>
    %603 = vector.shape_cast %599 : vector<2x128xf32> to vector<1x2x128xf32>
    tpu.vector_store %arg16[%600, %c0_168, %c0_169], %603 {strides = array<i32>} : memref<8x2x128xf32, #tpu.memory_space<vmem>>, vector<1x2x128xf32>,
    %c8_i32_170 = arith.constant 8 : i32
    %c0_171 = arith.constant 0 : index
    %c0_172 = arith.constant 0 : index
    %c0_173 = arith.constant 0 : index
    %604 = vector.load %arg16[%c0_171, %c0_172, %c0_173] : memref<8x2x128xf32, #tpu.memory_space<vmem>>, vector<8x2x128xf32>
    %605 = vector.shape_cast %604 : vector<8x2x128xf32> to vector<16x128xf32>
    %c0_174 = arith.constant 0 : index
    %c0_175 = arith.constant 0 : index
    %606 = vector.load %arg11[%c0_174, %c0_175] : memref<128x128xf32, #tpu.memory_space<vmem>>, vector<128x128xf32>
    %cst_176 = arith.constant dense<0.000000e+00> : vector<16x128xf32>
    %607 = tpu.matmul %605, %606, %cst_176 {dimension_numbers = #tpu.dot_dimension_numbers<[1], [0], [0], [1], [0, 0, 1, 1], [], []>} : vector<16x128xf32>, vector<128x128xf32>, vector<16x128xf32> -> vector<16x128xf32>
    %c0_177 = arith.constant 0 : index
    %c0_178 = arith.constant 0 : index
    %608 = vector.load %arg12[%c0_177, %c0_178] : memref<1x128xf32, #tpu.memory_space<vmem>>, vector<1x128xf32>
    %609 = vector.broadcast %608 : vector<1x128xf32> to vector<16x128xf32>
    %610 = arith.addf %607, %609 : vector<16x128xf32>
    %611 = arith.negf %610 : vector<16x128xf32>
    %612 = math.exp %611 : vector<16x128xf32>
    %cst_179 = arith.constant 1.000000e+00 : f32
    %613 = vector.broadcast %cst_179 : f32 to vector<16x128xf32>
    %614 = arith.addf %613, %612 : vector<16x128xf32>
    %615 = arith.divf %613, %614 : vector<16x128xf32>
    %616 = vector.shape_cast %615 : vector<16x128xf32> to vector<8x2x128xf32>
    %617 = tpu.iota {dimensions = array<i32: 0>} : vector<8x2x1xi32>
    %c0_180 = arith.constant 0 : index
    %c0_181 = arith.constant 0 : index
    %618 = vector.load %arg2[%c0_180, %c0_181] : memref<2x1xi32, #tpu.memory_space<vmem>>, vector<2x1xi32>
    %619 = vector.shape_cast %618 : vector<2x1xi32> to vector<1x2x1xi32>
    %620 = vector.broadcast %619 : vector<1x2x1xi32> to vector<8x2x1xi32>
    %621 = arith.cmpi slt, %617, %620 : vector<8x2x1xi32>
    %c0_182 = arith.constant 0 : index
    %c0_183 = arith.constant 0 : index
    %622 = vector.load %arg13[%c0_182, %c0_183] : memref<1x128xf32, #tpu.memory_space<vmem>>, vector<1x128xf32>
    %623 = vector.shape_cast %622 : vector<1x128xf32> to vector<1x1x128xf32>
    %624 = vector.shape_cast %621 : vector<8x2x1xi1> to vector<8x2x1xi1>
    %625 = vector.broadcast %624 : vector<8x2x1xi1> to vector<8x2x128xi1>
    %626 = vector.shape_cast %623 : vector<1x1x128xf32> to vector<1x1x128xf32>
    %627 = vector.broadcast %626 : vector<1x1x128xf32> to vector<8x2x128xf32>
    %628 = arith.select %625, %616, %627 : vector<8x2x128xi1>, vector<8x2x128xf32>
    %c0_184 = arith.constant 0 : index
    %c0_185 = arith.constant 0 : index
    %c0_186 = arith.constant 0 : index
    %629 = vector.load %arg14[%c0_184, %c0_185, %c0_186] : memref<8x2x128xf32, #tpu.memory_space<vmem>>, vector<8x2x128xf32>
    tpu.vector_store %arg14[%c0_184, %c0_185, %c0_186], %628 {strides = array<i32>} : memref<8x2x128xf32, #tpu.memory_space<vmem>>, vector<8x2x128xf32>,
    return
  }
  func.func @transform_0(%arg0: i32) -> (i32, i32, i32) {
    %c0_i32 = arith.constant 0 : i32
    %c0_i32_0 = arith.constant 0 : i32
    %c0_i32_1 = arith.constant 0 : i32
    return %c0_i32, %arg0, %c0_i32_0 : i32, i32, i32
  }
  func.func @transform_1(%arg0: i32) -> (i32, i32) {
    %c0_i32 = arith.constant 0 : i32
    %c0_i32_0 = arith.constant 0 : i32
    return %arg0, %c0_i32 : i32, i32
  }
  func.func @transform_2(%arg0: i32) -> (i32, i32) {
    %c0_i32 = arith.constant 0 : i32
    %c0_i32_0 = arith.constant 0 : i32
    %c0_i32_1 = arith.constant 0 : i32
    return %c0_i32, %c0_i32_0 : i32, i32
  }
  func.func @transform_3(%arg0: i32) -> (i32, i32) {
    %c0_i32 = arith.constant 0 : i32
    %c0_i32_0 = arith.constant 0 : i32
    %c0_i32_1 = arith.constant 0 : i32
    return %c0_i32, %c0_i32_0 : i32, i32
  }
  func.func @transform_4(%arg0: i32) -> (i32, i32) {
    %c0_i32 = arith.constant 0 : i32
    %c0_i32_0 = arith.constant 0 : i32
    %c0_i32_1 = arith.constant 0 : i32
    return %c0_i32, %c0_i32_0 : i32, i32
  }
  func.func @transform_5(%arg0: i32) -> (i32, i32) {
    %c0_i32 = arith.constant 0 : i32
    %c0_i32_0 = arith.constant 0 : i32
    %c0_i32_1 = arith.constant 0 : i32
    return %c0_i32, %c0_i32_0 : i32, i32
  }
  func.func @transform_6(%arg0: i32) -> (i32, i32, i32) {
    %c0_i32 = arith.constant 0 : i32
    %c0_i32_0 = arith.constant 0 : i32
    %c0_i32_1 = arith.constant 0 : i32
    %c0_i32_2 = arith.constant 0 : i32
    return %c0_i32, %c0_i32_0, %c0_i32_1 : i32, i32, i32
  }
  func.func @transform_7(%arg0: i32) -> (i32, i32, i32) {
    %c0_i32 = arith.constant 0 : i32
    %c0_i32_0 = arith.constant 0 : i32
    %c0_i32_1 = arith.constant 0 : i32
    %c0_i32_2 = arith.constant 0 : i32
    return %c0_i32, %c0_i32_0, %c0_i32_1 : i32, i32, i32
  }
  func.func @transform_8(%arg0: i32) -> (i32, i32, i32) {
    %c0_i32 = arith.constant 0 : i32
    %c0_i32_0 = arith.constant 0 : i32
    %c0_i32_1 = arith.constant 0 : i32
    %c0_i32_2 = arith.constant 0 : i32
    return %c0_i32, %c0_i32_0, %c0_i32_1 : i32, i32, i32
  }
  func.func @transform_9(%arg0: i32) -> (i32, i32, i32) {
    %c0_i32 = arith.constant 0 : i32
    %c0_i32_0 = arith.constant 0 : i32
    %c0_i32_1 = arith.constant 0 : i32
    %c0_i32_2 = arith.constant 0 : i32
    return %c0_i32, %c0_i32_0, %c0_i32_1 : i32, i32, i32
  }
  func.func @transform_10(%arg0: i32) -> (i32, i32) {
    %c0_i32 = arith.constant 0 : i32
    %c0_i32_0 = arith.constant 0 : i32
    %c0_i32_1 = arith.constant 0 : i32
    return %c0_i32, %c0_i32_0 : i32, i32
  }
  func.func @transform_11(%arg0: i32) -> (i32, i32) {
    %c0_i32 = arith.constant 0 : i32
    %c0_i32_0 = arith.constant 0 : i32
    %c0_i32_1 = arith.constant 0 : i32
    return %c0_i32, %c0_i32_0 : i32, i32
  }
  func.func @transform_12(%arg0: i32) -> (i32, i32) {
    %c0_i32 = arith.constant 0 : i32
    %c0_i32_0 = arith.constant 0 : i32
    %c0_i32_1 = arith.constant 0 : i32
    return %c0_i32, %c0_i32_0 : i32, i32
  }
  func.func @transform_13(%arg0: i32) -> (i32, i32, i32) {
    %c0_i32 = arith.constant 0 : i32
    %c0_i32_0 = arith.constant 0 : i32
    %c0_i32_1 = arith.constant 0 : i32
    return %c0_i32, %arg0, %c0_i32_0 : i32, i32, i32
  }
}

</mosaic_0001>

<llo_original>
// kernel: tpu_custom_call.1
$region0: #{tpu_custom_call.1}
  #allocation0 [shape = 'u32[]', space=smem, size = 0x4, offset = 0x4, fixed_abs, tag = 'smem constant byte address 0x4 - core index']
  #allocation1 [shape = 'u32[144,128]{1,0:T(1,128)}', space=vmem, size = 0x12000, scoped, tag = 'internal scratch']
  #allocation2 [shape = 'f32[8,2,384]{2,1,0:T(2,128)}', space=vmem, size = 0x6000, scoped, tag = 'scratch operand']
  #allocation3 [shape = 'f32[8,2,128]{2,1,0:T(2,128)}', space=vmem, size = 0x2000, scoped, tag = 'scratch operand']
  %s0 = inlined_call_operand.hbm [shape: f32[8,2,16], index: 0, kind: input, shape index: {}]
  %s1 = inlined_call_operand.vmem [shape: s32[2,1], index: 1, kind: input, shape index: {}]
  %s2 = inlined_call_operand.hbm [shape: f32[16,384], index: 2, kind: input, shape index: {}]
  %s3 = inlined_call_operand.hbm [shape: f32[128,384], index: 3, kind: input, shape index: {}]
  %s4 = inlined_call_operand.vmem [shape: f32[1,384], index: 4, kind: input, shape index: {}]
  %s5 = inlined_call_operand.vmem [shape: f32[1,128], index: 5, kind: input, shape index: {}]
  %s6 = inlined_call_operand.hbm [shape: f32[1,128,384], index: 6, kind: input, shape index: {}]
  %s7 = inlined_call_operand.hbm [shape: f32[1,128,384], index: 7, kind: input, shape index: {}]
  %s8 = inlined_call_operand.vmem [shape: f32[1,1,384], index: 8, kind: input, shape index: {}]
  %s9 = inlined_call_operand.vmem [shape: f32[1,1,128], index: 9, kind: input, shape index: {}]
  %s10 = inlined_call_operand.hbm [shape: f32[128,128], index: 10, kind: input, shape index: {}]
  %s11 = inlined_call_operand.vmem [shape: f32[1,128], index: 11, kind: input, shape index: {}]
  %s12 = inlined_call_operand.vmem [shape: f32[1,128], index: 12, kind: input, shape index: {}]
  %s13 = inlined_call_operand.hbm [shape: f32[8,2,128], index: 13, kind: output, shape index: {}]
  %s14 = sld [smem:[#allocation0]]
  $region86: #{tpu_custom_call.1} parent=0
    _
  %s16 = ssub.s32 1, %s14
  %s17 = scalar_select 0, %s16, %s14
  $region1: #{tpu_custom_call.1} parent=0
    #allocation4 [shape = 'u8[8192]{0}', space=vmem, size = 0x2000, scoped, tag = 'input window, operand 0, single buffered']
    #allocation5 [shape = 's32[1]{0}', space=sflag, size = 0x4, scoped, tag = 'scoped memory for tpu_custom_call.1']
    #allocation6 [shape = 's32[1]{0}', space=sflag, size = 0x4, scoped, tag = 'scoped memory for tpu_custom_call.1']
    #allocation7 [shape = 'u8[24576]{0}', space=vmem, size = 0x6000, scoped, tag = 'input window, operand 2, single buffered']
    #allocation8 [shape = 's32[1]{0}', space=sflag, size = 0x4, scoped, tag = 'scoped memory for tpu_custom_call.1']
    #allocation9 [shape = 'u8[196608]{0}', space=vmem, size = 0x30000, scoped, tag = 'input window, operand 3, single buffered']
    #allocation10 [shape = 'u8[196608]{0}', space=vmem, size = 0x30000, scoped, tag = 'input window, operand 6, single buffered']
    #allocation11 [shape = 's32[1]{0}', space=sflag, size = 0x4, scoped, tag = 'scoped memory for tpu_custom_call.1']
    #allocation12 [shape = 'u8[196608]{0}', space=vmem, size = 0x30000, scoped, tag = 'input window, operand 7, single buffered']
    #allocation13 [shape = 'u8[65536]{0}', space=vmem, size = 0x10000, scoped, tag = 'input window, operand 10, single buffered']
    #allocation14 [shape = 's32[1]{0}', space=sflag, size = 0x4, scoped, tag = 'scoped memory for tpu_custom_call.1']
    #allocation15 [shape = 'u8[8192]{0}', space=vmem, size = 0x2000, scoped, tag = 'output window, operand 0, single buffered']
    %18 = vsyncpa [#allocation5], 0
    %19 = vsyncpa [#allocation8], 0
    %20 = vsyncpa [#allocation11], 0
    %21 = vsyncpa [#allocation14], 0
    %22 = vsyncpa [#allocation6], 0
    // Predicated region
    $region2: #{tpu_custom_call.1} parent=1 // pred_check
      _
    $region3: #{tpu_custom_call.1} parent=1 // pred_check_branch
      %24 = sbr.rel (0) target = $region5
    $region4: #{tpu_custom_call.1} parent=1 // pred_region
      %s26 = ssub.s32 256, 256
      %27 = vsyncadd [#allocation5], %s26
      %s28 = sshll.u32 [#allocation4], 4
      %s29 = int_to_ptr.vmem [resolvable:$true] %s28
      %34 = dma.hbm_to_vmem [thread:$0]  %s0, 256, %s29, [#allocation5], 32, 32, 2
    $region5: #{tpu_custom_call.1} parent=1 // pred_fallthru
      _
    // Predicated region
    $region6: #{tpu_custom_call.1} parent=1 // pred_check
      _
    $region7: #{tpu_custom_call.1} parent=1 // pred_check_branch
      %36 = sbr.rel (0) target = $region9
    $region8: #{tpu_custom_call.1} parent=1 // pred_region
      _
    $region9: #{tpu_custom_call.1} parent=1 // pred_fallthru
      _
    // Predicated region
    $region10: #{tpu_custom_call.1} parent=1 // pred_check
      _
    $region11: #{tpu_custom_call.1} parent=1 // pred_check_branch
      %38 = sbr.rel (0) target = $region13
    $region12: #{tpu_custom_call.1} parent=1 // pred_region
      %s40 = ssub.s32 768, 768
      %41 = vsyncadd [#allocation8], %s40
      %s42 = sshll.u32 [#allocation7], 4
      %s43 = int_to_ptr.vmem [resolvable:$true] %s42
      %48 = dma.hbm_to_vmem [thread:$0]  %s2, 768, %s43, [#allocation8], 384, 384, 24
    $region13: #{tpu_custom_call.1} parent=1 // pred_fallthru
      _
    // Predicated region
    $region14: #{tpu_custom_call.1} parent=1 // pred_check
      _
    $region15: #{tpu_custom_call.1} parent=1 // pred_check_branch
      %50 = sbr.rel (0) target = $region17
    $region16: #{tpu_custom_call.1} parent=1 // pred_region
      %s52 = ssub.s32 6144, 6144
      %53 = vsyncadd [#allocation8], %s52
      %s54 = sshll.u32 [#allocation9], 4
      %s55 = int_to_ptr.vmem [resolvable:$true] %s54
      %60 = dma.hbm_to_vmem [thread:$0]  %s3, 6144, %s55, [#allocation8], 384, 384, 24
    $region17: #{tpu_custom_call.1} parent=1 // pred_fallthru
      _
    // Predicated region
    $region18: #{tpu_custom_call.1} parent=1 // pred_check
      _
    $region19: #{tpu_custom_call.1} parent=1 // pred_check_branch
      %62 = sbr.rel (0) target = $region21
    $region20: #{tpu_custom_call.1} parent=1 // pred_region
      _
    $region21: #{tpu_custom_call.1} parent=1 // pred_fallthru
      _
    // Predicated region
    $region22: #{tpu_custom_call.1} parent=1 // pred_check
      _
    $region23: #{tpu_custom_call.1} parent=1 // pred_check_branch
      %64 = sbr.rel (0) target = $region25
    $region24: #{tpu_custom_call.1} parent=1 // pred_region
      _
    $region25: #{tpu_custom_call.1} parent=1 // pred_fallthru
      _
    // Predicated region
    $region26: #{tpu_custom_call.1} parent=1 // pred_check
      _
    $region27: #{tpu_custom_call.1} parent=1 // pred_check_branch
      %66 = sbr.rel (0) target = $region29
    $region28: #{tpu_custom_call.1} parent=1 // pred_region
      %s68 = ssub.s32 6144, 6144
      %69 = vsyncadd [#allocation11], %s68
      %s70 = sshll.u32 [#allocation10], 4
      %s71 = int_to_ptr.vmem [resolvable:$true] %s70
      %76 = dma.hbm_to_vmem [thread:$0]  %s6, 6144, %s71, [#allocation11], 384, 384, 24
    $region29: #{tpu_custom_call.1} parent=1 // pred_fallthru
      _
    // Predicated region
    $region30: #{tpu_custom_call.1} parent=1 // pred_check
      _
    $region31: #{tpu_custom_call.1} parent=1 // pred_check_branch
      %78 = sbr.rel (0) target = $region33
    $region32: #{tpu_custom_call.1} parent=1 // pred_region
      %s80 = ssub.s32 6144, 6144
      %81 = vsyncadd [#allocation11], %s80
      %s82 = sshll.u32 [#allocation12], 4
      %s83 = int_to_ptr.vmem [resolvable:$true] %s82
      %88 = dma.hbm_to_vmem [thread:$0]  %s7, 6144, %s83, [#allocation11], 384, 384, 24
    $region33: #{tpu_custom_call.1} parent=1 // pred_fallthru
      _
    // Predicated region
    $region34: #{tpu_custom_call.1} parent=1 // pred_check
      _
    $region35: #{tpu_custom_call.1} parent=1 // pred_check_branch
      %90 = sbr.rel (0) target = $region37
    $region36: #{tpu_custom_call.1} parent=1 // pred_region
      _
    $region37: #{tpu_custom_call.1} parent=1 // pred_fallthru
      _
    // Predicated region
    $region38: #{tpu_custom_call.1} parent=1 // pred_check
      _
    $region39: #{tpu_custom_call.1} parent=1 // pred_check_branch
      %92 = sbr.rel (0) target = $region41
    $region40: #{tpu_custom_call.1} parent=1 // pred_region
      _
    $region41: #{tpu_custom_call.1} parent=1 // pred_fallthru
      _
    // Predicated region
    $region42: #{tpu_custom_call.1} parent=1 // pred_check
      _
    $region43: #{tpu_custom_call.1} parent=1 // pred_check_branch
      %94 = sbr.rel (0) target = $region45
    $region44: #{tpu_custom_call.1} parent=1 // pred_region
      %s96 = ssub.s32 2048, 2048
      %97 = vsyncadd [#allocation14], %s96
      %s98 = sshll.u32 [#allocation13], 4
      %s99 = int_to_ptr.vmem [resolvable:$true] %s98
      %104 = dma.hbm_to_vmem [thread:$0]  %s10, 2048, %s99, [#allocation14], 128, 128, 8
    $region45: #{tpu_custom_call.1} parent=1 // pred_fallthru
      _
    // Predicated region
    $region46: #{tpu_custom_call.1} parent=1 // pred_check
      _
    $region47: #{tpu_custom_call.1} parent=1 // pred_check_branch
      %106 = sbr.rel (0) target = $region49
    $region48: #{tpu_custom_call.1} parent=1 // pred_region
      _
    $region49: #{tpu_custom_call.1} parent=1 // pred_fallthru
      _
    // Predicated region
    $region50: #{tpu_custom_call.1} parent=1 // pred_check
      _
    $region51: #{tpu_custom_call.1} parent=1 // pred_check_branch
      %108 = sbr.rel (0) target = $region53
    $region52: #{tpu_custom_call.1} parent=1 // pred_region
      _
    $region53: #{tpu_custom_call.1} parent=1 // pred_fallthru
      _
    // Predicated region
    $region54: #{tpu_custom_call.1} parent=1 // pred_check
      _
    $region55: #{tpu_custom_call.1} parent=1 // pred_check_branch
      %110 = sbr.rel (0) target = $region57
    $region56: #{tpu_custom_call.1} parent=1 // pred_region
      %111 = dma.done [#allocation5], 256
    $region57: #{tpu_custom_call.1} parent=1 // pred_fallthru
      _
    // Predicated region
    $region58: #{tpu_custom_call.1} parent=1 // pred_check
      _
    $region59: #{tpu_custom_call.1} parent=1 // pred_check_branch
      %113 = sbr.rel (0) target = $region61
    $region60: #{tpu_custom_call.1} parent=1 // pred_region
      %114 = dma.done [#allocation8], 768
    $region61: #{tpu_custom_call.1} parent=1 // pred_fallthru
      _
    // Predicated region
    $region62: #{tpu_custom_call.1} parent=1 // pred_check
      _
    $region63: #{tpu_custom_call.1} parent=1 // pred_check_branch
      %116 = sbr.rel (0) target = $region65
    $region64: #{tpu_custom_call.1} parent=1 // pred_region
      %117 = dma.done [#allocation8], 6144
    $region65: #{tpu_custom_call.1} parent=1 // pred_fallthru
      _
    // Predicated region
    $region66: #{tpu_custom_call.1} parent=1 // pred_check
      _
    $region67: #{tpu_custom_call.1} parent=1 // pred_check_branch
      %119 = sbr.rel (0) target = $region69
    $region68: #{tpu_custom_call.1} parent=1 // pred_region
      %120 = dma.done [#allocation11], 6144
    $region69: #{tpu_custom_call.1} parent=1 // pred_fallthru
      _
    // Predicated region
    $region70: #{tpu_custom_call.1} parent=1 // pred_check
      _
    $region71: #{tpu_custom_call.1} parent=1 // pred_check_branch
      %122 = sbr.rel (0) target = $region73
    $region72: #{tpu_custom_call.1} parent=1 // pred_region
      %123 = dma.done [#allocation11], 6144
    $region73: #{tpu_custom_call.1} parent=1 // pred_fallthru
      _
    // Predicated region
    $region74: #{tpu_custom_call.1} parent=1 // pred_check
      _
    $region75: #{tpu_custom_call.1} parent=1 // pred_check_branch
      %125 = sbr.rel (0) target = $region77
    $region76: #{tpu_custom_call.1} parent=1 // pred_region
      %126 = dma.done [#allocation14], 2048
    $region77: #{tpu_custom_call.1} parent=1 // pred_fallthru
      _
    %v127 = vld [vmem:[#allocation4] sm:$0x3]
    %v128 = vld [vmem:[#allocation4 + $0x2] sm:$0x3]
    %v129 = vld [vmem:[#allocation4 + $0x4] sm:$0x3]
    %v130 = vld [vmem:[#allocation4 + $0x6] sm:$0x3]
    %v131 = vld [vmem:[#allocation4 + $0x8] sm:$0x3]
    %v132 = vld [vmem:[#allocation4 + $0xa] sm:$0x3]
    %v133 = vld [vmem:[#allocation4 + $0xc] sm:$0x3]
    %v134 = vld [vmem:[#allocation4 + $0xe] sm:$0x3]
    %v135 = vld [vmem:[#allocation7] sm:$0xff]
    %v136 = vld [vmem:[#allocation7 + $0x8] sm:$0xff]
    %v137 = vld [vmem:[#allocation7 + $0x10] sm:$0xff]
    %v138 = vld [vmem:[#allocation7 + $0x18] sm:$0xff]
    %v139 = vld [vmem:[#allocation7 + $0x20] sm:$0xff]
    %v140 = vld [vmem:[#allocation7 + $0x28] sm:$0xff]
    %v141 = vld [vmem:[%s4] sm:$0x7]
    %v142 = vld [vmem:[#allocation9] sm:$0xff]
    %v143 = vld [vmem:[#allocation9 + $0x8] sm:$0xff]
    %v144 = vld [vmem:[#allocation9 + $0x10] sm:$0xff]
    %v145 = vld [vmem:[#allocation9 + $0x18] sm:$0xff]
    %v146 = vld [vmem:[#allocation9 + $0x20] sm:$0xff]
    %v147 = vld [vmem:[#allocation9 + $0x28] sm:$0xff]
    %v148 = vld [vmem:[#allocation9 + $0x30] sm:$0xff]
    %v149 = vld [vmem:[#allocation9 + $0x38] sm:$0xff]
    %v150 = vld [vmem:[#allocation9 + $0x40] sm:$0xff]
    %v151 = vld [vmem:[#allocation9 + $0x48] sm:$0xff]
    %v152 = vld [vmem:[#allocation9 + $0x50] sm:$0xff]
    %v153 = vld [vmem:[#allocation9 + $0x58] sm:$0xff]
    %v154 = vld [vmem:[#allocation9 + $0x60] sm:$0xff]
    %v155 = vld [vmem:[#allocation9 + $0x68] sm:$0xff]
    %v156 = vld [vmem:[#allocation9 + $0x70] sm:$0xff]
    %v157 = vld [vmem:[#allocation9 + $0x78] sm:$0xff]
    %v158 = vld [vmem:[#allocation9 + $0x80] sm:$0xff]
    %v159 = vld [vmem:[#allocation9 + $0x88] sm:$0xff]
    %v160 = vld [vmem:[#allocation9 + $0x90] sm:$0xff]
    %v161 = vld [vmem:[#allocation9 + $0x98] sm:$0xff]
    %v162 = vld [vmem:[#allocation9 + $0xa0] sm:$0xff]
    %v163 = vld [vmem:[#allocation9 + $0xa8] sm:$0xff]
    %v164 = vld [vmem:[#allocation9 + $0xb0] sm:$0xff]
    %v165 = vld [vmem:[#allocation9 + $0xb8] sm:$0xff]
    %v166 = vld [vmem:[#allocation9 + $0xc0] sm:$0xff]
    %v167 = vld [vmem:[#allocation9 + $0xc8] sm:$0xff]
    %v168 = vld [vmem:[#allocation9 + $0xd0] sm:$0xff]
    %v169 = vld [vmem:[#allocation9 + $0xd8] sm:$0xff]
    %v170 = vld [vmem:[#allocation9 + $0xe0] sm:$0xff]
    %v171 = vld [vmem:[#allocation9 + $0xe8] sm:$0xff]
    %v172 = vld [vmem:[#allocation9 + $0xf0] sm:$0xff]
    %v173 = vld [vmem:[#allocation9 + $0xf8] sm:$0xff]
    %v174 = vld [vmem:[#allocation9 + $0x100] sm:$0xff]
    %v175 = vld [vmem:[#allocation9 + $0x108] sm:$0xff]
    %v176 = vld [vmem:[#allocation9 + $0x110] sm:$0xff]
    %v177 = vld [vmem:[#allocation9 + $0x118] sm:$0xff]
    %v178 = vld [vmem:[#allocation9 + $0x120] sm:$0xff]
    %v179 = vld [vmem:[#allocation9 + $0x128] sm:$0xff]
    %v180 = vld [vmem:[#allocation9 + $0x130] sm:$0xff]
    %v181 = vld [vmem:[#allocation9 + $0x138] sm:$0xff]
    %v182 = vld [vmem:[#allocation9 + $0x140] sm:$0xff]
    %v183 = vld [vmem:[#allocation9 + $0x148] sm:$0xff]
    %v184 = vld [vmem:[#allocation9 + $0x150] sm:$0xff]
    %v185 = vld [vmem:[#allocation9 + $0x158] sm:$0xff]
    %v186 = vld [vmem:[#allocation9 + $0x160] sm:$0xff]
    %v187 = vld [vmem:[#allocation9 + $0x168] sm:$0xff]
    %v188 = vld [vmem:[#allocation9 + $0x170] sm:$0xff]
    %v189 = vld [vmem:[#allocation9 + $0x178] sm:$0xff]
    %v190 = vld [vmem:[%s5] sm:$0x1]
    %v192 = vlaneseq
    %v193 = vshrl.u32 %v192, 7
    %v194 = vsub.s32 0, %v193
    %v195 = vrot.slane %v141, %v194
    %v196 = vlaneseq
    %v197 = vshrl.u32 %v196, 7
    %v198 = vsub.s32 1, %v197
    %v199 = vrot.slane %v141, %v198
    %v200 = vlaneseq
    %v201 = vshrl.u32 %v200, 7
    %v202 = vsub.s32 2, %v201
    %v203 = vrot.slane %v141, %v202
    %v215 = vcombine.low %v127, %v128
    %v216 = vcombine.low %v129, %v130
    %v218 = vunpack.c.l.s4 1983009808
    %v219 = vunpack.c.0.s8 %v218
    %v220 = vlaneseq
    %v221 = vshrl.u32 %v220, 7
    %v222 = vsub.s32 %v219, %v221
    %v223 = vrot.slane %v215, %v222
    %v225 = vunpack.c.l.s4 1983009808
    %v226 = vunpack.c.0.s8 %v225
    %v227 = vlaneseq
    %v228 = vshrl.u32 %v227, 7
    %v229 = vsub.s32 %v226, %v228
    %v230 = vrot.slane %v216, %v229
    %v231 = vcombine.low %v223, %v230
    %v232 = vcombine.low %v131, %v132
    %v233 = vcombine.low %v133, %v134
    %v235 = vunpack.c.l.s4 1983009808
    %v236 = vunpack.c.0.s8 %v235
    %v237 = vlaneseq
    %v238 = vshrl.u32 %v237, 7
    %v239 = vsub.s32 %v236, %v238
    %v240 = vrot.slane %v232, %v239
    %v242 = vunpack.c.l.s4 1983009808
    %v243 = vunpack.c.0.s8 %v242
    %v244 = vlaneseq
    %v245 = vshrl.u32 %v244, 7
    %v246 = vsub.s32 %v243, %v245
    %v247 = vrot.slane %v233, %v246
    %v248 = vcombine.low %v240, %v247
    %vm249 = vcmask 130048
    %v250 = vsel %vm249, %v231, 0
    %v252 = vsel %vm249, %v248, 0
    %254 = vmatprep.subr.mxu0 %v136
    %255 = vmatpush1.msra.mxu0 %v135
    %256 = vmatprep.subr.mxu0 %v139
    %257 = vmatpush1.msra.mxu0 %v138
    %258 = vmatprep.subr.mxu0 0.0
    %259 = vmatpush1.msra.mxu0 0.0
    %260 = vmatprep.subr.mxu0 0.0
    %261 = vmatpush1.msra.mxu0 0.0
    %262 = vmatprep.subr.mxu0 0.0
    %263 = vmatpush1.msra.mxu0 0.0
    %264 = vmatprep.subr.mxu0 0.0
    %265 = vmatpush1.msra.mxu0 0.0
    %266 = vmatprep.subr.mxu0 0.0
    %267 = vmatpush1.msra.mxu0 0.0
    %268 = vmatprep.subr.mxu0 0.0
    %269 = vmatpush1.msra.mxu0 0.0
    %270 = vmatprep.subr.mxu0 0.0
    %271 = vmatpush1.msra.mxu0 0.0
    %272 = vmatprep.subr.mxu0 0.0
    %273 = vmatpush1.msra.mxu0 0.0
    %274 = vmatprep.subr.mxu0 0.0
    %275 = vmatpush1.msra.mxu0 0.0
    %276 = vmatprep.subr.mxu0 0.0
    %277 = vmatpush1.msra.mxu0 0.0
    %278 = vmatprep.subr.mxu0 0.0
    %279 = vmatpush1.msra.mxu0 0.0
    %280 = vmatprep.subr.mxu0 0.0
    %281 = vmatpush1.msra.mxu0 0.0
    %282 = vmatprep.subr.mxu0 0.0
    %283 = vmatpush1.msra.mxu0 0.0
    %284 = vmatprep.subr.mxu0 0.0
    %285 = vmatpush1.msra.mxu0 0.0
    %286 = vmatprep.subr.mxu0 0.0
    %287 = vmatpush1.msra.mxu0 0.0
    %288 = vmatprep.subr.mxu0 0.0
    %289 = vmatpush1.msra.mxu0 0.0
    %290 = vmatprep.subr.mxu0 0.0
    %291 = vmatpush1.msra.mxu0 0.0
    %292 = vmatprep.subr.mxu0 0.0
    %293 = vmatpush1.msra.mxu0 0.0
    %294 = vmatprep.subr.mxu0 0.0
    %295 = vmatpush1.msra.mxu0 0.0
    %296 = vmatprep.subr.mxu0 0.0
    %297 = vmatpush1.msra.mxu0 0.0
    %298 = vmatprep.subr.mxu0 0.0
    %299 = vmatpush1.msra.mxu0 0.0
    %300 = vmatprep.subr.mxu0 0.0
    %301 = vmatpush1.msra.mxu0 0.0
    %302 = vmatprep.subr.mxu0 0.0
    %303 = vmatpush1.msra.mxu0 0.0
    %304 = vmatprep.subr.mxu0 0.0
    %305 = vmatpush1.msra.mxu0 0.0
    %306 = vmatprep.subr.mxu0 0.0
    %307 = vmatpush1.msra.mxu0 0.0
    %308 = vmatprep.subr.mxu0 0.0
    %309 = vmatpush1.msra.mxu0 0.0
    %310 = vmatprep.subr.mxu0 0.0
    %311 = vmatpush1.msra.mxu0 0.0
    %312 = vmatprep.subr.mxu0 0.0
    %313 = vmatpush1.msra.mxu0 0.0
    %314 = vmatprep.subr.mxu0 0.0
    %315 = vmatpush1.msra.mxu0 0.0
    %316 = vmatprep.subr.mxu0 0.0
    %317 = vmatpush1.msra.mxu0 0.0
    %318 = vmatprep.mubr.f32.mxu0 0.0
    %319 = vmatmul.mubr.f32.gmra.mrb[0].mxu0 %v250
    %v320 = vpop.f32.mrb[0].mxu0
    %v321 = vadd.f32 %v195, %v320
    %v322 = vpop.f32.mrb[0].mxu0
    %v323 = vadd.f32 %v199, %v322
    %324 = vmatprep.mubr.f32.mxu0 0.0
    %325 = vmatmul.mubr.f32.gmra.mrb[0].mxu0 %v252
    %v326 = vpop.f32.mrb[0].mxu0
    %v327 = vadd.f32 %v195, %v326
    %v328 = vpop.f32.mrb[0].mxu0
    %v329 = vadd.f32 %v199, %v328
    %330 = vdwg.mxu0
    %331 = vmatprep.subr.mxu0 0.0
    %332 = vmatpush1.msra.mxu0 %v137
    %333 = vmatprep.subr.mxu0 0.0
    %334 = vmatpush1.msra.mxu0 %v140
    %335 = vmatprep.subr.mxu0 0.0
    %336 = vmatpush1.msra.mxu0 0.0
    %337 = vmatprep.subr.mxu0 0.0
    %338 = vmatpush1.msra.mxu0 0.0
    %339 = vmatprep.subr.mxu0 0.0
    %340 = vmatpush1.msra.mxu0 0.0
    %341 = vmatprep.subr.mxu0 0.0
    %342 = vmatpush1.msra.mxu0 0.0
    %343 = vmatprep.subr.mxu0 0.0
    %344 = vmatpush1.msra.mxu0 0.0
    %345 = vmatprep.subr.mxu0 0.0
    %346 = vmatpush1.msra.mxu0 0.0
    %347 = vmatprep.subr.mxu0 0.0
    %348 = vmatpush1.msra.mxu0 0.0
    %349 = vmatprep.subr.mxu0 0.0
    %350 = vmatpush1.msra.mxu0 0.0
    %351 = vmatprep.subr.mxu0 0.0
    %352 = vmatpush1.msra.mxu0 0.0
    %353 = vmatprep.subr.mxu0 0.0
    %354 = vmatpush1.msra.mxu0 0.0
    %355 = vmatprep.subr.mxu0 0.0
    %356 = vmatpush1.msra.mxu0 0.0
    %357 = vmatprep.subr.mxu0 0.0
    %358 = vmatpush1.msra.mxu0 0.0
    %359 = vmatprep.subr.mxu0 0.0
    %360 = vmatpush1.msra.mxu0 0.0
    %361 = vmatprep.subr.mxu0 0.0
    %362 = vmatpush1.msra.mxu0 0.0
    %363 = vmatprep.subr.mxu0 0.0
    %364 = vmatpush1.msra.mxu0 0.0
    %365 = vmatprep.subr.mxu0 0.0
    %366 = vmatpush1.msra.mxu0 0.0
    %367 = vmatprep.subr.mxu0 0.0
    %368 = vmatpush1.msra.mxu0 0.0
    %369 = vmatprep.subr.mxu0 0.0
    %370 = vmatpush1.msra.mxu0 0.0
    %371 = vmatprep.subr.mxu0 0.0
    %372 = vmatpush1.msra.mxu0 0.0
    %373 = vmatprep.subr.mxu0 0.0
    %374 = vmatpush1.msra.mxu0 0.0
    %375 = vmatprep.subr.mxu0 0.0
    %376 = vmatpush1.msra.mxu0 0.0
    %377 = vmatprep.subr.mxu0 0.0
    %378 = vmatpush1.msra.mxu0 0.0
    %379 = vmatprep.subr.mxu0 0.0
    %380 = vmatpush1.msra.mxu0 0.0
    %381 = vmatprep.subr.mxu0 0.0
    %382 = vmatpush1.msra.mxu0 0.0
    %383 = vmatprep.subr.mxu0 0.0
    %384 = vmatpush1.msra.mxu0 0.0
    %385 = vmatprep.subr.mxu0 0.0
    %386 = vmatpush1.msra.mxu0 0.0
    %387 = vmatprep.subr.mxu0 0.0
    %388 = vmatpush1.msra.mxu0 0.0
    %389 = vmatprep.subr.mxu0 0.0
    %390 = vmatpush1.msra.mxu0 0.0
    %391 = vmatprep.subr.mxu0 0.0
    %392 = vmatpush1.msra.mxu0 0.0
    %393 = vmatprep.subr.mxu0 0.0
    %394 = vmatpush1.msra.mxu0 0.0
    %395 = vmatprep.mubr.f32.mxu0 0.0
    %396 = vmatmul.mubr.f32.gmra.mrb[0].mxu0 %v250
    %v397 = vpop.f32.mrb[0].mxu0
    %v398 = vadd.f32 %v203, %v397
    %v399 = vpop.f32.mrb[0].mxu0
    %400 = vmatprep.mubr.f32.mxu0 0.0
    %401 = vmatmul.mubr.f32.gmra.mrb[0].mxu0 %v252
    %v402 = vpop.f32.mrb[0].mxu0
    %v403 = vadd.f32 %v203, %v402
    %v404 = vpop.f32.mrb[0].mxu0
    %405 = vdwg.mxu0
    %v412 = vcombine.low %v321, %v323
    %v413 = vcombine.high %v321, %v323
    %v414 = vcombine.high %v398, %v398
    %v416 = vunpack.c.l.s4 1983009808
    %v417 = vunpack.c.0.s8 %v416
    %v418 = vlaneseq
    %v419 = vshrl.u32 %v418, 7
    %v420 = vsub.s32 %v417, %v419
    %v421 = vrot.slane %v412, %v420
    %v423 = vunpack.c.l.s4 1983009808
    %v424 = vunpack.c.0.s8 %v423
    %v425 = vlaneseq
    %v426 = vshrl.u32 %v425, 7
    %v427 = vsub.s32 %v424, %v426
    %v428 = vrot.slane %v413, %v427
    %v430 = vunpack.c.l.s4 1983009808
    %v431 = vunpack.c.0.s8 %v430
    %v432 = vlaneseq
    %v433 = vshrl.u32 %v432, 7
    %v434 = vsub.s32 %v431, %v433
    %v435 = vrot.slane %v398, %v434
    %v437 = vunpack.c.l.s4 1983009808
    %v438 = vunpack.c.0.s8 %v437
    %v439 = vlaneseq
    %v440 = vshrl.u32 %v439, 7
    %v441 = vsub.s32 %v438, %v440
    %v442 = vrot.slane %v414, %v441
    %v443 = vcombine.low %v421, %v435
    %v444 = vcombine.high %v421, %v435
    %v445 = vcombine.low %v428, %v442
    %v446 = vcombine.high %v428, %v442
    %v447 = vcombine.low %v327, %v329
    %v448 = vcombine.high %v327, %v329
    %v449 = vcombine.high %v403, %v403
    %v451 = vunpack.c.l.s4 1983009808
    %v452 = vunpack.c.0.s8 %v451
    %v453 = vlaneseq
    %v454 = vshrl.u32 %v453, 7
    %v455 = vsub.s32 %v452, %v454
    %v456 = vrot.slane %v447, %v455
    %v458 = vunpack.c.l.s4 1983009808
    %v459 = vunpack.c.0.s8 %v458
    %v460 = vlaneseq
    %v461 = vshrl.u32 %v460, 7
    %v462 = vsub.s32 %v459, %v461
    %v463 = vrot.slane %v448, %v462
    %v465 = vunpack.c.l.s4 1983009808
    %v466 = vunpack.c.0.s8 %v465
    %v467 = vlaneseq
    %v468 = vshrl.u32 %v467, 7
    %v469 = vsub.s32 %v466, %v468
    %v470 = vrot.slane %v403, %v469
    %v472 = vunpack.c.l.s4 1983009808
    %v473 = vunpack.c.0.s8 %v472
    %v474 = vlaneseq
    %v475 = vshrl.u32 %v474, 7
    %v476 = vsub.s32 %v473, %v475
    %v477 = vrot.slane %v449, %v476
    %v478 = vcombine.low %v456, %v470
    %v479 = vcombine.high %v456, %v470
    %v480 = vcombine.low %v463, %v477
    %v481 = vcombine.high %v463, %v477
    %490 = vst [vmem:[#allocation2] sm:$0x3f] %v443
    %491 = vst [vmem:[#allocation2 + $0x6] sm:$0x3f] %v444
    %492 = vst [vmem:[#allocation2 + $0xc] sm:$0x3f] %v445
    %493 = vst [vmem:[#allocation2 + $0x12] sm:$0x3f] %v446
    %494 = vst [vmem:[#allocation2 + $0x18] sm:$0x3f] %v478
    %495 = vst [vmem:[#allocation2 + $0x1e] sm:$0x3f] %v479
    %496 = vst [vmem:[#allocation2 + $0x24] sm:$0x3f] %v480
    %497 = vst [vmem:[#allocation2 + $0x2a] sm:$0x3f] %v481
    %v498 = vld [vmem:[#allocation2] sm:$0x3f]
    %499 = vmatprep.subr.mxu0 %v143
    %500 = vmatpush1.msra.mxu0 %v142
    %501 = vmatprep.subr.mxu0 %v146
    %502 = vmatpush1.msra.mxu0 %v145
    %503 = vmatprep.subr.mxu0 %v149
    %504 = vmatpush1.msra.mxu0 %v148
    %505 = vmatprep.subr.mxu0 %v152
    %506 = vmatpush1.msra.mxu0 %v151
    %507 = vmatprep.subr.mxu0 %v155
    %508 = vmatpush1.msra.mxu0 %v154
    %509 = vmatprep.subr.mxu0 %v158
    %510 = vmatpush1.msra.mxu0 %v157
    %511 = vmatprep.subr.mxu0 %v161
    %512 = vmatpush1.msra.mxu0 %v160
    %513 = vmatprep.subr.mxu0 %v164
    %514 = vmatpush1.msra.mxu0 %v163
    %515 = vmatprep.subr.mxu0 %v167
    %516 = vmatpush1.msra.mxu0 %v166
    %517 = vmatprep.subr.mxu0 %v170
    %518 = vmatpush1.msra.mxu0 %v169
    %519 = vmatprep.subr.mxu0 %v173
    %520 = vmatpush1.msra.mxu0 %v172
    %521 = vmatprep.subr.mxu0 %v176
    %522 = vmatpush1.msra.mxu0 %v175
    %523 = vmatprep.subr.mxu0 %v179
    %524 = vmatpush1.msra.mxu0 %v178
    %525 = vmatprep.subr.mxu0 %v182
    %526 = vmatpush1.msra.mxu0 %v181
    %527 = vmatprep.subr.mxu0 %v185
    %528 = vmatpush1.msra.mxu0 %v184
    %529 = vmatprep.subr.mxu0 %v188
    %530 = vmatpush1.msra.mxu0 %v187
    %531 = vmatprep.subr.mxu0 0.0
    %532 = vmatpush1.msra.mxu0 0.0
    %533 = vmatprep.subr.mxu0 0.0
    %534 = vmatpush1.msra.mxu0 0.0
    %535 = vmatprep.subr.mxu0 0.0
    %536 = vmatpush1.msra.mxu0 0.0
    %537 = vmatprep.subr.mxu0 0.0
    %538 = vmatpush1.msra.mxu0 0.0
    %539 = vmatprep.subr.mxu0 0.0
    %540 = vmatpush1.msra.mxu0 0.0
    %541 = vmatprep.subr.mxu0 0.0
    %542 = vmatpush1.msra.mxu0 0.0
    %543 = vmatprep.subr.mxu0 0.0
    %544 = vmatpush1.msra.mxu0 0.0
    %545 = vmatprep.subr.mxu0 0.0
    %546 = vmatpush1.msra.mxu0 0.0
    %547 = vmatprep.subr.mxu0 0.0
    %548 = vmatpush1.msra.mxu0 0.0
    %549 = vmatprep.subr.mxu0 0.0
    %550 = vmatpush1.msra.mxu0 0.0
    %551 = vmatprep.subr.mxu0 0.0
    %552 = vmatpush1.msra.mxu0 0.0
    %553 = vmatprep.subr.mxu0 0.0
    %554 = vmatpush1.msra.mxu0 0.0
    %555 = vmatprep.subr.mxu0 0.0
    %556 = vmatpush1.msra.mxu0 0.0
    %557 = vmatprep.subr.mxu0 0.0
    %558 = vmatpush1.msra.mxu0 0.0
    %559 = vmatprep.subr.mxu0 0.0
    %560 = vmatpush1.msra.mxu0 0.0
    %561 = vmatprep.subr.mxu0 0.0
    %562 = vmatpush1.msra.mxu0 0.0
    %563 = vmatprep.mubr.f32.mxu0 0.0
    %564 = vmatmul.mubr.f32.gmra.mrb[0].mxu0 0.0
    %v565 = vpop.f32.mrb[0].mxu0
    %v566 = vadd.f32 0.0, %v565
    %v567 = vpop.f32.mrb[0].mxu0
    %v568 = vadd.f32 0.0, %v567
    %569 = vdwg.mxu0
    %570 = vmatprep.subr.mxu0 0.0
    %571 = vmatpush1.msra.mxu0 %v144
    %572 = vmatprep.subr.mxu0 0.0
    %573 = vmatpush1.msra.mxu0 %v147
    %574 = vmatprep.subr.mxu0 0.0
    %575 = vmatpush1.msra.mxu0 %v150
    %576 = vmatprep.subr.mxu0 0.0
    %577 = vmatpush1.msra.mxu0 %v153
    %578 = vmatprep.subr.mxu0 0.0
    %579 = vmatpush1.msra.mxu0 %v156
    %580 = vmatprep.subr.mxu0 0.0
    %581 = vmatpush1.msra.mxu0 %v159
    %582 = vmatprep.subr.mxu0 0.0
    %583 = vmatpush1.msra.mxu0 %v162
    %584 = vmatprep.subr.mxu0 0.0
    %585 = vmatpush1.msra.mxu0 %v165
    %586 = vmatprep.subr.mxu0 0.0
    %587 = vmatpush1.msra.mxu0 %v168
    %588 = vmatprep.subr.mxu0 0.0
    %589 = vmatpush1.msra.mxu0 %v171
    %590 = vmatprep.subr.mxu0 0.0
    %591 = vmatpush1.msra.mxu0 %v174
    %592 = vmatprep.subr.mxu0 0.0
    %593 = vmatpush1.msra.mxu0 %v177
    %594 = vmatprep.subr.mxu0 0.0
    %595 = vmatpush1.msra.mxu0 %v180
    %596 = vmatprep.subr.mxu0 0.0
    %597 = vmatpush1.msra.mxu0 %v183
    %598 = vmatprep.subr.mxu0 0.0
    %599 = vmatpush1.msra.mxu0 %v186
    %600 = vmatprep.subr.mxu0 0.0
    %601 = vmatpush1.msra.mxu0 %v189
    %602 = vmatprep.subr.mxu0 0.0
    %603 = vmatpush1.msra.mxu0 0.0
    %604 = vmatprep.subr.mxu0 0.0
    %605 = vmatpush1.msra.mxu0 0.0
    %606 = vmatprep.subr.mxu0 0.0
    %607 = vmatpush1.msra.mxu0 0.0
    %608 = vmatprep.subr.mxu0 0.0
    %609 = vmatpush1.msra.mxu0 0.0
    %610 = vmatprep.subr.mxu0 0.0
    %611 = vmatpush1.msra.mxu0 0.0
    %612 = vmatprep.subr.mxu0 0.0
    %613 = vmatpush1.msra.mxu0 0.0
    %614 = vmatprep.subr.mxu0 0.0
    %615 = vmatpush1.msra.mxu0 0.0
    %616 = vmatprep.subr.mxu0 0.0
    %617 = vmatpush1.msra.mxu0 0.0
    %618 = vmatprep.subr.mxu0 0.0
    %619 = vmatpush1.msra.mxu0 0.0
    %620 = vmatprep.subr.mxu0 0.0
    %621 = vmatpush1.msra.mxu0 0.0
    %622 = vmatprep.subr.mxu0 0.0
    %623 = vmatpush1.msra.mxu0 0.0
    %624 = vmatprep.subr.mxu0 0.0
    %625 = vmatpush1.msra.mxu0 0.0
    %626 = vmatprep.subr.mxu0 0.0
    %627 = vmatpush1.msra.mxu0 0.0
    %628 = vmatprep.subr.mxu0 0.0
    %629 = vmatpush1.msra.mxu0 0.0
    %630 = vmatprep.subr.mxu0 0.0
    %631 = vmatpush1.msra.mxu0 0.0
    %632 = vmatprep.subr.mxu0 0.0
    %633 = vmatpush1.msra.mxu0 0.0
    %634 = vmatprep.mubr.f32.mxu0 0.0
    %635 = vmatmul.mubr.f32.gmra.mrb[0].mxu0 0.0
    %v636 = vpop.f32.mrb[0].mxu0
    %v637 = vadd.f32 0.0, %v636
    %v638 = vpop.f32.mrb[0].mxu0
    %639 = vdwg.mxu0
    %v640 = vadd.f32 %v498, %v566
    %v641 = vxor.u32 %v640, 2147483648
    %v642 = vmul.f32 %v641, 1.442695
    %v643 = vpow.pop %v642
    %v644 = vadd.f32 %v643, 1.0
    %v645 = vrcp.pop %v644
    %v646 = vmul.f32 1.0, %v645
    %v648 = vrot.slane %v498, 2
    %v650 = vadd.f32 %v648, %v568
    %v651 = vxor.u32 %v650, 2147483648
    %v652 = vmul.f32 %v651, 1.442695
    %v653 = vpow.pop %v652
    %v654 = vadd.f32 %v653, 1.0
    %v655 = vrcp.pop %v654
    %v656 = vmul.f32 1.0, %v655
    %v658 = vlaneseq
    %v659 = vshrl.u32 %v658, 7
    %v660 = vsub.s32 0, %v659
    %v661 = vrot.slane %v190, %v660
    %v663 = vadd.f32 %v637, %v661
    %v664 = vmul.f32 %v646, %v663
    %v665 = vrot.slane %v498, 4
    %v667 = vadd.f32 %v665, %v664
    %v668 = vtanh.pop %v667
    %v669 = vsub.f32 1.0, %v656
    %v670 = vmul.f32 %v669, %v668
    %v671 = vmul.f32 %v656, 0.0
    %v672 = vadd.f32 %v670, %v671
    %673 = vst [vmem:[#allocation3] sm:$0x3] %v672
    %s674 = scalar_lea.vmem [#allocation2], 6
    %v675 = vld [vmem:[%s674] sm:$0x3f]
    %676 = vmatprep.subr.mxu0 %v143
    %677 = vmatpush1.msra.mxu0 %v142
    %678 = vmatprep.subr.mxu0 %v146
    %679 = vmatpush1.msra.mxu0 %v145
    %680 = vmatprep.subr.mxu0 %v149
    %681 = vmatpush1.msra.mxu0 %v148
    %682 = vmatprep.subr.mxu0 %v152
    %683 = vmatpush1.msra.mxu0 %v151
    %684 = vmatprep.subr.mxu0 %v155
    %685 = vmatpush1.msra.mxu0 %v154
    %686 = vmatprep.subr.mxu0 %v158
    %687 = vmatpush1.msra.mxu0 %v157
    %688 = vmatprep.subr.mxu0 %v161
    %689 = vmatpush1.msra.mxu0 %v160
    %690 = vmatprep.subr.mxu0 %v164
    %691 = vmatpush1.msra.mxu0 %v163
    %692 = vmatprep.subr.mxu0 %v167
    %693 = vmatpush1.msra.mxu0 %v166
    %694 = vmatprep.subr.mxu0 %v170
    %695 = vmatpush1.msra.mxu0 %v169
    %696 = vmatprep.subr.mxu0 %v173
    %697 = vmatpush1.msra.mxu0 %v172
    %698 = vmatprep.subr.mxu0 %v176
    %699 = vmatpush1.msra.mxu0 %v175
    %700 = vmatprep.subr.mxu0 %v179
    %701 = vmatpush1.msra.mxu0 %v178
    %702 = vmatprep.subr.mxu0 %v182
    %703 = vmatpush1.msra.mxu0 %v181
    %704 = vmatprep.subr.mxu0 %v185
    %705 = vmatpush1.msra.mxu0 %v184
    %706 = vmatprep.subr.mxu0 %v188
    %707 = vmatpush1.msra.mxu0 %v187
    %708 = vmatprep.subr.mxu0 0.0
    %709 = vmatpush1.msra.mxu0 0.0
    %710 = vmatprep.subr.mxu0 0.0
    %711 = vmatpush1.msra.mxu0 0.0
    %712 = vmatprep.subr.mxu0 0.0
    %713 = vmatpush1.msra.mxu0 0.0
    %714 = vmatprep.subr.mxu0 0.0
    %715 = vmatpush1.msra.mxu0 0.0
    %716 = vmatprep.subr.mxu0 0.0
    %717 = vmatpush1.msra.mxu0 0.0
    %718 = vmatprep.subr.mxu0 0.0
    %719 = vmatpush1.msra.mxu0 0.0
    %720 = vmatprep.subr.mxu0 0.0
    %721 = vmatpush1.msra.mxu0 0.0
    %722 = vmatprep.subr.mxu0 0.0
    %723 = vmatpush1.msra.mxu0 0.0
    %724 = vmatprep.subr.mxu0 0.0
    %725 = vmatpush1.msra.mxu0 0.0
    %726 = vmatprep.subr.mxu0 0.0
    %727 = vmatpush1.msra.mxu0 0.0
    %728 = vmatprep.subr.mxu0 0.0
    %729 = vmatpush1.msra.mxu0 0.0
    %730 = vmatprep.subr.mxu0 0.0
    %731 = vmatpush1.msra.mxu0 0.0
    %732 = vmatprep.subr.mxu0 0.0
    %733 = vmatpush1.msra.mxu0 0.0
    %734 = vmatprep.subr.mxu0 0.0
    %735 = vmatpush1.msra.mxu0 0.0
    %736 = vmatprep.subr.mxu0 0.0
    %737 = vmatpush1.msra.mxu0 0.0
    %738 = vmatprep.subr.mxu0 0.0
    %739 = vmatpush1.msra.mxu0 0.0
    %740 = vmatprep.mubr.f32.mxu0 0.0
    %741 = vmatmul.mubr.f32.gmra.mrb[0].mxu0 %v672
    %v742 = vpop.f32.mrb[0].mxu0
    %v743 = vadd.f32 0.0, %v742
    %v744 = vpop.f32.mrb[0].mxu0
    %v745 = vadd.f32 0.0, %v744
    %746 = vdwg.mxu0
    %747 = vmatprep.subr.mxu0 0.0
    %748 = vmatpush1.msra.mxu0 %v144
    %749 = vmatprep.subr.mxu0 0.0
    %750 = vmatpush1.msra.mxu0 %v147
    %751 = vmatprep.subr.mxu0 0.0
    %752 = vmatpush1.msra.mxu0 %v150
    %753 = vmatprep.subr.mxu0 0.0
    %754 = vmatpush1.msra.mxu0 %v153
    %755 = vmatprep.subr.mxu0 0.0
    %756 = vmatpush1.msra.mxu0 %v156
    %757 = vmatprep.subr.mxu0 0.0
    %758 = vmatpush1.msra.mxu0 %v159
    %759 = vmatprep.subr.mxu0 0.0
    %760 = vmatpush1.msra.mxu0 %v162
    %761 = vmatprep.subr.mxu0 0.0
    %762 = vmatpush1.msra.mxu0 %v165
    %763 = vmatprep.subr.mxu0 0.0
    %764 = vmatpush1.msra.mxu0 %v168
    %765 = vmatprep.subr.mxu0 0.0
    %766 = vmatpush1.msra.mxu0 %v171
    %767 = vmatprep.subr.mxu0 0.0
    %768 = vmatpush1.msra.mxu0 %v174
    %769 = vmatprep.subr.mxu0 0.0
    %770 = vmatpush1.msra.mxu0 %v177
    %771 = vmatprep.subr.mxu0 0.0
    %772 = vmatpush1.msra.mxu0 %v180
    %773 = vmatprep.subr.mxu0 0.0
    %774 = vmatpush1.msra.mxu0 %v183
    %775 = vmatprep.subr.mxu0 0.0
    %776 = vmatpush1.msra.mxu0 %v186
    %777 = vmatprep.subr.mxu0 0.0
    %778 = vmatpush1.msra.mxu0 %v189
    %779 = vmatprep.subr.mxu0 0.0
    %780 = vmatpush1.msra.mxu0 0.0
    %781 = vmatprep.subr.mxu0 0.0
    %782 = vmatpush1.msra.mxu0 0.0
    %783 = vmatprep.subr.mxu0 0.0
    %784 = vmatpush1.msra.mxu0 0.0
    %785 = vmatprep.subr.mxu0 0.0
    %786 = vmatpush1.msra.mxu0 0.0
    %787 = vmatprep.subr.mxu0 0.0
    %788 = vmatpush1.msra.mxu0 0.0
    %789 = vmatprep.subr.mxu0 0.0
    %790 = vmatpush1.msra.mxu0 0.0
    %791 = vmatprep.subr.mxu0 0.0
    %792 = vmatpush1.msra.mxu0 0.0
    %793 = vmatprep.subr.mxu0 0.0
    %794 = vmatpush1.msra.mxu0 0.0
    %795 = vmatprep.subr.mxu0 0.0
    %796 = vmatpush1.msra.mxu0 0.0
    %797 = vmatprep.subr.mxu0 0.0
    %798 = vmatpush1.msra.mxu0 0.0
    %799 = vmatprep.subr.mxu0 0.0
    %800 = vmatpush1.msra.mxu0 0.0
    %801 = vmatprep.subr.mxu0 0.0
    %802 = vmatpush1.msra.mxu0 0.0
    %803 = vmatprep.subr.mxu0 0.0
    %804 = vmatpush1.msra.mxu0 0.0
    %805 = vmatprep.subr.mxu0 0.0
    %806 = vmatpush1.msra.mxu0 0.0
    %807 = vmatprep.subr.mxu0 0.0
    %808 = vmatpush1.msra.mxu0 0.0
    %809 = vmatprep.subr.mxu0 0.0
    %810 = vmatpush1.msra.mxu0 0.0
    %811 = vmatprep.mubr.f32.mxu0 0.0
    %812 = vmatmul.mubr.f32.gmra.mrb[0].mxu0 %v672
    %v813 = vpop.f32.mrb[0].mxu0
    %v814 = vadd.f32 0.0, %v813
    %v815 = vpop.f32.mrb[0].mxu0
    %816 = vdwg.mxu0
    %v817 = vadd.f32 %v675, %v743
    %v818 = vxor.u32 %v817, 2147483648
    %v819 = vmul.f32 %v818, 1.442695
    %v820 = vpow.pop %v819
    %v821 = vadd.f32 %v820, 1.0
    %v822 = vrcp.pop %v821
    %v823 = vmul.f32 1.0, %v822
    %v825 = vrot.slane %v675, 2
    %v827 = vadd.f32 %v825, %v745
    %v828 = vxor.u32 %v827, 2147483648
    %v829 = vmul.f32 %v828, 1.442695
    %v830 = vpow.pop %v829
    %v831 = vadd.f32 %v830, 1.0
    %v832 = vrcp.pop %v831
    %v833 = vmul.f32 1.0, %v832
    %v834 = vadd.f32 %v814, %v661
    %v835 = vmul.f32 %v823, %v834
    %v836 = vrot.slane %v675, 4
    %v838 = vadd.f32 %v836, %v835
    %v839 = vtanh.pop %v838
    %v840 = vsub.f32 1.0, %v833
    %v841 = vmul.f32 %v840, %v839
    %v842 = vmul.f32 %v833, %v672
    %v843 = vadd.f32 %v841, %v842
    %s844 = scalar_lea.vmem [#allocation3], 2
    %845 = vst [vmem:[%s844] sm:$0x3] %v843
    %s846 = scalar_lea.vmem [#allocation2], 12
    %v847 = vld [vmem:[%s846] sm:$0x3f]
    %848 = vmatprep.subr.mxu0 %v143
    %849 = vmatpush1.msra.mxu0 %v142
    %850 = vmatprep.subr.mxu0 %v146
    %851 = vmatpush1.msra.mxu0 %v145
    %852 = vmatprep.subr.mxu0 %v149
    %853 = vmatpush1.msra.mxu0 %v148
    %854 = vmatprep.subr.mxu0 %v152
    %855 = vmatpush1.msra.mxu0 %v151
    %856 = vmatprep.subr.mxu0 %v155
    %857 = vmatpush1.msra.mxu0 %v154
    %858 = vmatprep.subr.mxu0 %v158
    %859 = vmatpush1.msra.mxu0 %v157
    %860 = vmatprep.subr.mxu0 %v161
    %861 = vmatpush1.msra.mxu0 %v160
    %862 = vmatprep.subr.mxu0 %v164
    %863 = vmatpush1.msra.mxu0 %v163
    %864 = vmatprep.subr.mxu0 %v167
    %865 = vmatpush1.msra.mxu0 %v166
    %866 = vmatprep.subr.mxu0 %v170
    %867 = vmatpush1.msra.mxu0 %v169
    %868 = vmatprep.subr.mxu0 %v173
    %869 = vmatpush1.msra.mxu0 %v172
    %870 = vmatprep.subr.mxu0 %v176
    %871 = vmatpush1.msra.mxu0 %v175
    %872 = vmatprep.subr.mxu0 %v179
    %873 = vmatpush1.msra.mxu0 %v178
    %874 = vmatprep.subr.mxu0 %v182
    %875 = vmatpush1.msra.mxu0 %v181
    %876 = vmatprep.subr.mxu0 %v185
    %877 = vmatpush1.msra.mxu0 %v184
    %878 = vmatprep.subr.mxu0 %v188
    %879 = vmatpush1.msra.mxu0 %v187
    %880 = vmatprep.subr.mxu0 0.0
    %881 = vmatpush1.msra.mxu0 0.0
    %882 = vmatprep.subr.mxu0 0.0
    %883 = vmatpush1.msra.mxu0 0.0
    %884 = vmatprep.subr.mxu0 0.0
    %885 = vmatpush1.msra.mxu0 0.0
    %886 = vmatprep.subr.mxu0 0.0
    %887 = vmatpush1.msra.mxu0 0.0
    %888 = vmatprep.subr.mxu0 0.0
    %889 = vmatpush1.msra.mxu0 0.0
    %890 = vmatprep.subr.mxu0 0.0
    %891 = vmatpush1.msra.mxu0 0.0
    %892 = vmatprep.subr.mxu0 0.0
    %893 = vmatpush1.msra.mxu0 0.0
    %894 = vmatprep.subr.mxu0 0.0
    %895 = vmatpush1.msra.mxu0 0.0
    %896 = vmatprep.subr.mxu0 0.0
    %897 = vmatpush1.msra.mxu0 0.0
    %898 = vmatprep.subr.mxu0 0.0
    %899 = vmatpush1.msra.mxu0 0.0
    %900 = vmatprep.subr.mxu0 0.0
    %901 = vmatpush1.msra.mxu0 0.0
    %902 = vmatprep.subr.mxu0 0.0
    %903 = vmatpush1.msra.mxu0 0.0
    %904 = vmatprep.subr.mxu0 0.0
    %905 = vmatpush1.msra.mxu0 0.0
    %906 = vmatprep.subr.mxu0 0.0
    %907 = vmatpush1.msra.mxu0 0.0
    %908 = vmatprep.subr.mxu0 0.0
    %909 = vmatpush1.msra.mxu0 0.0
    %910 = vmatprep.subr.mxu0 0.0
    %911 = vmatpush1.msra.mxu0 0.0
    %912 = vmatprep.mubr.f32.mxu0 0.0
    %913 = vmatmul.mubr.f32.gmra.mrb[0].mxu0 %v843
    %v914 = vpop.f32.mrb[0].mxu0
    %v915 = vadd.f32 0.0, %v914
    %v916 = vpop.f32.mrb[0].mxu0
    %v917 = vadd.f32 0.0, %v916
    %918 = vdwg.mxu0
    %919 = vmatprep.subr.mxu0 0.0
    %920 = vmatpush1.msra.mxu0 %v144
    %921 = vmatprep.subr.mxu0 0.0
    %922 = vmatpush1.msra.mxu0 %v147
    %923 = vmatprep.subr.mxu0 0.0
    %924 = vmatpush1.msra.mxu0 %v150
    %925 = vmatprep.subr.mxu0 0.0
    %926 = vmatpush1.msra.mxu0 %v153
    %927 = vmatprep.subr.mxu0 0.0
    %928 = vmatpush1.msra.mxu0 %v156
    %929 = vmatprep.subr.mxu0 0.0
    %930 = vmatpush1.msra.mxu0 %v159
    %931 = vmatprep.subr.mxu0 0.0
    %932 = vmatpush1.msra.mxu0 %v162
    %933 = vmatprep.subr.mxu0 0.0
    %934 = vmatpush1.msra.mxu0 %v165
    %935 = vmatprep.subr.mxu0 0.0
    %936 = vmatpush1.msra.mxu0 %v168
    %937 = vmatprep.subr.mxu0 0.0
    %938 = vmatpush1.msra.mxu0 %v171
    %939 = vmatprep.subr.mxu0 0.0
    %940 = vmatpush1.msra.mxu0 %v174
    %941 = vmatprep.subr.mxu0 0.0
    %942 = vmatpush1.msra.mxu0 %v177
    %943 = vmatprep.subr.mxu0 0.0
    %944 = vmatpush1.msra.mxu0 %v180
    %945 = vmatprep.subr.mxu0 0.0
    %946 = vmatpush1.msra.mxu0 %v183
    %947 = vmatprep.subr.mxu0 0.0
    %948 = vmatpush1.msra.mxu0 %v186
    %949 = vmatprep.subr.mxu0 0.0
    %950 = vmatpush1.msra.mxu0 %v189
    %951 = vmatprep.subr.mxu0 0.0
    %952 = vmatpush1.msra.mxu0 0.0
    %953 = vmatprep.subr.mxu0 0.0
    %954 = vmatpush1.msra.mxu0 0.0
    %955 = vmatprep.subr.mxu0 0.0
    %956 = vmatpush1.msra.mxu0 0.0
    %957 = vmatprep.subr.mxu0 0.0
    %958 = vmatpush1.msra.mxu0 0.0
    %959 = vmatprep.subr.mxu0 0.0
    %960 = vmatpush1.msra.mxu0 0.0
    %961 = vmatprep.subr.mxu0 0.0
    %962 = vmatpush1.msra.mxu0 0.0
    %963 = vmatprep.subr.mxu0 0.0
    %964 = vmatpush1.msra.mxu0 0.0
    %965 = vmatprep.subr.mxu0 0.0
    %966 = vmatpush1.msra.mxu0 0.0
    %967 = vmatprep.subr.mxu0 0.0
    %968 = vmatpush1.msra.mxu0 0.0
    %969 = vmatprep.subr.mxu0 0.0
    %970 = vmatpush1.msra.mxu0 0.0
    %971 = vmatprep.subr.mxu0 0.0
    %972 = vmatpush1.msra.mxu0 0.0
    %973 = vmatprep.subr.mxu0 0.0
    %974 = vmatpush1.msra.mxu0 0.0
    %975 = vmatprep.subr.mxu0 0.0
    %976 = vmatpush1.msra.mxu0 0.0
    %977 = vmatprep.subr.mxu0 0.0
    %978 = vmatpush1.msra.mxu0 0.0
    %979 = vmatprep.subr.mxu0 0.0
    %980 = vmatpush1.msra.mxu0 0.0
    %981 = vmatprep.subr.mxu0 0.0
    %982 = vmatpush1.msra.mxu0 0.0
    %983 = vmatprep.mubr.f32.mxu0 0.0
    %984 = vmatmul.mubr.f32.gmra.mrb[0].mxu0 %v843
    %v985 = vpop.f32.mrb[0].mxu0
    %v986 = vadd.f32 0.0, %v985
    %v987 = vpop.f32.mrb[0].mxu0
    %988 = vdwg.mxu0
    %v989 = vadd.f32 %v847, %v915
    %v990 = vxor.u32 %v989, 2147483648
    %v991 = vmul.f32 %v990, 1.442695
    %v992 = vpow.pop %v991
    %v993 = vadd.f32 %v992, 1.0
    %v994 = vrcp.pop %v993
    %v995 = vmul.f32 1.0, %v994
    %v997 = vrot.slane %v847, 2
    %v999 = vadd.f32 %v997, %v917
    %v1000 = vxor.u32 %v999, 2147483648
    %v1001 = vmul.f32 %v1000, 1.442695
    %v1002 = vpow.pop %v1001
    %v1003 = vadd.f32 %v1002, 1.0
    %v1004 = vrcp.pop %v1003
    %v1005 = vmul.f32 1.0, %v1004
    %v1006 = vadd.f32 %v986, %v661
    %v1007 = vmul.f32 %v995, %v1006
    %v1008 = vrot.slane %v847, 4
    %v1010 = vadd.f32 %v1008, %v1007
    %v1011 = vtanh.pop %v1010
    %v1012 = vsub.f32 1.0, %v1005
    %v1013 = vmul.f32 %v1012, %v1011
    %v1014 = vmul.f32 %v1005, %v843
    %v1015 = vadd.f32 %v1013, %v1014
    %s1016 = scalar_lea.vmem [#allocation3], 4
    %1017 = vst [vmem:[%s1016] sm:$0x3] %v1015
    %s1018 = scalar_lea.vmem [#allocation2], 18
    %v1019 = vld [vmem:[%s1018] sm:$0x3f]
    %1020 = vmatprep.subr.mxu0 %v143
    %1021 = vmatpush1.msra.mxu0 %v142
    %1022 = vmatprep.subr.mxu0 %v146
    %1023 = vmatpush1.msra.mxu0 %v145
    %1024 = vmatprep.subr.mxu0 %v149
    %1025 = vmatpush1.msra.mxu0 %v148
    %1026 = vmatprep.subr.mxu0 %v152
    %1027 = vmatpush1.msra.mxu0 %v151
    %1028 = vmatprep.subr.mxu0 %v155
    %1029 = vmatpush1.msra.mxu0 %v154
    %1030 = vmatprep.subr.mxu0 %v158
    %1031 = vmatpush1.msra.mxu0 %v157
    %1032 = vmatprep.subr.mxu0 %v161
    %1033 = vmatpush1.msra.mxu0 %v160
    %1034 = vmatprep.subr.mxu0 %v164
    %1035 = vmatpush1.msra.mxu0 %v163
    %1036 = vmatprep.subr.mxu0 %v167
    %1037 = vmatpush1.msra.mxu0 %v166
    %1038 = vmatprep.subr.mxu0 %v170
    %1039 = vmatpush1.msra.mxu0 %v169
    %1040 = vmatprep.subr.mxu0 %v173
    %1041 = vmatpush1.msra.mxu0 %v172
    %1042 = vmatprep.subr.mxu0 %v176
    %1043 = vmatpush1.msra.mxu0 %v175
    %1044 = vmatprep.subr.mxu0 %v179
    %1045 = vmatpush1.msra.mxu0 %v178
    %1046 = vmatprep.subr.mxu0 %v182
    %1047 = vmatpush1.msra.mxu0 %v181
    %1048 = vmatprep.subr.mxu0 %v185
    %1049 = vmatpush1.msra.mxu0 %v184
    %1050 = vmatprep.subr.mxu0 %v188
    %1051 = vmatpush1.msra.mxu0 %v187
    %1052 = vmatprep.subr.mxu0 0.0
    %1053 = vmatpush1.msra.mxu0 0.0
    %1054 = vmatprep.subr.mxu0 0.0
    %1055 = vmatpush1.msra.mxu0 0.0
    %1056 = vmatprep.subr.mxu0 0.0
    %1057 = vmatpush1.msra.mxu0 0.0
    %1058 = vmatprep.subr.mxu0 0.0
    %1059 = vmatpush1.msra.mxu0 0.0
    %1060 = vmatprep.subr.mxu0 0.0
    %1061 = vmatpush1.msra.mxu0 0.0
    %1062 = vmatprep.subr.mxu0 0.0
    %1063 = vmatpush1.msra.mxu0 0.0
    %1064 = vmatprep.subr.mxu0 0.0
    %1065 = vmatpush1.msra.mxu0 0.0
    %1066 = vmatprep.subr.mxu0 0.0
    %1067 = vmatpush1.msra.mxu0 0.0
    %1068 = vmatprep.subr.mxu0 0.0
    %1069 = vmatpush1.msra.mxu0 0.0
    %1070 = vmatprep.subr.mxu0 0.0
    %1071 = vmatpush1.msra.mxu0 0.0
    %1072 = vmatprep.subr.mxu0 0.0
    %1073 = vmatpush1.msra.mxu0 0.0
    %1074 = vmatprep.subr.mxu0 0.0
    %1075 = vmatpush1.msra.mxu0 0.0
    %1076 = vmatprep.subr.mxu0 0.0
    %1077 = vmatpush1.msra.mxu0 0.0
    %1078 = vmatprep.subr.mxu0 0.0
    %1079 = vmatpush1.msra.mxu0 0.0
    %1080 = vmatprep.subr.mxu0 0.0
    %1081 = vmatpush1.msra.mxu0 0.0
    %1082 = vmatprep.subr.mxu0 0.0
    %1083 = vmatpush1.msra.mxu0 0.0
    %1084 = vmatprep.mubr.f32.mxu0 0.0
    %1085 = vmatmul.mubr.f32.gmra.mrb[0].mxu0 %v1015
    %v1086 = vpop.f32.mrb[0].mxu0
    %v1087 = vadd.f32 0.0, %v1086
    %v1088 = vpop.f32.mrb[0].mxu0
    %v1089 = vadd.f32 0.0, %v1088
    %1090 = vdwg.mxu0
    %1091 = vmatprep.subr.mxu0 0.0
    %1092 = vmatpush1.msra.mxu0 %v144
    %1093 = vmatprep.subr.mxu0 0.0
    %1094 = vmatpush1.msra.mxu0 %v147
    %1095 = vmatprep.subr.mxu0 0.0
    %1096 = vmatpush1.msra.mxu0 %v150
    %1097 = vmatprep.subr.mxu0 0.0
    %1098 = vmatpush1.msra.mxu0 %v153
    %1099 = vmatprep.subr.mxu0 0.0
    %1100 = vmatpush1.msra.mxu0 %v156
    %1101 = vmatprep.subr.mxu0 0.0
    %1102 = vmatpush1.msra.mxu0 %v159
    %1103 = vmatprep.subr.mxu0 0.0
    %1104 = vmatpush1.msra.mxu0 %v162
    %1105 = vmatprep.subr.mxu0 0.0
    %1106 = vmatpush1.msra.mxu0 %v165
    %1107 = vmatprep.subr.mxu0 0.0
    %1108 = vmatpush1.msra.mxu0 %v168
    %1109 = vmatprep.subr.mxu0 0.0
    %1110 = vmatpush1.msra.mxu0 %v171
    %1111 = vmatprep.subr.mxu0 0.0
    %1112 = vmatpush1.msra.mxu0 %v174
    %1113 = vmatprep.subr.mxu0 0.0
    %1114 = vmatpush1.msra.mxu0 %v177
    %1115 = vmatprep.subr.mxu0 0.0
    %1116 = vmatpush1.msra.mxu0 %v180
    %1117 = vmatprep.subr.mxu0 0.0
    %1118 = vmatpush1.msra.mxu0 %v183
    %1119 = vmatprep.subr.mxu0 0.0
    %1120 = vmatpush1.msra.mxu0 %v186
    %1121 = vmatprep.subr.mxu0 0.0
    %1122 = vmatpush1.msra.mxu0 %v189
    %1123 = vmatprep.subr.mxu0 0.0
    %1124 = vmatpush1.msra.mxu0 0.0
    %1125 = vmatprep.subr.mxu0 0.0
    %1126 = vmatpush1.msra.mxu0 0.0
    %1127 = vmatprep.subr.mxu0 0.0
    %1128 = vmatpush1.msra.mxu0 0.0
    %1129 = vmatprep.subr.mxu0 0.0
    %1130 = vmatpush1.msra.mxu0 0.0
    %1131 = vmatprep.subr.mxu0 0.0
    %1132 = vmatpush1.msra.mxu0 0.0
    %1133 = vmatprep.subr.mxu0 0.0
    %1134 = vmatpush1.msra.mxu0 0.0
    %1135 = vmatprep.subr.mxu0 0.0
    %1136 = vmatpush1.msra.mxu0 0.0
    %1137 = vmatprep.subr.mxu0 0.0
    %1138 = vmatpush1.msra.mxu0 0.0
    %1139 = vmatprep.subr.mxu0 0.0
    %1140 = vmatpush1.msra.mxu0 0.0
    %1141 = vmatprep.subr.mxu0 0.0
    %1142 = vmatpush1.msra.mxu0 0.0
    %1143 = vmatprep.subr.mxu0 0.0
    %1144 = vmatpush1.msra.mxu0 0.0
    %1145 = vmatprep.subr.mxu0 0.0
    %1146 = vmatpush1.msra.mxu0 0.0
    %1147 = vmatprep.subr.mxu0 0.0
    %1148 = vmatpush1.msra.mxu0 0.0
    %1149 = vmatprep.subr.mxu0 0.0
    %1150 = vmatpush1.msra.mxu0 0.0
    %1151 = vmatprep.subr.mxu0 0.0
    %1152 = vmatpush1.msra.mxu0 0.0
    %1153 = vmatprep.subr.mxu0 0.0
    %1154 = vmatpush1.msra.mxu0 0.0
    %1155 = vmatprep.mubr.f32.mxu0 0.0
    %1156 = vmatmul.mubr.f32.gmra.mrb[0].mxu0 %v1015
    %v1157 = vpop.f32.mrb[0].mxu0
    %v1158 = vadd.f32 0.0, %v1157
    %v1159 = vpop.f32.mrb[0].mxu0
    %1160 = vdwg.mxu0
    %v1161 = vadd.f32 %v1019, %v1087
    %v1162 = vxor.u32 %v1161, 2147483648
    %v1163 = vmul.f32 %v1162, 1.442695
    %v1164 = vpow.pop %v1163
    %v1165 = vadd.f32 %v1164, 1.0
    %v1166 = vrcp.pop %v1165
    %v1167 = vmul.f32 1.0, %v1166
    %v1169 = vrot.slane %v1019, 2
    %v1171 = vadd.f32 %v1169, %v1089
    %v1172 = vxor.u32 %v1171, 2147483648
    %v1173 = vmul.f32 %v1172, 1.442695
    %v1174 = vpow.pop %v1173
    %v1175 = vadd.f32 %v1174, 1.0
    %v1176 = vrcp.pop %v1175
    %v1177 = vmul.f32 1.0, %v1176
    %v1178 = vadd.f32 %v1158, %v661
    %v1179 = vmul.f32 %v1167, %v1178
    %v1180 = vrot.slane %v1019, 4
    %v1182 = vadd.f32 %v1180, %v1179
    %v1183 = vtanh.pop %v1182
    %v1184 = vsub.f32 1.0, %v1177
    %v1185 = vmul.f32 %v1184, %v1183
    %v1186 = vmul.f32 %v1177, %v1015
    %v1187 = vadd.f32 %v1185, %v1186
    %s1188 = scalar_lea.vmem [#allocation3], 6
    %1189 = vst [vmem:[%s1188] sm:$0x3] %v1187
    %s1190 = scalar_lea.vmem [#allocation2], 24
    %v1191 = vld [vmem:[%s1190] sm:$0x3f]
    %1192 = vmatprep.subr.mxu0 %v143
    %1193 = vmatpush1.msra.mxu0 %v142
    %1194 = vmatprep.subr.mxu0 %v146
    %1195 = vmatpush1.msra.mxu0 %v145
    %1196 = vmatprep.subr.mxu0 %v149
    %1197 = vmatpush1.msra.mxu0 %v148
    %1198 = vmatprep.subr.mxu0 %v152
    %1199 = vmatpush1.msra.mxu0 %v151
    %1200 = vmatprep.subr.mxu0 %v155
    %1201 = vmatpush1.msra.mxu0 %v154
    %1202 = vmatprep.subr.mxu0 %v158
    %1203 = vmatpush1.msra.mxu0 %v157
    %1204 = vmatprep.subr.mxu0 %v161
    %1205 = vmatpush1.msra.mxu0 %v160
    %1206 = vmatprep.subr.mxu0 %v164
    %1207 = vmatpush1.msra.mxu0 %v163
    %1208 = vmatprep.subr.mxu0 %v167
    %1209 = vmatpush1.msra.mxu0 %v166
    %1210 = vmatprep.subr.mxu0 %v170
    %1211 = vmatpush1.msra.mxu0 %v169
    %1212 = vmatprep.subr.mxu0 %v173
    %1213 = vmatpush1.msra.mxu0 %v172
    %1214 = vmatprep.subr.mxu0 %v176
    %1215 = vmatpush1.msra.mxu0 %v175
    %1216 = vmatprep.subr.mxu0 %v179
    %1217 = vmatpush1.msra.mxu0 %v178
    %1218 = vmatprep.subr.mxu0 %v182
    %1219 = vmatpush1.msra.mxu0 %v181
    %1220 = vmatprep.subr.mxu0 %v185
    %1221 = vmatpush1.msra.mxu0 %v184
    %1222 = vmatprep.subr.mxu0 %v188
    %1223 = vmatpush1.msra.mxu0 %v187
    %1224 = vmatprep.subr.mxu0 0.0
    %1225 = vmatpush1.msra.mxu0 0.0
    %1226 = vmatprep.subr.mxu0 0.0
    %1227 = vmatpush1.msra.mxu0 0.0
    %1228 = vmatprep.subr.mxu0 0.0
    %1229 = vmatpush1.msra.mxu0 0.0
    %1230 = vmatprep.subr.mxu0 0.0
    %1231 = vmatpush1.msra.mxu0 0.0
    %1232 = vmatprep.subr.mxu0 0.0
    %1233 = vmatpush1.msra.mxu0 0.0
    %1234 = vmatprep.subr.mxu0 0.0
    %1235 = vmatpush1.msra.mxu0 0.0
    %1236 = vmatprep.subr.mxu0 0.0
    %1237 = vmatpush1.msra.mxu0 0.0
    %1238 = vmatprep.subr.mxu0 0.0
    %1239 = vmatpush1.msra.mxu0 0.0
    %1240 = vmatprep.subr.mxu0 0.0
    %1241 = vmatpush1.msra.mxu0 0.0
    %1242 = vmatprep.subr.mxu0 0.0
    %1243 = vmatpush1.msra.mxu0 0.0
    %1244 = vmatprep.subr.mxu0 0.0
    %1245 = vmatpush1.msra.mxu0 0.0
    %1246 = vmatprep.subr.mxu0 0.0
    %1247 = vmatpush1.msra.mxu0 0.0
    %1248 = vmatprep.subr.mxu0 0.0
    %1249 = vmatpush1.msra.mxu0 0.0
    %1250 = vmatprep.subr.mxu0 0.0
    %1251 = vmatpush1.msra.mxu0 0.0
    %1252 = vmatprep.subr.mxu0 0.0
    %1253 = vmatpush1.msra.mxu0 0.0
    %1254 = vmatprep.subr.mxu0 0.0
    %1255 = vmatpush1.msra.mxu0 0.0
    %1256 = vmatprep.mubr.f32.mxu0 0.0
    %1257 = vmatmul.mubr.f32.gmra.mrb[0].mxu0 %v1187
    %v1258 = vpop.f32.mrb[0].mxu0
    %v1259 = vadd.f32 0.0, %v1258
    %v1260 = vpop.f32.mrb[0].mxu0
    %v1261 = vadd.f32 0.0, %v1260
    %1262 = vdwg.mxu0
    %1263 = vmatprep.subr.mxu0 0.0
    %1264 = vmatpush1.msra.mxu0 %v144
    %1265 = vmatprep.subr.mxu0 0.0
    %1266 = vmatpush1.msra.mxu0 %v147
    %1267 = vmatprep.subr.mxu0 0.0
    %1268 = vmatpush1.msra.mxu0 %v150
    %1269 = vmatprep.subr.mxu0 0.0
    %1270 = vmatpush1.msra.mxu0 %v153
    %1271 = vmatprep.subr.mxu0 0.0
    %1272 = vmatpush1.msra.mxu0 %v156
    %1273 = vmatprep.subr.mxu0 0.0
    %1274 = vmatpush1.msra.mxu0 %v159
    %1275 = vmatprep.subr.mxu0 0.0
    %1276 = vmatpush1.msra.mxu0 %v162
    %1277 = vmatprep.subr.mxu0 0.0
    %1278 = vmatpush1.msra.mxu0 %v165
    %1279 = vmatprep.subr.mxu0 0.0
    %1280 = vmatpush1.msra.mxu0 %v168
    %1281 = vmatprep.subr.mxu0 0.0
    %1282 = vmatpush1.msra.mxu0 %v171
    %1283 = vmatprep.subr.mxu0 0.0
    %1284 = vmatpush1.msra.mxu0 %v174
    %1285 = vmatprep.subr.mxu0 0.0
    %1286 = vmatpush1.msra.mxu0 %v177
    %1287 = vmatprep.subr.mxu0 0.0
    %1288 = vmatpush1.msra.mxu0 %v180
    %1289 = vmatprep.subr.mxu0 0.0
    %1290 = vmatpush1.msra.mxu0 %v183
    %1291 = vmatprep.subr.mxu0 0.0
    %1292 = vmatpush1.msra.mxu0 %v186
    %1293 = vmatprep.subr.mxu0 0.0
    %1294 = vmatpush1.msra.mxu0 %v189
    %1295 = vmatprep.subr.mxu0 0.0
    %1296 = vmatpush1.msra.mxu0 0.0
    %1297 = vmatprep.subr.mxu0 0.0
    %1298 = vmatpush1.msra.mxu0 0.0
    %1299 = vmatprep.subr.mxu0 0.0
    %1300 = vmatpush1.msra.mxu0 0.0
    %1301 = vmatprep.subr.mxu0 0.0
    %1302 = vmatpush1.msra.mxu0 0.0
    %1303 = vmatprep.subr.mxu0 0.0
    %1304 = vmatpush1.msra.mxu0 0.0
    %1305 = vmatprep.subr.mxu0 0.0
    %1306 = vmatpush1.msra.mxu0 0.0
    %1307 = vmatprep.subr.mxu0 0.0
    %1308 = vmatpush1.msra.mxu0 0.0
    %1309 = vmatprep.subr.mxu0 0.0
    %1310 = vmatpush1.msra.mxu0 0.0
    %1311 = vmatprep.subr.mxu0 0.0
    %1312 = vmatpush1.msra.mxu0 0.0
    %1313 = vmatprep.subr.mxu0 0.0
    %1314 = vmatpush1.msra.mxu0 0.0
    %1315 = vmatprep.subr.mxu0 0.0
    %1316 = vmatpush1.msra.mxu0 0.0
    %1317 = vmatprep.subr.mxu0 0.0
    %1318 = vmatpush1.msra.mxu0 0.0
    %1319 = vmatprep.subr.mxu0 0.0
    %1320 = vmatpush1.msra.mxu0 0.0
    %1321 = vmatprep.subr.mxu0 0.0
    %1322 = vmatpush1.msra.mxu0 0.0
    %1323 = vmatprep.subr.mxu0 0.0
    %1324 = vmatpush1.msra.mxu0 0.0
    %1325 = vmatprep.subr.mxu0 0.0
    %1326 = vmatpush1.msra.mxu0 0.0
    %1327 = vmatprep.mubr.f32.mxu0 0.0
    %1328 = vmatmul.mubr.f32.gmra.mrb[0].mxu0 %v1187
    %v1329 = vpop.f32.mrb[0].mxu0
    %v1330 = vadd.f32 0.0, %v1329
    %v1331 = vpop.f32.mrb[0].mxu0
    %1332 = vdwg.mxu0
    %v1333 = vadd.f32 %v1191, %v1259
    %v1334 = vxor.u32 %v1333, 2147483648
    %v1335 = vmul.f32 %v1334, 1.442695
    %v1336 = vpow.pop %v1335
    %v1337 = vadd.f32 %v1336, 1.0
    %v1338 = vrcp.pop %v1337
    %v1339 = vmul.f32 1.0, %v1338
    %v1341 = vrot.slane %v1191, 2
    %v1343 = vadd.f32 %v1341, %v1261
    %v1344 = vxor.u32 %v1343, 2147483648
    %v1345 = vmul.f32 %v1344, 1.442695
    %v1346 = vpow.pop %v1345
    %v1347 = vadd.f32 %v1346, 1.0
    %v1348 = vrcp.pop %v1347
    %v1349 = vmul.f32 1.0, %v1348
    %v1350 = vadd.f32 %v1330, %v661
    %v1351 = vmul.f32 %v1339, %v1350
    %v1352 = vrot.slane %v1191, 4
    %v1354 = vadd.f32 %v1352, %v1351
    %v1355 = vtanh.pop %v1354
    %v1356 = vsub.f32 1.0, %v1349
    %v1357 = vmul.f32 %v1356, %v1355
    %v1358 = vmul.f32 %v1349, %v1187
    %v1359 = vadd.f32 %v1357, %v1358
    %s1360 = scalar_lea.vmem [#allocation3], 8
    %1361 = vst [vmem:[%s1360] sm:$0x3] %v1359
    %s1362 = scalar_lea.vmem [#allocation2], 30
    %v1363 = vld [vmem:[%s1362] sm:$0x3f]
    %1364 = vmatprep.subr.mxu0 %v143
    %1365 = vmatpush1.msra.mxu0 %v142
    %1366 = vmatprep.subr.mxu0 %v146
    %1367 = vmatpush1.msra.mxu0 %v145
    %1368 = vmatprep.subr.mxu0 %v149
    %1369 = vmatpush1.msra.mxu0 %v148
    %1370 = vmatprep.subr.mxu0 %v152
    %1371 = vmatpush1.msra.mxu0 %v151
    %1372 = vmatprep.subr.mxu0 %v155
    %1373 = vmatpush1.msra.mxu0 %v154
    %1374 = vmatprep.subr.mxu0 %v158
    %1375 = vmatpush1.msra.mxu0 %v157
    %1376 = vmatprep.subr.mxu0 %v161
    %1377 = vmatpush1.msra.mxu0 %v160
    %1378 = vmatprep.subr.mxu0 %v164
    %1379 = vmatpush1.msra.mxu0 %v163
    %1380 = vmatprep.subr.mxu0 %v167
    %1381 = vmatpush1.msra.mxu0 %v166
    %1382 = vmatprep.subr.mxu0 %v170
    %1383 = vmatpush1.msra.mxu0 %v169
    %1384 = vmatprep.subr.mxu0 %v173
    %1385 = vmatpush1.msra.mxu0 %v172
    %1386 = vmatprep.subr.mxu0 %v176
    %1387 = vmatpush1.msra.mxu0 %v175
    %1388 = vmatprep.subr.mxu0 %v179
    %1389 = vmatpush1.msra.mxu0 %v178
    %1390 = vmatprep.subr.mxu0 %v182
    %1391 = vmatpush1.msra.mxu0 %v181
    %1392 = vmatprep.subr.mxu0 %v185
    %1393 = vmatpush1.msra.mxu0 %v184
    %1394 = vmatprep.subr.mxu0 %v188
    %1395 = vmatpush1.msra.mxu0 %v187
    %1396 = vmatprep.subr.mxu0 0.0
    %1397 = vmatpush1.msra.mxu0 0.0
    %1398 = vmatprep.subr.mxu0 0.0
    %1399 = vmatpush1.msra.mxu0 0.0
    %1400 = vmatprep.subr.mxu0 0.0
    %1401 = vmatpush1.msra.mxu0 0.0
    %1402 = vmatprep.subr.mxu0 0.0
    %1403 = vmatpush1.msra.mxu0 0.0
    %1404 = vmatprep.subr.mxu0 0.0
    %1405 = vmatpush1.msra.mxu0 0.0
    %1406 = vmatprep.subr.mxu0 0.0
    %1407 = vmatpush1.msra.mxu0 0.0
    %1408 = vmatprep.subr.mxu0 0.0
    %1409 = vmatpush1.msra.mxu0 0.0
    %1410 = vmatprep.subr.mxu0 0.0
    %1411 = vmatpush1.msra.mxu0 0.0
    %1412 = vmatprep.subr.mxu0 0.0
    %1413 = vmatpush1.msra.mxu0 0.0
    %1414 = vmatprep.subr.mxu0 0.0
    %1415 = vmatpush1.msra.mxu0 0.0
    %1416 = vmatprep.subr.mxu0 0.0
    %1417 = vmatpush1.msra.mxu0 0.0
    %1418 = vmatprep.subr.mxu0 0.0
    %1419 = vmatpush1.msra.mxu0 0.0
    %1420 = vmatprep.subr.mxu0 0.0
    %1421 = vmatpush1.msra.mxu0 0.0
    %1422 = vmatprep.subr.mxu0 0.0
    %1423 = vmatpush1.msra.mxu0 0.0
    %1424 = vmatprep.subr.mxu0 0.0
    %1425 = vmatpush1.msra.mxu0 0.0
    %1426 = vmatprep.subr.mxu0 0.0
    %1427 = vmatpush1.msra.mxu0 0.0
    %1428 = vmatprep.mubr.f32.mxu0 0.0
    %1429 = vmatmul.mubr.f32.gmra.mrb[0].mxu0 %v1359
    %v1430 = vpop.f32.mrb[0].mxu0
    %v1431 = vadd.f32 0.0, %v1430
    %v1432 = vpop.f32.mrb[0].mxu0
    %v1433 = vadd.f32 0.0, %v1432
    %1434 = vdwg.mxu0
    %1435 = vmatprep.subr.mxu0 0.0
    %1436 = vmatpush1.msra.mxu0 %v144
    %1437 = vmatprep.subr.mxu0 0.0
    %1438 = vmatpush1.msra.mxu0 %v147
    %1439 = vmatprep.subr.mxu0 0.0
    %1440 = vmatpush1.msra.mxu0 %v150
    %1441 = vmatprep.subr.mxu0 0.0
    %1442 = vmatpush1.msra.mxu0 %v153
    %1443 = vmatprep.subr.mxu0 0.0
    %1444 = vmatpush1.msra.mxu0 %v156
    %1445 = vmatprep.subr.mxu0 0.0
    %1446 = vmatpush1.msra.mxu0 %v159
    %1447 = vmatprep.subr.mxu0 0.0
    %1448 = vmatpush1.msra.mxu0 %v162
    %1449 = vmatprep.subr.mxu0 0.0
    %1450 = vmatpush1.msra.mxu0 %v165
    %1451 = vmatprep.subr.mxu0 0.0
    %1452 = vmatpush1.msra.mxu0 %v168
    %1453 = vmatprep.subr.mxu0 0.0
    %1454 = vmatpush1.msra.mxu0 %v171
    %1455 = vmatprep.subr.mxu0 0.0
    %1456 = vmatpush1.msra.mxu0 %v174
    %1457 = vmatprep.subr.mxu0 0.0
    %1458 = vmatpush1.msra.mxu0 %v177
    %1459 = vmatprep.subr.mxu0 0.0
    %1460 = vmatpush1.msra.mxu0 %v180
    %1461 = vmatprep.subr.mxu0 0.0
    %1462 = vmatpush1.msra.mxu0 %v183
    %1463 = vmatprep.subr.mxu0 0.0
    %1464 = vmatpush1.msra.mxu0 %v186
    %1465 = vmatprep.subr.mxu0 0.0
    %1466 = vmatpush1.msra.mxu0 %v189
    %1467 = vmatprep.subr.mxu0 0.0
    %1468 = vmatpush1.msra.mxu0 0.0
    %1469 = vmatprep.subr.mxu0 0.0
    %1470 = vmatpush1.msra.mxu0 0.0
    %1471 = vmatprep.subr.mxu0 0.0
    %1472 = vmatpush1.msra.mxu0 0.0
    %1473 = vmatprep.subr.mxu0 0.0
    %1474 = vmatpush1.msra.mxu0 0.0
    %1475 = vmatprep.subr.mxu0 0.0
    %1476 = vmatpush1.msra.mxu0 0.0
    %1477 = vmatprep.subr.mxu0 0.0
    %1478 = vmatpush1.msra.mxu0 0.0
    %1479 = vmatprep.subr.mxu0 0.0
    %1480 = vmatpush1.msra.mxu0 0.0
    %1481 = vmatprep.subr.mxu0 0.0
    %1482 = vmatpush1.msra.mxu0 0.0
    %1483 = vmatprep.subr.mxu0 0.0
    %1484 = vmatpush1.msra.mxu0 0.0
    %1485 = vmatprep.subr.mxu0 0.0
    %1486 = vmatpush1.msra.mxu0 0.0
    %1487 = vmatprep.subr.mxu0 0.0
    %1488 = vmatpush1.msra.mxu0 0.0
    %1489 = vmatprep.subr.mxu0 0.0
    %1490 = vmatpush1.msra.mxu0 0.0
    %1491 = vmatprep.subr.mxu0 0.0
    %1492 = vmatpush1.msra.mxu0 0.0
    %1493 = vmatprep.subr.mxu0 0.0
    %1494 = vmatpush1.msra.mxu0 0.0
    %1495 = vmatprep.subr.mxu0 0.0
    %1496 = vmatpush1.msra.mxu0 0.0
    %1497 = vmatprep.subr.mxu0 0.0
    %1498 = vmatpush1.msra.mxu0 0.0
    %1499 = vmatprep.mubr.f32.mxu0 0.0
    %1500 = vmatmul.mubr.f32.gmra.mrb[0].mxu0 %v1359
    %v1501 = vpop.f32.mrb[0].mxu0
    %v1502 = vadd.f32 0.0, %v1501
    %v1503 = vpop.f32.mrb[0].mxu0
    %1504 = vdwg.mxu0
    %v1505 = vadd.f32 %v1363, %v1431
    %v1506 = vxor.u32 %v1505, 2147483648
    %v1507 = vmul.f32 %v1506, 1.442695
    %v1508 = vpow.pop %v1507
    %v1509 = vadd.f32 %v1508, 1.0
    %v1510 = vrcp.pop %v1509
    %v1511 = vmul.f32 1.0, %v1510
    %v1513 = vrot.slane %v1363, 2
    %v1515 = vadd.f32 %v1513, %v1433
    %v1516 = vxor.u32 %v1515, 2147483648
    %v1517 = vmul.f32 %v1516, 1.442695
    %v1518 = vpow.pop %v1517
    %v1519 = vadd.f32 %v1518, 1.0
    %v1520 = vrcp.pop %v1519
    %v1521 = vmul.f32 1.0, %v1520
    %v1522 = vadd.f32 %v1502, %v661
    %v1523 = vmul.f32 %v1511, %v1522
    %v1524 = vrot.slane %v1363, 4
    %v1526 = vadd.f32 %v1524, %v1523
    %v1527 = vtanh.pop %v1526
    %v1528 = vsub.f32 1.0, %v1521
    %v1529 = vmul.f32 %v1528, %v1527
    %v1530 = vmul.f32 %v1521, %v1359
    %v1531 = vadd.f32 %v1529, %v1530
    %s1532 = scalar_lea.vmem [#allocation3], 10
    %1533 = vst [vmem:[%s1532] sm:$0x3] %v1531
    %s1534 = scalar_lea.vmem [#allocation2], 36
    %v1535 = vld [vmem:[%s1534] sm:$0x3f]
    %1536 = vmatprep.subr.mxu0 %v143
    %1537 = vmatpush1.msra.mxu0 %v142
    %1538 = vmatprep.subr.mxu0 %v146
    %1539 = vmatpush1.msra.mxu0 %v145
    %1540 = vmatprep.subr.mxu0 %v149
    %1541 = vmatpush1.msra.mxu0 %v148
    %1542 = vmatprep.subr.mxu0 %v152
    %1543 = vmatpush1.msra.mxu0 %v151
    %1544 = vmatprep.subr.mxu0 %v155
    %1545 = vmatpush1.msra.mxu0 %v154
    %1546 = vmatprep.subr.mxu0 %v158
    %1547 = vmatpush1.msra.mxu0 %v157
    %1548 = vmatprep.subr.mxu0 %v161
    %1549 = vmatpush1.msra.mxu0 %v160
    %1550 = vmatprep.subr.mxu0 %v164
    %1551 = vmatpush1.msra.mxu0 %v163
    %1552 = vmatprep.subr.mxu0 %v167
    %1553 = vmatpush1.msra.mxu0 %v166
    %1554 = vmatprep.subr.mxu0 %v170
    %1555 = vmatpush1.msra.mxu0 %v169
    %1556 = vmatprep.subr.mxu0 %v173
    %1557 = vmatpush1.msra.mxu0 %v172
    %1558 = vmatprep.subr.mxu0 %v176
    %1559 = vmatpush1.msra.mxu0 %v175
    %1560 = vmatprep.subr.mxu0 %v179
    %1561 = vmatpush1.msra.mxu0 %v178
    %1562 = vmatprep.subr.mxu0 %v182
    %1563 = vmatpush1.msra.mxu0 %v181
    %1564 = vmatprep.subr.mxu0 %v185
    %1565 = vmatpush1.msra.mxu0 %v184
    %1566 = vmatprep.subr.mxu0 %v188
    %1567 = vmatpush1.msra.mxu0 %v187
    %1568 = vmatprep.subr.mxu0 0.0
    %1569 = vmatpush1.msra.mxu0 0.0
    %1570 = vmatprep.subr.mxu0 0.0
    %1571 = vmatpush1.msra.mxu0 0.0
    %1572 = vmatprep.subr.mxu0 0.0
    %1573 = vmatpush1.msra.mxu0 0.0
    %1574 = vmatprep.subr.mxu0 0.0
    %1575 = vmatpush1.msra.mxu0 0.0
    %1576 = vmatprep.subr.mxu0 0.0
    %1577 = vmatpush1.msra.mxu0 0.0
    %1578 = vmatprep.subr.mxu0 0.0
    %1579 = vmatpush1.msra.mxu0 0.0
    %1580 = vmatprep.subr.mxu0 0.0
    %1581 = vmatpush1.msra.mxu0 0.0
    %1582 = vmatprep.subr.mxu0 0.0
    %1583 = vmatpush1.msra.mxu0 0.0
    %1584 = vmatprep.subr.mxu0 0.0
    %1585 = vmatpush1.msra.mxu0 0.0
    %1586 = vmatprep.subr.mxu0 0.0
    %1587 = vmatpush1.msra.mxu0 0.0
    %1588 = vmatprep.subr.mxu0 0.0
    %1589 = vmatpush1.msra.mxu0 0.0
    %1590 = vmatprep.subr.mxu0 0.0
    %1591 = vmatpush1.msra.mxu0 0.0
    %1592 = vmatprep.subr.mxu0 0.0
    %1593 = vmatpush1.msra.mxu0 0.0
    %1594 = vmatprep.subr.mxu0 0.0
    %1595 = vmatpush1.msra.mxu0 0.0
    %1596 = vmatprep.subr.mxu0 0.0
    %1597 = vmatpush1.msra.mxu0 0.0
    %1598 = vmatprep.subr.mxu0 0.0
    %1599 = vmatpush1.msra.mxu0 0.0
    %1600 = vmatprep.mubr.f32.mxu0 0.0
    %1601 = vmatmul.mubr.f32.gmra.mrb[0].mxu0 %v1531
    %v1602 = vpop.f32.mrb[0].mxu0
    %v1603 = vadd.f32 0.0, %v1602
    %v1604 = vpop.f32.mrb[0].mxu0
    %v1605 = vadd.f32 0.0, %v1604
    %1606 = vdwg.mxu0
    %1607 = vmatprep.subr.mxu0 0.0
    %1608 = vmatpush1.msra.mxu0 %v144
    %1609 = vmatprep.subr.mxu0 0.0
    %1610 = vmatpush1.msra.mxu0 %v147
    %1611 = vmatprep.subr.mxu0 0.0
    %1612 = vmatpush1.msra.mxu0 %v150
    %1613 = vmatprep.subr.mxu0 0.0
    %1614 = vmatpush1.msra.mxu0 %v153
    %1615 = vmatprep.subr.mxu0 0.0
    %1616 = vmatpush1.msra.mxu0 %v156
    %1617 = vmatprep.subr.mxu0 0.0
    %1618 = vmatpush1.msra.mxu0 %v159
    %1619 = vmatprep.subr.mxu0 0.0
    %1620 = vmatpush1.msra.mxu0 %v162
    %1621 = vmatprep.subr.mxu0 0.0
    %1622 = vmatpush1.msra.mxu0 %v165
    %1623 = vmatprep.subr.mxu0 0.0
    %1624 = vmatpush1.msra.mxu0 %v168
    %1625 = vmatprep.subr.mxu0 0.0
    %1626 = vmatpush1.msra.mxu0 %v171
    %1627 = vmatprep.subr.mxu0 0.0
    %1628 = vmatpush1.msra.mxu0 %v174
    %1629 = vmatprep.subr.mxu0 0.0
    %1630 = vmatpush1.msra.mxu0 %v177
    %1631 = vmatprep.subr.mxu0 0.0
    %1632 = vmatpush1.msra.mxu0 %v180
    %1633 = vmatprep.subr.mxu0 0.0
    %1634 = vmatpush1.msra.mxu0 %v183
    %1635 = vmatprep.subr.mxu0 0.0
    %1636 = vmatpush1.msra.mxu0 %v186
    %1637 = vmatprep.subr.mxu0 0.0
    %1638 = vmatpush1.msra.mxu0 %v189
    %1639 = vmatprep.subr.mxu0 0.0
    %1640 = vmatpush1.msra.mxu0 0.0
    %1641 = vmatprep.subr.mxu0 0.0
    %1642 = vmatpush1.msra.mxu0 0.0
    %1643 = vmatprep.subr.mxu0 0.0
    %1644 = vmatpush1.msra.mxu0 0.0
    %1645 = vmatprep.subr.mxu0 0.0
    %1646 = vmatpush1.msra.mxu0 0.0
    %1647 = vmatprep.subr.mxu0 0.0
    %1648 = vmatpush1.msra.mxu0 0.0
    %1649 = vmatprep.subr.mxu0 0.0
    %1650 = vmatpush1.msra.mxu0 0.0
    %1651 = vmatprep.subr.mxu0 0.0
    %1652 = vmatpush1.msra.mxu0 0.0
    %1653 = vmatprep.subr.mxu0 0.0
    %1654 = vmatpush1.msra.mxu0 0.0
    %1655 = vmatprep.subr.mxu0 0.0
    %1656 = vmatpush1.msra.mxu0 0.0
    %1657 = vmatprep.subr.mxu0 0.0
    %1658 = vmatpush1.msra.mxu0 0.0
    %1659 = vmatprep.subr.mxu0 0.0
    %1660 = vmatpush1.msra.mxu0 0.0
    %1661 = vmatprep.subr.mxu0 0.0
    %1662 = vmatpush1.msra.mxu0 0.0
    %1663 = vmatprep.subr.mxu0 0.0
    %1664 = vmatpush1.msra.mxu0 0.0
    %1665 = vmatprep.subr.mxu0 0.0
    %1666 = vmatpush1.msra.mxu0 0.0
    %1667 = vmatprep.subr.mxu0 0.0
    %1668 = vmatpush1.msra.mxu0 0.0
    %1669 = vmatprep.subr.mxu0 0.0
    %1670 = vmatpush1.msra.mxu0 0.0
    %1671 = vmatprep.mubr.f32.mxu0 0.0
    %1672 = vmatmul.mubr.f32.gmra.mrb[0].mxu0 %v1531
    %v1673 = vpop.f32.mrb[0].mxu0
    %v1674 = vadd.f32 0.0, %v1673
    %v1675 = vpop.f32.mrb[0].mxu0
    %1676 = vdwg.mxu0
    %v1677 = vadd.f32 %v1535, %v1603
    %v1678 = vxor.u32 %v1677, 2147483648
    %v1679 = vmul.f32 %v1678, 1.442695
    %v1680 = vpow.pop %v1679
    %v1681 = vadd.f32 %v1680, 1.0
    %v1682 = vrcp.pop %v1681
    %v1683 = vmul.f32 1.0, %v1682
    %v1685 = vrot.slane %v1535, 2
    %v1687 = vadd.f32 %v1685, %v1605
    %v1688 = vxor.u32 %v1687, 2147483648
    %v1689 = vmul.f32 %v1688, 1.442695
    %v1690 = vpow.pop %v1689
    %v1691 = vadd.f32 %v1690, 1.0
    %v1692 = vrcp.pop %v1691
    %v1693 = vmul.f32 1.0, %v1692
    %v1694 = vadd.f32 %v1674, %v661
    %v1695 = vmul.f32 %v1683, %v1694
    %v1696 = vrot.slane %v1535, 4
    %v1698 = vadd.f32 %v1696, %v1695
    %v1699 = vtanh.pop %v1698
    %v1700 = vsub.f32 1.0, %v1693
    %v1701 = vmul.f32 %v1700, %v1699
    %v1702 = vmul.f32 %v1693, %v1531
    %v1703 = vadd.f32 %v1701, %v1702
    %s1704 = scalar_lea.vmem [#allocation3], 12
    %1705 = vst [vmem:[%s1704] sm:$0x3] %v1703
    %s1706 = scalar_lea.vmem [#allocation2], 42
    %v1707 = vld [vmem:[%s1706] sm:$0x3f]
    %1708 = vmatprep.subr.mxu0 %v143
    %1709 = vmatpush1.msra.mxu0 %v142
    %1710 = vmatprep.subr.mxu0 %v146
    %1711 = vmatpush1.msra.mxu0 %v145
    %1712 = vmatprep.subr.mxu0 %v149
    %1713 = vmatpush1.msra.mxu0 %v148
    %1714 = vmatprep.subr.mxu0 %v152
    %1715 = vmatpush1.msra.mxu0 %v151
    %1716 = vmatprep.subr.mxu0 %v155
    %1717 = vmatpush1.msra.mxu0 %v154
    %1718 = vmatprep.subr.mxu0 %v158
    %1719 = vmatpush1.msra.mxu0 %v157
    %1720 = vmatprep.subr.mxu0 %v161
    %1721 = vmatpush1.msra.mxu0 %v160
    %1722 = vmatprep.subr.mxu0 %v164
    %1723 = vmatpush1.msra.mxu0 %v163
    %1724 = vmatprep.subr.mxu0 %v167
    %1725 = vmatpush1.msra.mxu0 %v166
    %1726 = vmatprep.subr.mxu0 %v170
    %1727 = vmatpush1.msra.mxu0 %v169
    %1728 = vmatprep.subr.mxu0 %v173
    %1729 = vmatpush1.msra.mxu0 %v172
    %1730 = vmatprep.subr.mxu0 %v176
    %1731 = vmatpush1.msra.mxu0 %v175
    %1732 = vmatprep.subr.mxu0 %v179
    %1733 = vmatpush1.msra.mxu0 %v178
    %1734 = vmatprep.subr.mxu0 %v182
    %1735 = vmatpush1.msra.mxu0 %v181
    %1736 = vmatprep.subr.mxu0 %v185
    %1737 = vmatpush1.msra.mxu0 %v184
    %1738 = vmatprep.subr.mxu0 %v188
    %1739 = vmatpush1.msra.mxu0 %v187
    %1740 = vmatprep.subr.mxu0 0.0
    %1741 = vmatpush1.msra.mxu0 0.0
    %1742 = vmatprep.subr.mxu0 0.0
    %1743 = vmatpush1.msra.mxu0 0.0
    %1744 = vmatprep.subr.mxu0 0.0
    %1745 = vmatpush1.msra.mxu0 0.0
    %1746 = vmatprep.subr.mxu0 0.0
    %1747 = vmatpush1.msra.mxu0 0.0
    %1748 = vmatprep.subr.mxu0 0.0
    %1749 = vmatpush1.msra.mxu0 0.0
    %1750 = vmatprep.subr.mxu0 0.0
    %1751 = vmatpush1.msra.mxu0 0.0
    %1752 = vmatprep.subr.mxu0 0.0
    %1753 = vmatpush1.msra.mxu0 0.0
    %1754 = vmatprep.subr.mxu0 0.0
    %1755 = vmatpush1.msra.mxu0 0.0
    %1756 = vmatprep.subr.mxu0 0.0
    %1757 = vmatpush1.msra.mxu0 0.0
    %1758 = vmatprep.subr.mxu0 0.0
    %1759 = vmatpush1.msra.mxu0 0.0
    %1760 = vmatprep.subr.mxu0 0.0
    %1761 = vmatpush1.msra.mxu0 0.0
    %1762 = vmatprep.subr.mxu0 0.0
    %1763 = vmatpush1.msra.mxu0 0.0
    %1764 = vmatprep.subr.mxu0 0.0
    %1765 = vmatpush1.msra.mxu0 0.0
    %1766 = vmatprep.subr.mxu0 0.0
    %1767 = vmatpush1.msra.mxu0 0.0
    %1768 = vmatprep.subr.mxu0 0.0
    %1769 = vmatpush1.msra.mxu0 0.0
    %1770 = vmatprep.subr.mxu0 0.0
    %1771 = vmatpush1.msra.mxu0 0.0
    %1772 = vmatprep.mubr.f32.mxu0 0.0
    %1773 = vmatmul.mubr.f32.gmra.mrb[0].mxu0 %v1703
    %v1774 = vpop.f32.mrb[0].mxu0
    %v1775 = vadd.f32 0.0, %v1774
    %v1776 = vpop.f32.mrb[0].mxu0
    %v1777 = vadd.f32 0.0, %v1776
    %1778 = vdwg.mxu0
    %1779 = vmatprep.subr.mxu0 0.0
    %1780 = vmatpush1.msra.mxu0 %v144
    %1781 = vmatprep.subr.mxu0 0.0
    %1782 = vmatpush1.msra.mxu0 %v147
    %1783 = vmatprep.subr.mxu0 0.0
    %1784 = vmatpush1.msra.mxu0 %v150
    %1785 = vmatprep.subr.mxu0 0.0
    %1786 = vmatpush1.msra.mxu0 %v153
    %1787 = vmatprep.subr.mxu0 0.0
    %1788 = vmatpush1.msra.mxu0 %v156
    %1789 = vmatprep.subr.mxu0 0.0
    %1790 = vmatpush1.msra.mxu0 %v159
    %1791 = vmatprep.subr.mxu0 0.0
    %1792 = vmatpush1.msra.mxu0 %v162
    %1793 = vmatprep.subr.mxu0 0.0
    %1794 = vmatpush1.msra.mxu0 %v165
    %1795 = vmatprep.subr.mxu0 0.0
    %1796 = vmatpush1.msra.mxu0 %v168
    %1797 = vmatprep.subr.mxu0 0.0
    %1798 = vmatpush1.msra.mxu0 %v171
    %1799 = vmatprep.subr.mxu0 0.0
    %1800 = vmatpush1.msra.mxu0 %v174
    %1801 = vmatprep.subr.mxu0 0.0
    %1802 = vmatpush1.msra.mxu0 %v177
    %1803 = vmatprep.subr.mxu0 0.0
    %1804 = vmatpush1.msra.mxu0 %v180
    %1805 = vmatprep.subr.mxu0 0.0
    %1806 = vmatpush1.msra.mxu0 %v183
    %1807 = vmatprep.subr.mxu0 0.0
    %1808 = vmatpush1.msra.mxu0 %v186
    %1809 = vmatprep.subr.mxu0 0.0
    %1810 = vmatpush1.msra.mxu0 %v189
    %1811 = vmatprep.subr.mxu0 0.0
    %1812 = vmatpush1.msra.mxu0 0.0
    %1813 = vmatprep.subr.mxu0 0.0
    %1814 = vmatpush1.msra.mxu0 0.0
    %1815 = vmatprep.subr.mxu0 0.0
    %1816 = vmatpush1.msra.mxu0 0.0
    %1817 = vmatprep.subr.mxu0 0.0
    %1818 = vmatpush1.msra.mxu0 0.0
    %1819 = vmatprep.subr.mxu0 0.0
    %1820 = vmatpush1.msra.mxu0 0.0
    %1821 = vmatprep.subr.mxu0 0.0
    %1822 = vmatpush1.msra.mxu0 0.0
    %1823 = vmatprep.subr.mxu0 0.0
    %1824 = vmatpush1.msra.mxu0 0.0
    %1825 = vmatprep.subr.mxu0 0.0
    %1826 = vmatpush1.msra.mxu0 0.0
    %1827 = vmatprep.subr.mxu0 0.0
    %1828 = vmatpush1.msra.mxu0 0.0
    %1829 = vmatprep.subr.mxu0 0.0
    %1830 = vmatpush1.msra.mxu0 0.0
    %1831 = vmatprep.subr.mxu0 0.0
    %1832 = vmatpush1.msra.mxu0 0.0
    %1833 = vmatprep.subr.mxu0 0.0
    %1834 = vmatpush1.msra.mxu0 0.0
    %1835 = vmatprep.subr.mxu0 0.0
    %1836 = vmatpush1.msra.mxu0 0.0
    %1837 = vmatprep.subr.mxu0 0.0
    %1838 = vmatpush1.msra.mxu0 0.0
    %1839 = vmatprep.subr.mxu0 0.0
    %1840 = vmatpush1.msra.mxu0 0.0
    %1841 = vmatprep.subr.mxu0 0.0
    %1842 = vmatpush1.msra.mxu0 0.0
    %1843 = vmatprep.mubr.f32.mxu0 0.0
    %1844 = vmatmul.mubr.f32.gmra.mrb[0].mxu0 %v1703
    %v1845 = vpop.f32.mrb[0].mxu0
    %v1846 = vadd.f32 0.0, %v1845
    %v1847 = vpop.f32.mrb[0].mxu0
    %1848 = vdwg.mxu0
    %v1849 = vadd.f32 %v1707, %v1775
    %v1850 = vxor.u32 %v1849, 2147483648
    %v1851 = vmul.f32 %v1850, 1.442695
    %v1852 = vpow.pop %v1851
    %v1853 = vadd.f32 %v1852, 1.0
    %v1854 = vrcp.pop %v1853
    %v1855 = vmul.f32 1.0, %v1854
    %v1857 = vrot.slane %v1707, 2
    %v1859 = vadd.f32 %v1857, %v1777
    %v1860 = vxor.u32 %v1859, 2147483648
    %v1861 = vmul.f32 %v1860, 1.442695
    %v1862 = vpow.pop %v1861
    %v1863 = vadd.f32 %v1862, 1.0
    %v1864 = vrcp.pop %v1863
    %v1865 = vmul.f32 1.0, %v1864
    %v1866 = vadd.f32 %v1846, %v661
    %v1867 = vmul.f32 %v1855, %v1866
    %v1868 = vrot.slane %v1707, 4
    %v1870 = vadd.f32 %v1868, %v1867
    %v1871 = vtanh.pop %v1870
    %v1872 = vsub.f32 1.0, %v1865
    %v1873 = vmul.f32 %v1872, %v1871
    %v1874 = vmul.f32 %v1865, %v1703
    %v1875 = vadd.f32 %v1873, %v1874
    %s1876 = scalar_lea.vmem [#allocation3], 14
    %1877 = vst [vmem:[%s1876] sm:$0x3] %v1875
    %v1878 = vld [vmem:[#allocation3] sm:$0x3]
    %v1879 = vld [vmem:[#allocation3 + $0x2] sm:$0x3]
    %v1880 = vld [vmem:[#allocation3 + $0x4] sm:$0x3]
    %v1881 = vld [vmem:[#allocation3 + $0x6] sm:$0x3]
    %v1882 = vld [vmem:[#allocation3 + $0x8] sm:$0x3]
    %v1883 = vld [vmem:[#allocation3 + $0xa] sm:$0x3]
    %v1884 = vld [vmem:[#allocation3 + $0xc] sm:$0x3]
    %v1885 = vld [vmem:[#allocation3 + $0xe] sm:$0x3]
    %v1886 = vld [vmem:[#allocation10] sm:$0xff]
    %v1887 = vld [vmem:[#allocation10 + $0x8] sm:$0xff]
    %v1888 = vld [vmem:[#allocation10 + $0x10] sm:$0xff]
    %v1889 = vld [vmem:[#allocation10 + $0x18] sm:$0xff]
    %v1890 = vld [vmem:[#allocation10 + $0x20] sm:$0xff]
    %v1891 = vld [vmem:[#allocation10 + $0x28] sm:$0xff]
    %v1892 = vld [vmem:[#allocation10 + $0x30] sm:$0xff]
    %v1893 = vld [vmem:[#allocation10 + $0x38] sm:$0xff]
    %v1894 = vld [vmem:[#allocation10 + $0x40] sm:$0xff]
    %v1895 = vld [vmem:[#allocation10 + $0x48] sm:$0xff]
    %v1896 = vld [vmem:[#allocation10 + $0x50] sm:$0xff]
    %v1897 = vld [vmem:[#allocation10 + $0x58] sm:$0xff]
    %v1898 = vld [vmem:[#allocation10 + $0x60] sm:$0xff]
    %v1899 = vld [vmem:[#allocation10 + $0x68] sm:$0xff]
    %v1900 = vld [vmem:[#allocation10 + $0x70] sm:$0xff]
    %v1901 = vld [vmem:[#allocation10 + $0x78] sm:$0xff]
    %v1902 = vld [vmem:[#allocation10 + $0x80] sm:$0xff]
    %v1903 = vld [vmem:[#allocation10 + $0x88] sm:$0xff]
    %v1904 = vld [vmem:[#allocation10 + $0x90] sm:$0xff]
    %v1905 = vld [vmem:[#allocation10 + $0x98] sm:$0xff]
    %v1906 = vld [vmem:[#allocation10 + $0xa0] sm:$0xff]
    %v1907 = vld [vmem:[#allocation10 + $0xa8] sm:$0xff]
    %v1908 = vld [vmem:[#allocation10 + $0xb0] sm:$0xff]
    %v1909 = vld [vmem:[#allocation10 + $0xb8] sm:$0xff]
    %v1910 = vld [vmem:[#allocation10 + $0xc0] sm:$0xff]
    %v1911 = vld [vmem:[#allocation10 + $0xc8] sm:$0xff]
    %v1912 = vld [vmem:[#allocation10 + $0xd0] sm:$0xff]
    %v1913 = vld [vmem:[#allocation10 + $0xd8] sm:$0xff]
    %v1914 = vld [vmem:[#allocation10 + $0xe0] sm:$0xff]
    %v1915 = vld [vmem:[#allocation10 + $0xe8] sm:$0xff]
    %v1916 = vld [vmem:[#allocation10 + $0xf0] sm:$0xff]
    %v1917 = vld [vmem:[#allocation10 + $0xf8] sm:$0xff]
    %v1918 = vld [vmem:[#allocation10 + $0x100] sm:$0xff]
    %v1919 = vld [vmem:[#allocation10 + $0x108] sm:$0xff]
    %v1920 = vld [vmem:[#allocation10 + $0x110] sm:$0xff]
    %v1921 = vld [vmem:[#allocation10 + $0x118] sm:$0xff]
    %v1922 = vld [vmem:[#allocation10 + $0x120] sm:$0xff]
    %v1923 = vld [vmem:[#allocation10 + $0x128] sm:$0xff]
    %v1924 = vld [vmem:[#allocation10 + $0x130] sm:$0xff]
    %v1925 = vld [vmem:[#allocation10 + $0x138] sm:$0xff]
    %v1926 = vld [vmem:[#allocation10 + $0x140] sm:$0xff]
    %v1927 = vld [vmem:[#allocation10 + $0x148] sm:$0xff]
    %v1928 = vld [vmem:[#allocation10 + $0x150] sm:$0xff]
    %v1929 = vld [vmem:[#allocation10 + $0x158] sm:$0xff]
    %v1930 = vld [vmem:[#allocation10 + $0x160] sm:$0xff]
    %v1931 = vld [vmem:[#allocation10 + $0x168] sm:$0xff]
    %v1932 = vld [vmem:[#allocation10 + $0x170] sm:$0xff]
    %v1933 = vld [vmem:[#allocation10 + $0x178] sm:$0xff]
    %v1934 = vld [vmem:[%s8] sm:$0x7]
    %v1935 = vld [vmem:[#allocation12] sm:$0xff]
    %v1936 = vld [vmem:[#allocation12 + $0x8] sm:$0xff]
    %v1937 = vld [vmem:[#allocation12 + $0x10] sm:$0xff]
    %v1938 = vld [vmem:[#allocation12 + $0x18] sm:$0xff]
    %v1939 = vld [vmem:[#allocation12 + $0x20] sm:$0xff]
    %v1940 = vld [vmem:[#allocation12 + $0x28] sm:$0xff]
    %v1941 = vld [vmem:[#allocation12 + $0x30] sm:$0xff]
    %v1942 = vld [vmem:[#allocation12 + $0x38] sm:$0xff]
    %v1943 = vld [vmem:[#allocation12 + $0x40] sm:$0xff]
    %v1944 = vld [vmem:[#allocation12 + $0x48] sm:$0xff]
    %v1945 = vld [vmem:[#allocation12 + $0x50] sm:$0xff]
    %v1946 = vld [vmem:[#allocation12 + $0x58] sm:$0xff]
    %v1947 = vld [vmem:[#allocation12 + $0x60] sm:$0xff]
    %v1948 = vld [vmem:[#allocation12 + $0x68] sm:$0xff]
    %v1949 = vld [vmem:[#allocation12 + $0x70] sm:$0xff]
    %v1950 = vld [vmem:[#allocation12 + $0x78] sm:$0xff]
    %v1951 = vld [vmem:[#allocation12 + $0x80] sm:$0xff]
    %v1952 = vld [vmem:[#allocation12 + $0x88] sm:$0xff]
    %v1953 = vld [vmem:[#allocation12 + $0x90] sm:$0xff]
    %v1954 = vld [vmem:[#allocation12 + $0x98] sm:$0xff]
    %v1955 = vld [vmem:[#allocation12 + $0xa0] sm:$0xff]
    %v1956 = vld [vmem:[#allocation12 + $0xa8] sm:$0xff]
    %v1957 = vld [vmem:[#allocation12 + $0xb0] sm:$0xff]
    %v1958 = vld [vmem:[#allocation12 + $0xb8] sm:$0xff]
    %v1959 = vld [vmem:[#allocation12 + $0xc0] sm:$0xff]
    %v1960 = vld [vmem:[#allocation12 + $0xc8] sm:$0xff]
    %v1961 = vld [vmem:[#allocation12 + $0xd0] sm:$0xff]
    %v1962 = vld [vmem:[#allocation12 + $0xd8] sm:$0xff]
    %v1963 = vld [vmem:[#allocation12 + $0xe0] sm:$0xff]
    %v1964 = vld [vmem:[#allocation12 + $0xe8] sm:$0xff]
    %v1965 = vld [vmem:[#allocation12 + $0xf0] sm:$0xff]
    %v1966 = vld [vmem:[#allocation12 + $0xf8] sm:$0xff]
    %v1967 = vld [vmem:[#allocation12 + $0x100] sm:$0xff]
    %v1968 = vld [vmem:[#allocation12 + $0x108] sm:$0xff]
    %v1969 = vld [vmem:[#allocation12 + $0x110] sm:$0xff]
    %v1970 = vld [vmem:[#allocation12 + $0x118] sm:$0xff]
    %v1971 = vld [vmem:[#allocation12 + $0x120] sm:$0xff]
    %v1972 = vld [vmem:[#allocation12 + $0x128] sm:$0xff]
    %v1973 = vld [vmem:[#allocation12 + $0x130] sm:$0xff]
    %v1974 = vld [vmem:[#allocation12 + $0x138] sm:$0xff]
    %v1975 = vld [vmem:[#allocation12 + $0x140] sm:$0xff]
    %v1976 = vld [vmem:[#allocation12 + $0x148] sm:$0xff]
    %v1977 = vld [vmem:[#allocation12 + $0x150] sm:$0xff]
    %v1978 = vld [vmem:[#allocation12 + $0x158] sm:$0xff]
    %v1979 = vld [vmem:[#allocation12 + $0x160] sm:$0xff]
    %v1980 = vld [vmem:[#allocation12 + $0x168] sm:$0xff]
    %v1981 = vld [vmem:[#allocation12 + $0x170] sm:$0xff]
    %v1982 = vld [vmem:[#allocation12 + $0x178] sm:$0xff]
    %v1983 = vld [vmem:[%s9] sm:$0x1]
    %v1985 = vlaneseq
    %v1986 = vshrl.u32 %v1985, 7
    %v1987 = vsub.s32 0, %v1986
    %v1988 = vrot.slane %v1934, %v1987
    %v1989 = vlaneseq
    %v1990 = vshrl.u32 %v1989, 7
    %v1991 = vsub.s32 1, %v1990
    %v1992 = vrot.slane %v1934, %v1991
    %v1993 = vlaneseq
    %v1994 = vshrl.u32 %v1993, 7
    %v1995 = vsub.s32 2, %v1994
    %v1996 = vrot.slane %v1934, %v1995
    %v2008 = vcombine.low %v1878, %v1879
    %v2009 = vcombine.low %v1880, %v1881
    %v2011 = vunpack.c.l.s4 1983009808
    %v2012 = vunpack.c.0.s8 %v2011
    %v2013 = vlaneseq
    %v2014 = vshrl.u32 %v2013, 7
    %v2015 = vsub.s32 %v2012, %v2014
    %v2016 = vrot.slane %v2008, %v2015
    %v2018 = vunpack.c.l.s4 1983009808
    %v2019 = vunpack.c.0.s8 %v2018
    %v2020 = vlaneseq
    %v2021 = vshrl.u32 %v2020, 7
    %v2022 = vsub.s32 %v2019, %v2021
    %v2023 = vrot.slane %v2009, %v2022
    %v2024 = vcombine.low %v2016, %v2023
    %v2025 = vcombine.low %v1882, %v1883
    %v2026 = vcombine.low %v1884, %v1885
    %v2028 = vunpack.c.l.s4 1983009808
    %v2029 = vunpack.c.0.s8 %v2028
    %v2030 = vlaneseq
    %v2031 = vshrl.u32 %v2030, 7
    %v2032 = vsub.s32 %v2029, %v2031
    %v2033 = vrot.slane %v2025, %v2032
    %v2035 = vunpack.c.l.s4 1983009808
    %v2036 = vunpack.c.0.s8 %v2035
    %v2037 = vlaneseq
    %v2038 = vshrl.u32 %v2037, 7
    %v2039 = vsub.s32 %v2036, %v2038
    %v2040 = vrot.slane %v2026, %v2039
    %v2041 = vcombine.low %v2033, %v2040
    %2044 = vmatprep.subr.mxu0 %v1887
    %2045 = vmatpush1.msra.mxu0 %v1886
    %2046 = vmatprep.subr.mxu0 %v1890
    %2047 = vmatpush1.msra.mxu0 %v1889
    %2048 = vmatprep.subr.mxu0 %v1893
    %2049 = vmatpush1.msra.mxu0 %v1892
    %2050 = vmatprep.subr.mxu0 %v1896
    %2051 = vmatpush1.msra.mxu0 %v1895
    %2052 = vmatprep.subr.mxu0 %v1899
    %2053 = vmatpush1.msra.mxu0 %v1898
    %2054 = vmatprep.subr.mxu0 %v1902
    %2055 = vmatpush1.msra.mxu0 %v1901
    %2056 = vmatprep.subr.mxu0 %v1905
    %2057 = vmatpush1.msra.mxu0 %v1904
    %2058 = vmatprep.subr.mxu0 %v1908
    %2059 = vmatpush1.msra.mxu0 %v1907
    %2060 = vmatprep.subr.mxu0 %v1911
    %2061 = vmatpush1.msra.mxu0 %v1910
    %2062 = vmatprep.subr.mxu0 %v1914
    %2063 = vmatpush1.msra.mxu0 %v1913
    %2064 = vmatprep.subr.mxu0 %v1917
    %2065 = vmatpush1.msra.mxu0 %v1916
    %2066 = vmatprep.subr.mxu0 %v1920
    %2067 = vmatpush1.msra.mxu0 %v1919
    %2068 = vmatprep.subr.mxu0 %v1923
    %2069 = vmatpush1.msra.mxu0 %v1922
    %2070 = vmatprep.subr.mxu0 %v1926
    %2071 = vmatpush1.msra.mxu0 %v1925
    %2072 = vmatprep.subr.mxu0 %v1929
    %2073 = vmatpush1.msra.mxu0 %v1928
    %2074 = vmatprep.subr.mxu0 %v1932
    %2075 = vmatpush1.msra.mxu0 %v1931
    %2076 = vmatprep.subr.mxu0 0.0
    %2077 = vmatpush1.msra.mxu0 0.0
    %2078 = vmatprep.subr.mxu0 0.0
    %2079 = vmatpush1.msra.mxu0 0.0
    %2080 = vmatprep.subr.mxu0 0.0
    %2081 = vmatpush1.msra.mxu0 0.0
    %2082 = vmatprep.subr.mxu0 0.0
    %2083 = vmatpush1.msra.mxu0 0.0
    %2084 = vmatprep.subr.mxu0 0.0
    %2085 = vmatpush1.msra.mxu0 0.0
    %2086 = vmatprep.subr.mxu0 0.0
    %2087 = vmatpush1.msra.mxu0 0.0
    %2088 = vmatprep.subr.mxu0 0.0
    %2089 = vmatpush1.msra.mxu0 0.0
    %2090 = vmatprep.subr.mxu0 0.0
    %2091 = vmatpush1.msra.mxu0 0.0
    %2092 = vmatprep.subr.mxu0 0.0
    %2093 = vmatpush1.msra.mxu0 0.0
    %2094 = vmatprep.subr.mxu0 0.0
    %2095 = vmatpush1.msra.mxu0 0.0
    %2096 = vmatprep.subr.mxu0 0.0
    %2097 = vmatpush1.msra.mxu0 0.0
    %2098 = vmatprep.subr.mxu0 0.0
    %2099 = vmatpush1.msra.mxu0 0.0
    %2100 = vmatprep.subr.mxu0 0.0
    %2101 = vmatpush1.msra.mxu0 0.0
    %2102 = vmatprep.subr.mxu0 0.0
    %2103 = vmatpush1.msra.mxu0 0.0
    %2104 = vmatprep.subr.mxu0 0.0
    %2105 = vmatpush1.msra.mxu0 0.0
    %2106 = vmatprep.subr.mxu0 0.0
    %2107 = vmatpush1.msra.mxu0 0.0
    %2108 = vmatprep.mubr.f32.mxu0 0.0
    %2109 = vmatmul.mubr.f32.gmra.mrb[0].mxu0 %v2024
    %v2110 = vpop.f32.mrb[0].mxu0
    %v2111 = vadd.f32 %v1988, %v2110
    %v2112 = vpop.f32.mrb[0].mxu0
    %v2113 = vadd.f32 %v1992, %v2112
    %2114 = vmatprep.mubr.f32.mxu0 0.0
    %2115 = vmatmul.mubr.f32.gmra.mrb[0].mxu0 %v2041
    %v2116 = vpop.f32.mrb[0].mxu0
    %v2117 = vadd.f32 %v1988, %v2116
    %v2118 = vpop.f32.mrb[0].mxu0
    %v2119 = vadd.f32 %v1992, %v2118
    %2120 = vdwg.mxu0
    %2121 = vmatprep.subr.mxu0 0.0
    %2122 = vmatpush1.msra.mxu0 %v1888
    %2123 = vmatprep.subr.mxu0 0.0
    %2124 = vmatpush1.msra.mxu0 %v1891
    %2125 = vmatprep.subr.mxu0 0.0
    %2126 = vmatpush1.msra.mxu0 %v1894
    %2127 = vmatprep.subr.mxu0 0.0
    %2128 = vmatpush1.msra.mxu0 %v1897
    %2129 = vmatprep.subr.mxu0 0.0
    %2130 = vmatpush1.msra.mxu0 %v1900
    %2131 = vmatprep.subr.mxu0 0.0
    %2132 = vmatpush1.msra.mxu0 %v1903
    %2133 = vmatprep.subr.mxu0 0.0
    %2134 = vmatpush1.msra.mxu0 %v1906
    %2135 = vmatprep.subr.mxu0 0.0
    %2136 = vmatpush1.msra.mxu0 %v1909
    %2137 = vmatprep.subr.mxu0 0.0
    %2138 = vmatpush1.msra.mxu0 %v1912
    %2139 = vmatprep.subr.mxu0 0.0
    %2140 = vmatpush1.msra.mxu0 %v1915
    %2141 = vmatprep.subr.mxu0 0.0
    %2142 = vmatpush1.msra.mxu0 %v1918
    %2143 = vmatprep.subr.mxu0 0.0
    %2144 = vmatpush1.msra.mxu0 %v1921
    %2145 = vmatprep.subr.mxu0 0.0
    %2146 = vmatpush1.msra.mxu0 %v1924
    %2147 = vmatprep.subr.mxu0 0.0
    %2148 = vmatpush1.msra.mxu0 %v1927
    %2149 = vmatprep.subr.mxu0 0.0
    %2150 = vmatpush1.msra.mxu0 %v1930
    %2151 = vmatprep.subr.mxu0 0.0
    %2152 = vmatpush1.msra.mxu0 %v1933
    %2153 = vmatprep.subr.mxu0 0.0
    %2154 = vmatpush1.msra.mxu0 0.0
    %2155 = vmatprep.subr.mxu0 0.0
    %2156 = vmatpush1.msra.mxu0 0.0
    %2157 = vmatprep.subr.mxu0 0.0
    %2158 = vmatpush1.msra.mxu0 0.0
    %2159 = vmatprep.subr.mxu0 0.0
    %2160 = vmatpush1.msra.mxu0 0.0
    %2161 = vmatprep.subr.mxu0 0.0
    %2162 = vmatpush1.msra.mxu0 0.0
    %2163 = vmatprep.subr.mxu0 0.0
    %2164 = vmatpush1.msra.mxu0 0.0
    %2165 = vmatprep.subr.mxu0 0.0
    %2166 = vmatpush1.msra.mxu0 0.0
    %2167 = vmatprep.subr.mxu0 0.0
    %2168 = vmatpush1.msra.mxu0 0.0
    %2169 = vmatprep.subr.mxu0 0.0
    %2170 = vmatpush1.msra.mxu0 0.0
    %2171 = vmatprep.subr.mxu0 0.0
    %2172 = vmatpush1.msra.mxu0 0.0
    %2173 = vmatprep.subr.mxu0 0.0
    %2174 = vmatpush1.msra.mxu0 0.0
    %2175 = vmatprep.subr.mxu0 0.0
    %2176 = vmatpush1.msra.mxu0 0.0
    %2177 = vmatprep.subr.mxu0 0.0
    %2178 = vmatpush1.msra.mxu0 0.0
    %2179 = vmatprep.subr.mxu0 0.0
    %2180 = vmatpush1.msra.mxu0 0.0
    %2181 = vmatprep.subr.mxu0 0.0
    %2182 = vmatpush1.msra.mxu0 0.0
    %2183 = vmatprep.subr.mxu0 0.0
    %2184 = vmatpush1.msra.mxu0 0.0
    %2185 = vmatprep.mubr.f32.mxu0 0.0
    %2186 = vmatmul.mubr.f32.gmra.mrb[0].mxu0 %v2024
    %v2187 = vpop.f32.mrb[0].mxu0
    %v2188 = vadd.f32 %v1996, %v2187
    %v2189 = vpop.f32.mrb[0].mxu0
    %2190 = vmatprep.mubr.f32.mxu0 0.0
    %2191 = vmatmul.mubr.f32.gmra.mrb[0].mxu0 %v2041
    %v2192 = vpop.f32.mrb[0].mxu0
    %v2193 = vadd.f32 %v1996, %v2192
    %v2194 = vpop.f32.mrb[0].mxu0
    %2195 = vdwg.mxu0
    %v2202 = vcombine.low %v2111, %v2113
    %v2203 = vcombine.high %v2111, %v2113
    %v2204 = vcombine.high %v2188, %v2188
    %v2206 = vunpack.c.l.s4 1983009808
    %v2207 = vunpack.c.0.s8 %v2206
    %v2208 = vlaneseq
    %v2209 = vshrl.u32 %v2208, 7
    %v2210 = vsub.s32 %v2207, %v2209
    %v2211 = vrot.slane %v2202, %v2210
    %v2213 = vunpack.c.l.s4 1983009808
    %v2214 = vunpack.c.0.s8 %v2213
    %v2215 = vlaneseq
    %v2216 = vshrl.u32 %v2215, 7
    %v2217 = vsub.s32 %v2214, %v2216
    %v2218 = vrot.slane %v2203, %v2217
    %v2220 = vunpack.c.l.s4 1983009808
    %v2221 = vunpack.c.0.s8 %v2220
    %v2222 = vlaneseq
    %v2223 = vshrl.u32 %v2222, 7
    %v2224 = vsub.s32 %v2221, %v2223
    %v2225 = vrot.slane %v2188, %v2224
    %v2227 = vunpack.c.l.s4 1983009808
    %v2228 = vunpack.c.0.s8 %v2227
    %v2229 = vlaneseq
    %v2230 = vshrl.u32 %v2229, 7
    %v2231 = vsub.s32 %v2228, %v2230
    %v2232 = vrot.slane %v2204, %v2231
    %v2233 = vcombine.low %v2211, %v2225
    %v2234 = vcombine.high %v2211, %v2225
    %v2235 = vcombine.low %v2218, %v2232
    %v2236 = vcombine.high %v2218, %v2232
    %v2237 = vcombine.low %v2117, %v2119
    %v2238 = vcombine.high %v2117, %v2119
    %v2239 = vcombine.high %v2193, %v2193
    %v2241 = vunpack.c.l.s4 1983009808
    %v2242 = vunpack.c.0.s8 %v2241
    %v2243 = vlaneseq
    %v2244 = vshrl.u32 %v2243, 7
    %v2245 = vsub.s32 %v2242, %v2244
    %v2246 = vrot.slane %v2237, %v2245
    %v2248 = vunpack.c.l.s4 1983009808
    %v2249 = vunpack.c.0.s8 %v2248
    %v2250 = vlaneseq
    %v2251 = vshrl.u32 %v2250, 7
    %v2252 = vsub.s32 %v2249, %v2251
    %v2253 = vrot.slane %v2238, %v2252
    %v2255 = vunpack.c.l.s4 1983009808
    %v2256 = vunpack.c.0.s8 %v2255
    %v2257 = vlaneseq
    %v2258 = vshrl.u32 %v2257, 7
    %v2259 = vsub.s32 %v2256, %v2258
    %v2260 = vrot.slane %v2193, %v2259
    %v2262 = vunpack.c.l.s4 1983009808
    %v2263 = vunpack.c.0.s8 %v2262
    %v2264 = vlaneseq
    %v2265 = vshrl.u32 %v2264, 7
    %v2266 = vsub.s32 %v2263, %v2265
    %v2267 = vrot.slane %v2239, %v2266
    %v2268 = vcombine.low %v2246, %v2260
    %v2269 = vcombine.high %v2246, %v2260
    %v2270 = vcombine.low %v2253, %v2267
    %v2271 = vcombine.high %v2253, %v2267
    %2280 = vst [vmem:[#allocation2] sm:$0x3f] %v2233
    %2281 = vst [vmem:[#allocation2 + $0x6] sm:$0x3f] %v2234
    %2282 = vst [vmem:[#allocation2 + $0xc] sm:$0x3f] %v2235
    %2283 = vst [vmem:[#allocation2 + $0x12] sm:$0x3f] %v2236
    %2284 = vst [vmem:[#allocation2 + $0x18] sm:$0x3f] %v2268
    %2285 = vst [vmem:[#allocation2 + $0x1e] sm:$0x3f] %v2269
    %2286 = vst [vmem:[#allocation2 + $0x24] sm:$0x3f] %v2270
    %2287 = vst [vmem:[#allocation2 + $0x2a] sm:$0x3f] %v2271
    %v2288 = vld [vmem:[#allocation2] sm:$0x3f]
    %2289 = vmatprep.subr.mxu0 %v1936
    %2290 = vmatpush1.msra.mxu0 %v1935
    %2291 = vmatprep.subr.mxu0 %v1939
    %2292 = vmatpush1.msra.mxu0 %v1938
    %2293 = vmatprep.subr.mxu0 %v1942
    %2294 = vmatpush1.msra.mxu0 %v1941
    %2295 = vmatprep.subr.mxu0 %v1945
    %2296 = vmatpush1.msra.mxu0 %v1944
    %2297 = vmatprep.subr.mxu0 %v1948
    %2298 = vmatpush1.msra.mxu0 %v1947
    %2299 = vmatprep.subr.mxu0 %v1951
    %2300 = vmatpush1.msra.mxu0 %v1950
    %2301 = vmatprep.subr.mxu0 %v1954
    %2302 = vmatpush1.msra.mxu0 %v1953
    %2303 = vmatprep.subr.mxu0 %v1957
    %2304 = vmatpush1.msra.mxu0 %v1956
    %2305 = vmatprep.subr.mxu0 %v1960
    %2306 = vmatpush1.msra.mxu0 %v1959
    %2307 = vmatprep.subr.mxu0 %v1963
    %2308 = vmatpush1.msra.mxu0 %v1962
    %2309 = vmatprep.subr.mxu0 %v1966
    %2310 = vmatpush1.msra.mxu0 %v1965
    %2311 = vmatprep.subr.mxu0 %v1969
    %2312 = vmatpush1.msra.mxu0 %v1968
    %2313 = vmatprep.subr.mxu0 %v1972
    %2314 = vmatpush1.msra.mxu0 %v1971
    %2315 = vmatprep.subr.mxu0 %v1975
    %2316 = vmatpush1.msra.mxu0 %v1974
    %2317 = vmatprep.subr.mxu0 %v1978
    %2318 = vmatpush1.msra.mxu0 %v1977
    %2319 = vmatprep.subr.mxu0 %v1981
    %2320 = vmatpush1.msra.mxu0 %v1980
    %2321 = vmatprep.subr.mxu0 0.0
    %2322 = vmatpush1.msra.mxu0 0.0
    %2323 = vmatprep.subr.mxu0 0.0
    %2324 = vmatpush1.msra.mxu0 0.0
    %2325 = vmatprep.subr.mxu0 0.0
    %2326 = vmatpush1.msra.mxu0 0.0
    %2327 = vmatprep.subr.mxu0 0.0
    %2328 = vmatpush1.msra.mxu0 0.0
    %2329 = vmatprep.subr.mxu0 0.0
    %2330 = vmatpush1.msra.mxu0 0.0
    %2331 = vmatprep.subr.mxu0 0.0
    %2332 = vmatpush1.msra.mxu0 0.0
    %2333 = vmatprep.subr.mxu0 0.0
    %2334 = vmatpush1.msra.mxu0 0.0
    %2335 = vmatprep.subr.mxu0 0.0
    %2336 = vmatpush1.msra.mxu0 0.0
    %2337 = vmatprep.subr.mxu0 0.0
    %2338 = vmatpush1.msra.mxu0 0.0
    %2339 = vmatprep.subr.mxu0 0.0
    %2340 = vmatpush1.msra.mxu0 0.0
    %2341 = vmatprep.subr.mxu0 0.0
    %2342 = vmatpush1.msra.mxu0 0.0
    %2343 = vmatprep.subr.mxu0 0.0
    %2344 = vmatpush1.msra.mxu0 0.0
    %2345 = vmatprep.subr.mxu0 0.0
    %2346 = vmatpush1.msra.mxu0 0.0
    %2347 = vmatprep.subr.mxu0 0.0
    %2348 = vmatpush1.msra.mxu0 0.0
    %2349 = vmatprep.subr.mxu0 0.0
    %2350 = vmatpush1.msra.mxu0 0.0
    %2351 = vmatprep.subr.mxu0 0.0
    %2352 = vmatpush1.msra.mxu0 0.0
    %2353 = vmatprep.mubr.f32.mxu0 0.0
    %2354 = vmatmul.mubr.f32.gmra.mrb[0].mxu0 0.0
    %v2355 = vpop.f32.mrb[0].mxu0
    %v2356 = vadd.f32 0.0, %v2355
    %v2357 = vpop.f32.mrb[0].mxu0
    %v2358 = vadd.f32 0.0, %v2357
    %2359 = vdwg.mxu0
    %2360 = vmatprep.subr.mxu0 0.0
    %2361 = vmatpush1.msra.mxu0 %v1937
    %2362 = vmatprep.subr.mxu0 0.0
    %2363 = vmatpush1.msra.mxu0 %v1940
    %2364 = vmatprep.subr.mxu0 0.0
    %2365 = vmatpush1.msra.mxu0 %v1943
    %2366 = vmatprep.subr.mxu0 0.0
    %2367 = vmatpush1.msra.mxu0 %v1946
    %2368 = vmatprep.subr.mxu0 0.0
    %2369 = vmatpush1.msra.mxu0 %v1949
    %2370 = vmatprep.subr.mxu0 0.0
    %2371 = vmatpush1.msra.mxu0 %v1952
    %2372 = vmatprep.subr.mxu0 0.0
    %2373 = vmatpush1.msra.mxu0 %v1955
    %2374 = vmatprep.subr.mxu0 0.0
    %2375 = vmatpush1.msra.mxu0 %v1958
    %2376 = vmatprep.subr.mxu0 0.0
    %2377 = vmatpush1.msra.mxu0 %v1961
    %2378 = vmatprep.subr.mxu0 0.0
    %2379 = vmatpush1.msra.mxu0 %v1964
    %2380 = vmatprep.subr.mxu0 0.0
    %2381 = vmatpush1.msra.mxu0 %v1967
    %2382 = vmatprep.subr.mxu0 0.0
    %2383 = vmatpush1.msra.mxu0 %v1970
    %2384 = vmatprep.subr.mxu0 0.0
    %2385 = vmatpush1.msra.mxu0 %v1973
    %2386 = vmatprep.subr.mxu0 0.0
    %2387 = vmatpush1.msra.mxu0 %v1976
    %2388 = vmatprep.subr.mxu0 0.0
    %2389 = vmatpush1.msra.mxu0 %v1979
    %2390 = vmatprep.subr.mxu0 0.0
    %2391 = vmatpush1.msra.mxu0 %v1982
    %2392 = vmatprep.subr.mxu0 0.0
    %2393 = vmatpush1.msra.mxu0 0.0
    %2394 = vmatprep.subr.mxu0 0.0
    %2395 = vmatpush1.msra.mxu0 0.0
    %2396 = vmatprep.subr.mxu0 0.0
    %2397 = vmatpush1.msra.mxu0 0.0
    %2398 = vmatprep.subr.mxu0 0.0
    %2399 = vmatpush1.msra.mxu0 0.0
    %2400 = vmatprep.subr.mxu0 0.0
    %2401 = vmatpush1.msra.mxu0 0.0
    %2402 = vmatprep.subr.mxu0 0.0
    %2403 = vmatpush1.msra.mxu0 0.0
    %2404 = vmatprep.subr.mxu0 0.0
    %2405 = vmatpush1.msra.mxu0 0.0
    %2406 = vmatprep.subr.mxu0 0.0
    %2407 = vmatpush1.msra.mxu0 0.0
    %2408 = vmatprep.subr.mxu0 0.0
    %2409 = vmatpush1.msra.mxu0 0.0
    %2410 = vmatprep.subr.mxu0 0.0
    %2411 = vmatpush1.msra.mxu0 0.0
    %2412 = vmatprep.subr.mxu0 0.0
    %2413 = vmatpush1.msra.mxu0 0.0
    %2414 = vmatprep.subr.mxu0 0.0
    %2415 = vmatpush1.msra.mxu0 0.0
    %2416 = vmatprep.subr.mxu0 0.0
    %2417 = vmatpush1.msra.mxu0 0.0
    %2418 = vmatprep.subr.mxu0 0.0
    %2419 = vmatpush1.msra.mxu0 0.0
    %2420 = vmatprep.subr.mxu0 0.0
    %2421 = vmatpush1.msra.mxu0 0.0
    %2422 = vmatprep.subr.mxu0 0.0
    %2423 = vmatpush1.msra.mxu0 0.0
    %2424 = vmatprep.mubr.f32.mxu0 0.0
    %2425 = vmatmul.mubr.f32.gmra.mrb[0].mxu0 0.0
    %v2426 = vpop.f32.mrb[0].mxu0
    %v2427 = vadd.f32 0.0, %v2426
    %v2428 = vpop.f32.mrb[0].mxu0
    %2429 = vdwg.mxu0
    %v2430 = vadd.f32 %v2288, %v2356
    %v2431 = vxor.u32 %v2430, 2147483648
    %v2432 = vmul.f32 %v2431, 1.442695
    %v2433 = vpow.pop %v2432
    %v2434 = vadd.f32 %v2433, 1.0
    %v2435 = vrcp.pop %v2434
    %v2436 = vmul.f32 1.0, %v2435
    %v2438 = vrot.slane %v2288, 2
    %v2440 = vadd.f32 %v2438, %v2358
    %v2441 = vxor.u32 %v2440, 2147483648
    %v2442 = vmul.f32 %v2441, 1.442695
    %v2443 = vpow.pop %v2442
    %v2444 = vadd.f32 %v2443, 1.0
    %v2445 = vrcp.pop %v2444
    %v2446 = vmul.f32 1.0, %v2445
    %v2448 = vlaneseq
    %v2449 = vshrl.u32 %v2448, 7
    %v2450 = vsub.s32 0, %v2449
    %v2451 = vrot.slane %v1983, %v2450
    %v2453 = vadd.f32 %v2427, %v2451
    %v2454 = vmul.f32 %v2436, %v2453
    %v2455 = vrot.slane %v2288, 4
    %v2457 = vadd.f32 %v2455, %v2454
    %v2458 = vtanh.pop %v2457
    %v2459 = vsub.f32 1.0, %v2446
    %v2460 = vmul.f32 %v2459, %v2458
    %v2461 = vmul.f32 %v2446, 0.0
    %v2462 = vadd.f32 %v2460, %v2461
    %2463 = vst [vmem:[#allocation3] sm:$0x3] %v2462
    %v2464 = vld [vmem:[%s674] sm:$0x3f]
    %2465 = vmatprep.subr.mxu0 %v1936
    %2466 = vmatpush1.msra.mxu0 %v1935
    %2467 = vmatprep.subr.mxu0 %v1939
    %2468 = vmatpush1.msra.mxu0 %v1938
    %2469 = vmatprep.subr.mxu0 %v1942
    %2470 = vmatpush1.msra.mxu0 %v1941
    %2471 = vmatprep.subr.mxu0 %v1945
    %2472 = vmatpush1.msra.mxu0 %v1944
    %2473 = vmatprep.subr.mxu0 %v1948
    %2474 = vmatpush1.msra.mxu0 %v1947
    %2475 = vmatprep.subr.mxu0 %v1951
    %2476 = vmatpush1.msra.mxu0 %v1950
    %2477 = vmatprep.subr.mxu0 %v1954
    %2478 = vmatpush1.msra.mxu0 %v1953
    %2479 = vmatprep.subr.mxu0 %v1957
    %2480 = vmatpush1.msra.mxu0 %v1956
    %2481 = vmatprep.subr.mxu0 %v1960
    %2482 = vmatpush1.msra.mxu0 %v1959
    %2483 = vmatprep.subr.mxu0 %v1963
    %2484 = vmatpush1.msra.mxu0 %v1962
    %2485 = vmatprep.subr.mxu0 %v1966
    %2486 = vmatpush1.msra.mxu0 %v1965
    %2487 = vmatprep.subr.mxu0 %v1969
    %2488 = vmatpush1.msra.mxu0 %v1968
    %2489 = vmatprep.subr.mxu0 %v1972
    %2490 = vmatpush1.msra.mxu0 %v1971
    %2491 = vmatprep.subr.mxu0 %v1975
    %2492 = vmatpush1.msra.mxu0 %v1974
    %2493 = vmatprep.subr.mxu0 %v1978
    %2494 = vmatpush1.msra.mxu0 %v1977
    %2495 = vmatprep.subr.mxu0 %v1981
    %2496 = vmatpush1.msra.mxu0 %v1980
    %2497 = vmatprep.subr.mxu0 0.0
    %2498 = vmatpush1.msra.mxu0 0.0
    %2499 = vmatprep.subr.mxu0 0.0
    %2500 = vmatpush1.msra.mxu0 0.0
    %2501 = vmatprep.subr.mxu0 0.0
    %2502 = vmatpush1.msra.mxu0 0.0
    %2503 = vmatprep.subr.mxu0 0.0
    %2504 = vmatpush1.msra.mxu0 0.0
    %2505 = vmatprep.subr.mxu0 0.0
    %2506 = vmatpush1.msra.mxu0 0.0
    %2507 = vmatprep.subr.mxu0 0.0
    %2508 = vmatpush1.msra.mxu0 0.0
    %2509 = vmatprep.subr.mxu0 0.0
    %2510 = vmatpush1.msra.mxu0 0.0
    %2511 = vmatprep.subr.mxu0 0.0
    %2512 = vmatpush1.msra.mxu0 0.0
    %2513 = vmatprep.subr.mxu0 0.0
    %2514 = vmatpush1.msra.mxu0 0.0
    %2515 = vmatprep.subr.mxu0 0.0
    %2516 = vmatpush1.msra.mxu0 0.0
    %2517 = vmatprep.subr.mxu0 0.0
    %2518 = vmatpush1.msra.mxu0 0.0
    %2519 = vmatprep.subr.mxu0 0.0
    %2520 = vmatpush1.msra.mxu0 0.0
    %2521 = vmatprep.subr.mxu0 0.0
    %2522 = vmatpush1.msra.mxu0 0.0
    %2523 = vmatprep.subr.mxu0 0.0
    %2524 = vmatpush1.msra.mxu0 0.0
    %2525 = vmatprep.subr.mxu0 0.0
    %2526 = vmatpush1.msra.mxu0 0.0
    %2527 = vmatprep.subr.mxu0 0.0
    %2528 = vmatpush1.msra.mxu0 0.0
    %2529 = vmatprep.mubr.f32.mxu0 0.0
    %2530 = vmatmul.mubr.f32.gmra.mrb[0].mxu0 %v2462
    %v2531 = vpop.f32.mrb[0].mxu0
    %v2532 = vadd.f32 0.0, %v2531
    %v2533 = vpop.f32.mrb[0].mxu0
    %v2534 = vadd.f32 0.0, %v2533
    %2535 = vdwg.mxu0
    %2536 = vmatprep.subr.mxu0 0.0
    %2537 = vmatpush1.msra.mxu0 %v1937
    %2538 = vmatprep.subr.mxu0 0.0
    %2539 = vmatpush1.msra.mxu0 %v1940
    %2540 = vmatprep.subr.mxu0 0.0
    %2541 = vmatpush1.msra.mxu0 %v1943
    %2542 = vmatprep.subr.mxu0 0.0
    %2543 = vmatpush1.msra.mxu0 %v1946
    %2544 = vmatprep.subr.mxu0 0.0
    %2545 = vmatpush1.msra.mxu0 %v1949
    %2546 = vmatprep.subr.mxu0 0.0
    %2547 = vmatpush1.msra.mxu0 %v1952
    %2548 = vmatprep.subr.mxu0 0.0
    %2549 = vmatpush1.msra.mxu0 %v1955
    %2550 = vmatprep.subr.mxu0 0.0
    %2551 = vmatpush1.msra.mxu0 %v1958
    %2552 = vmatprep.subr.mxu0 0.0
    %2553 = vmatpush1.msra.mxu0 %v1961
    %2554 = vmatprep.subr.mxu0 0.0
    %2555 = vmatpush1.msra.mxu0 %v1964
    %2556 = vmatprep.subr.mxu0 0.0
    %2557 = vmatpush1.msra.mxu0 %v1967
    %2558 = vmatprep.subr.mxu0 0.0
    %2559 = vmatpush1.msra.mxu0 %v1970
    %2560 = vmatprep.subr.mxu0 0.0
    %2561 = vmatpush1.msra.mxu0 %v1973
    %2562 = vmatprep.subr.mxu0 0.0
    %2563 = vmatpush1.msra.mxu0 %v1976
    %2564 = vmatprep.subr.mxu0 0.0
    %2565 = vmatpush1.msra.mxu0 %v1979
    %2566 = vmatprep.subr.mxu0 0.0
    %2567 = vmatpush1.msra.mxu0 %v1982
    %2568 = vmatprep.subr.mxu0 0.0
    %2569 = vmatpush1.msra.mxu0 0.0
    %2570 = vmatprep.subr.mxu0 0.0
    %2571 = vmatpush1.msra.mxu0 0.0
    %2572 = vmatprep.subr.mxu0 0.0
    %2573 = vmatpush1.msra.mxu0 0.0
    %2574 = vmatprep.subr.mxu0 0.0
    %2575 = vmatpush1.msra.mxu0 0.0
    %2576 = vmatprep.subr.mxu0 0.0
    %2577 = vmatpush1.msra.mxu0 0.0
    %2578 = vmatprep.subr.mxu0 0.0
    %2579 = vmatpush1.msra.mxu0 0.0
    %2580 = vmatprep.subr.mxu0 0.0
    %2581 = vmatpush1.msra.mxu0 0.0
    %2582 = vmatprep.subr.mxu0 0.0
    %2583 = vmatpush1.msra.mxu0 0.0
    %2584 = vmatprep.subr.mxu0 0.0
    %2585 = vmatpush1.msra.mxu0 0.0
    %2586 = vmatprep.subr.mxu0 0.0
    %2587 = vmatpush1.msra.mxu0 0.0
    %2588 = vmatprep.subr.mxu0 0.0
    %2589 = vmatpush1.msra.mxu0 0.0
    %2590 = vmatprep.subr.mxu0 0.0
    %2591 = vmatpush1.msra.mxu0 0.0
    %2592 = vmatprep.subr.mxu0 0.0
    %2593 = vmatpush1.msra.mxu0 0.0
    %2594 = vmatprep.subr.mxu0 0.0
    %2595 = vmatpush1.msra.mxu0 0.0
    %2596 = vmatprep.subr.mxu0 0.0
    %2597 = vmatpush1.msra.mxu0 0.0
    %2598 = vmatprep.subr.mxu0 0.0
    %2599 = vmatpush1.msra.mxu0 0.0
    %2600 = vmatprep.mubr.f32.mxu0 0.0
    %2601 = vmatmul.mubr.f32.gmra.mrb[0].mxu0 %v2462
    %v2602 = vpop.f32.mrb[0].mxu0
    %v2603 = vadd.f32 0.0, %v2602
    %v2604 = vpop.f32.mrb[0].mxu0
    %2605 = vdwg.mxu0
    %v2606 = vadd.f32 %v2464, %v2532
    %v2607 = vxor.u32 %v2606, 2147483648
    %v2608 = vmul.f32 %v2607, 1.442695
    %v2609 = vpow.pop %v2608
    %v2610 = vadd.f32 %v2609, 1.0
    %v2611 = vrcp.pop %v2610
    %v2612 = vmul.f32 1.0, %v2611
    %v2614 = vrot.slane %v2464, 2
    %v2616 = vadd.f32 %v2614, %v2534
    %v2617 = vxor.u32 %v2616, 2147483648
    %v2618 = vmul.f32 %v2617, 1.442695
    %v2619 = vpow.pop %v2618
    %v2620 = vadd.f32 %v2619, 1.0
    %v2621 = vrcp.pop %v2620
    %v2622 = vmul.f32 1.0, %v2621
    %v2623 = vadd.f32 %v2603, %v2451
    %v2624 = vmul.f32 %v2612, %v2623
    %v2625 = vrot.slane %v2464, 4
    %v2627 = vadd.f32 %v2625, %v2624
    %v2628 = vtanh.pop %v2627
    %v2629 = vsub.f32 1.0, %v2622
    %v2630 = vmul.f32 %v2629, %v2628
    %v2631 = vmul.f32 %v2622, %v2462
    %v2632 = vadd.f32 %v2630, %v2631
    %2633 = vst [vmem:[%s844] sm:$0x3] %v2632
    %v2634 = vld [vmem:[%s846] sm:$0x3f]
    %2635 = vmatprep.subr.mxu0 %v1936
    %2636 = vmatpush1.msra.mxu0 %v1935
    %2637 = vmatprep.subr.mxu0 %v1939
    %2638 = vmatpush1.msra.mxu0 %v1938
    %2639 = vmatprep.subr.mxu0 %v1942
    %2640 = vmatpush1.msra.mxu0 %v1941
    %2641 = vmatprep.subr.mxu0 %v1945
    %2642 = vmatpush1.msra.mxu0 %v1944
    %2643 = vmatprep.subr.mxu0 %v1948
    %2644 = vmatpush1.msra.mxu0 %v1947
    %2645 = vmatprep.subr.mxu0 %v1951
    %2646 = vmatpush1.msra.mxu0 %v1950
    %2647 = vmatprep.subr.mxu0 %v1954
    %2648 = vmatpush1.msra.mxu0 %v1953
    %2649 = vmatprep.subr.mxu0 %v1957
    %2650 = vmatpush1.msra.mxu0 %v1956
    %2651 = vmatprep.subr.mxu0 %v1960
    %2652 = vmatpush1.msra.mxu0 %v1959
    %2653 = vmatprep.subr.mxu0 %v1963
    %2654 = vmatpush1.msra.mxu0 %v1962
    %2655 = vmatprep.subr.mxu0 %v1966
    %2656 = vmatpush1.msra.mxu0 %v1965
    %2657 = vmatprep.subr.mxu0 %v1969
    %2658 = vmatpush1.msra.mxu0 %v1968
    %2659 = vmatprep.subr.mxu0 %v1972
    %2660 = vmatpush1.msra.mxu0 %v1971
    %2661 = vmatprep.subr.mxu0 %v1975
    %2662 = vmatpush1.msra.mxu0 %v1974
    %2663 = vmatprep.subr.mxu0 %v1978
    %2664 = vmatpush1.msra.mxu0 %v1977
    %2665 = vmatprep.subr.mxu0 %v1981
    %2666 = vmatpush1.msra.mxu0 %v1980
    %2667 = vmatprep.subr.mxu0 0.0
    %2668 = vmatpush1.msra.mxu0 0.0
    %2669 = vmatprep.subr.mxu0 0.0
    %2670 = vmatpush1.msra.mxu0 0.0
    %2671 = vmatprep.subr.mxu0 0.0
    %2672 = vmatpush1.msra.mxu0 0.0
    %2673 = vmatprep.subr.mxu0 0.0
    %2674 = vmatpush1.msra.mxu0 0.0
    %2675 = vmatprep.subr.mxu0 0.0
    %2676 = vmatpush1.msra.mxu0 0.0
    %2677 = vmatprep.subr.mxu0 0.0
    %2678 = vmatpush1.msra.mxu0 0.0
    %2679 = vmatprep.subr.mxu0 0.0
    %2680 = vmatpush1.msra.mxu0 0.0
    %2681 = vmatprep.subr.mxu0 0.0
    %2682 = vmatpush1.msra.mxu0 0.0
    %2683 = vmatprep.subr.mxu0 0.0
    %2684 = vmatpush1.msra.mxu0 0.0
    %2685 = vmatprep.subr.mxu0 0.0
    %2686 = vmatpush1.msra.mxu0 0.0
    %2687 = vmatprep.subr.mxu0 0.0
    %2688 = vmatpush1.msra.mxu0 0.0
    %2689 = vmatprep.subr.mxu0 0.0
    %2690 = vmatpush1.msra.mxu0 0.0
    %2691 = vmatprep.subr.mxu0 0.0
    %2692 = vmatpush1.msra.mxu0 0.0
    %2693 = vmatprep.subr.mxu0 0.0
    %2694 = vmatpush1.msra.mxu0 0.0
    %2695 = vmatprep.subr.mxu0 0.0
    %2696 = vmatpush1.msra.mxu0 0.0
    %2697 = vmatprep.subr.mxu0 0.0
    %2698 = vmatpush1.msra.mxu0 0.0
    %2699 = vmatprep.mubr.f32.mxu0 0.0
    %2700 = vmatmul.mubr.f32.gmra.mrb[0].mxu0 %v2632
    %v2701 = vpop.f32.mrb[0].mxu0
    %v2702 = vadd.f32 0.0, %v2701
    %v2703 = vpop.f32.mrb[0].mxu0
    %v2704 = vadd.f32 0.0, %v2703
    %2705 = vdwg.mxu0
    %2706 = vmatprep.subr.mxu0 0.0
    %2707 = vmatpush1.msra.mxu0 %v1937
    %2708 = vmatprep.subr.mxu0 0.0
    %2709 = vmatpush1.msra.mxu0 %v1940
    %2710 = vmatprep.subr.mxu0 0.0
    %2711 = vmatpush1.msra.mxu0 %v1943
    %2712 = vmatprep.subr.mxu0 0.0
    %2713 = vmatpush1.msra.mxu0 %v1946
    %2714 = vmatprep.subr.mxu0 0.0
    %2715 = vmatpush1.msra.mxu0 %v1949
    %2716 = vmatprep.subr.mxu0 0.0
    %2717 = vmatpush1.msra.mxu0 %v1952
    %2718 = vmatprep.subr.mxu0 0.0
    %2719 = vmatpush1.msra.mxu0 %v1955
    %2720 = vmatprep.subr.mxu0 0.0
    %2721 = vmatpush1.msra.mxu0 %v1958
    %2722 = vmatprep.subr.mxu0 0.0
    %2723 = vmatpush1.msra.mxu0 %v1961
    %2724 = vmatprep.subr.mxu0 0.0
    %2725 = vmatpush1.msra.mxu0 %v1964
    %2726 = vmatprep.subr.mxu0 0.0
    %2727 = vmatpush1.msra.mxu0 %v1967
    %2728 = vmatprep.subr.mxu0 0.0
    %2729 = vmatpush1.msra.mxu0 %v1970
    %2730 = vmatprep.subr.mxu0 0.0
    %2731 = vmatpush1.msra.mxu0 %v1973
    %2732 = vmatprep.subr.mxu0 0.0
    %2733 = vmatpush1.msra.mxu0 %v1976
    %2734 = vmatprep.subr.mxu0 0.0
    %2735 = vmatpush1.msra.mxu0 %v1979
    %2736 = vmatprep.subr.mxu0 0.0
    %2737 = vmatpush1.msra.mxu0 %v1982
    %2738 = vmatprep.subr.mxu0 0.0
    %2739 = vmatpush1.msra.mxu0 0.0
    %2740 = vmatprep.subr.mxu0 0.0
    %2741 = vmatpush1.msra.mxu0 0.0
    %2742 = vmatprep.subr.mxu0 0.0
    %2743 = vmatpush1.msra.mxu0 0.0
    %2744 = vmatprep.subr.mxu0 0.0
    %2745 = vmatpush1.msra.mxu0 0.0
    %2746 = vmatprep.subr.mxu0 0.0
    %2747 = vmatpush1.msra.mxu0 0.0
    %2748 = vmatprep.subr.mxu0 0.0
    %2749 = vmatpush1.msra.mxu0 0.0
    %2750 = vmatprep.subr.mxu0 0.0
    %2751 = vmatpush1.msra.mxu0 0.0
    %2752 = vmatprep.subr.mxu0 0.0
    %2753 = vmatpush1.msra.mxu0 0.0
    %2754 = vmatprep.subr.mxu0 0.0
    %2755 = vmatpush1.msra.mxu0 0.0
    %2756 = vmatprep.subr.mxu0 0.0
    %2757 = vmatpush1.msra.mxu0 0.0
    %2758 = vmatprep.subr.mxu0 0.0
    %2759 = vmatpush1.msra.mxu0 0.0
    %2760 = vmatprep.subr.mxu0 0.0
    %2761 = vmatpush1.msra.mxu0 0.0
    %2762 = vmatprep.subr.mxu0 0.0
    %2763 = vmatpush1.msra.mxu0 0.0
    %2764 = vmatprep.subr.mxu0 0.0
    %2765 = vmatpush1.msra.mxu0 0.0
    %2766 = vmatprep.subr.mxu0 0.0
    %2767 = vmatpush1.msra.mxu0 0.0
    %2768 = vmatprep.subr.mxu0 0.0
    %2769 = vmatpush1.msra.mxu0 0.0
    %2770 = vmatprep.mubr.f32.mxu0 0.0
    %2771 = vmatmul.mubr.f32.gmra.mrb[0].mxu0 %v2632
    %v2772 = vpop.f32.mrb[0].mxu0
    %v2773 = vadd.f32 0.0, %v2772
    %v2774 = vpop.f32.mrb[0].mxu0
    %2775 = vdwg.mxu0
    %v2776 = vadd.f32 %v2634, %v2702
    %v2777 = vxor.u32 %v2776, 2147483648
    %v2778 = vmul.f32 %v2777, 1.442695
    %v2779 = vpow.pop %v2778
    %v2780 = vadd.f32 %v2779, 1.0
    %v2781 = vrcp.pop %v2780
    %v2782 = vmul.f32 1.0, %v2781
    %v2784 = vrot.slane %v2634, 2
    %v2786 = vadd.f32 %v2784, %v2704
    %v2787 = vxor.u32 %v2786, 2147483648
    %v2788 = vmul.f32 %v2787, 1.442695
    %v2789 = vpow.pop %v2788
    %v2790 = vadd.f32 %v2789, 1.0
    %v2791 = vrcp.pop %v2790
    %v2792 = vmul.f32 1.0, %v2791
    %v2793 = vadd.f32 %v2773, %v2451
    %v2794 = vmul.f32 %v2782, %v2793
    %v2795 = vrot.slane %v2634, 4
    %v2797 = vadd.f32 %v2795, %v2794
    %v2798 = vtanh.pop %v2797
    %v2799 = vsub.f32 1.0, %v2792
    %v2800 = vmul.f32 %v2799, %v2798
    %v2801 = vmul.f32 %v2792, %v2632
    %v2802 = vadd.f32 %v2800, %v2801
    %2803 = vst [vmem:[%s1016] sm:$0x3] %v2802
    %v2804 = vld [vmem:[%s1018] sm:$0x3f]
    %2805 = vmatprep.subr.mxu0 %v1936
    %2806 = vmatpush1.msra.mxu0 %v1935
    %2807 = vmatprep.subr.mxu0 %v1939
    %2808 = vmatpush1.msra.mxu0 %v1938
    %2809 = vmatprep.subr.mxu0 %v1942
    %2810 = vmatpush1.msra.mxu0 %v1941
    %2811 = vmatprep.subr.mxu0 %v1945
    %2812 = vmatpush1.msra.mxu0 %v1944
    %2813 = vmatprep.subr.mxu0 %v1948
    %2814 = vmatpush1.msra.mxu0 %v1947
    %2815 = vmatprep.subr.mxu0 %v1951
    %2816 = vmatpush1.msra.mxu0 %v1950
    %2817 = vmatprep.subr.mxu0 %v1954
    %2818 = vmatpush1.msra.mxu0 %v1953
    %2819 = vmatprep.subr.mxu0 %v1957
    %2820 = vmatpush1.msra.mxu0 %v1956
    %2821 = vmatprep.subr.mxu0 %v1960
    %2822 = vmatpush1.msra.mxu0 %v1959
    %2823 = vmatprep.subr.mxu0 %v1963
    %2824 = vmatpush1.msra.mxu0 %v1962
    %2825 = vmatprep.subr.mxu0 %v1966
    %2826 = vmatpush1.msra.mxu0 %v1965
    %2827 = vmatprep.subr.mxu0 %v1969
    %2828 = vmatpush1.msra.mxu0 %v1968
    %2829 = vmatprep.subr.mxu0 %v1972
    %2830 = vmatpush1.msra.mxu0 %v1971
    %2831 = vmatprep.subr.mxu0 %v1975
    %2832 = vmatpush1.msra.mxu0 %v1974
    %2833 = vmatprep.subr.mxu0 %v1978
    %2834 = vmatpush1.msra.mxu0 %v1977
    %2835 = vmatprep.subr.mxu0 %v1981
    %2836 = vmatpush1.msra.mxu0 %v1980
    %2837 = vmatprep.subr.mxu0 0.0
    %2838 = vmatpush1.msra.mxu0 0.0
    %2839 = vmatprep.subr.mxu0 0.0
    %2840 = vmatpush1.msra.mxu0 0.0
    %2841 = vmatprep.subr.mxu0 0.0
    %2842 = vmatpush1.msra.mxu0 0.0
    %2843 = vmatprep.subr.mxu0 0.0
    %2844 = vmatpush1.msra.mxu0 0.0
    %2845 = vmatprep.subr.mxu0 0.0
    %2846 = vmatpush1.msra.mxu0 0.0
    %2847 = vmatprep.subr.mxu0 0.0
    %2848 = vmatpush1.msra.mxu0 0.0
    %2849 = vmatprep.subr.mxu0 0.0
    %2850 = vmatpush1.msra.mxu0 0.0
    %2851 = vmatprep.subr.mxu0 0.0
    %2852 = vmatpush1.msra.mxu0 0.0
    %2853 = vmatprep.subr.mxu0 0.0
    %2854 = vmatpush1.msra.mxu0 0.0
    %2855 = vmatprep.subr.mxu0 0.0
    %2856 = vmatpush1.msra.mxu0 0.0
    %2857 = vmatprep.subr.mxu0 0.0
    %2858 = vmatpush1.msra.mxu0 0.0
    %2859 = vmatprep.subr.mxu0 0.0
    %2860 = vmatpush1.msra.mxu0 0.0
    %2861 = vmatprep.subr.mxu0 0.0
    %2862 = vmatpush1.msra.mxu0 0.0
    %2863 = vmatprep.subr.mxu0 0.0
    %2864 = vmatpush1.msra.mxu0 0.0
    %2865 = vmatprep.subr.mxu0 0.0
    %2866 = vmatpush1.msra.mxu0 0.0
    %2867 = vmatprep.subr.mxu0 0.0
    %2868 = vmatpush1.msra.mxu0 0.0
    %2869 = vmatprep.mubr.f32.mxu0 0.0
    %2870 = vmatmul.mubr.f32.gmra.mrb[0].mxu0 %v2802
    %v2871 = vpop.f32.mrb[0].mxu0
    %v2872 = vadd.f32 0.0, %v2871
    %v2873 = vpop.f32.mrb[0].mxu0
    %v2874 = vadd.f32 0.0, %v2873
    %2875 = vdwg.mxu0
    %2876 = vmatprep.subr.mxu0 0.0
    %2877 = vmatpush1.msra.mxu0 %v1937
    %2878 = vmatprep.subr.mxu0 0.0
    %2879 = vmatpush1.msra.mxu0 %v1940
    %2880 = vmatprep.subr.mxu0 0.0
    %2881 = vmatpush1.msra.mxu0 %v1943
    %2882 = vmatprep.subr.mxu0 0.0
    %2883 = vmatpush1.msra.mxu0 %v1946
    %2884 = vmatprep.subr.mxu0 0.0
    %2885 = vmatpush1.msra.mxu0 %v1949
    %2886 = vmatprep.subr.mxu0 0.0
    %2887 = vmatpush1.msra.mxu0 %v1952
    %2888 = vmatprep.subr.mxu0 0.0
    %2889 = vmatpush1.msra.mxu0 %v1955
    %2890 = vmatprep.subr.mxu0 0.0
    %2891 = vmatpush1.msra.mxu0 %v1958
    %2892 = vmatprep.subr.mxu0 0.0
    %2893 = vmatpush1.msra.mxu0 %v1961
    %2894 = vmatprep.subr.mxu0 0.0
    %2895 = vmatpush1.msra.mxu0 %v1964
    %2896 = vmatprep.subr.mxu0 0.0
    %2897 = vmatpush1.msra.mxu0 %v1967
    %2898 = vmatprep.subr.mxu0 0.0
    %2899 = vmatpush1.msra.mxu0 %v1970
    %2900 = vmatprep.subr.mxu0 0.0
    %2901 = vmatpush1.msra.mxu0 %v1973
    %2902 = vmatprep.subr.mxu0 0.0
    %2903 = vmatpush1.msra.mxu0 %v1976
    %2904 = vmatprep.subr.mxu0 0.0
    %2905 = vmatpush1.msra.mxu0 %v1979
    %2906 = vmatprep.subr.mxu0 0.0
    %2907 = vmatpush1.msra.mxu0 %v1982
    %2908 = vmatprep.subr.mxu0 0.0
    %2909 = vmatpush1.msra.mxu0 0.0
    %2910 = vmatprep.subr.mxu0 0.0
    %2911 = vmatpush1.msra.mxu0 0.0
    %2912 = vmatprep.subr.mxu0 0.0
    %2913 = vmatpush1.msra.mxu0 0.0
    %2914 = vmatprep.subr.mxu0 0.0
    %2915 = vmatpush1.msra.mxu0 0.0
    %2916 = vmatprep.subr.mxu0 0.0
    %2917 = vmatpush1.msra.mxu0 0.0
    %2918 = vmatprep.subr.mxu0 0.0
    %2919 = vmatpush1.msra.mxu0 0.0
    %2920 = vmatprep.subr.mxu0 0.0
    %2921 = vmatpush1.msra.mxu0 0.0
    %2922 = vmatprep.subr.mxu0 0.0
    %2923 = vmatpush1.msra.mxu0 0.0
    %2924 = vmatprep.subr.mxu0 0.0
    %2925 = vmatpush1.msra.mxu0 0.0
    %2926 = vmatprep.subr.mxu0 0.0
    %2927 = vmatpush1.msra.mxu0 0.0
    %2928 = vmatprep.subr.mxu0 0.0
    %2929 = vmatpush1.msra.mxu0 0.0
    %2930 = vmatprep.subr.mxu0 0.0
    %2931 = vmatpush1.msra.mxu0 0.0
    %2932 = vmatprep.subr.mxu0 0.0
    %2933 = vmatpush1.msra.mxu0 0.0
    %2934 = vmatprep.subr.mxu0 0.0
    %2935 = vmatpush1.msra.mxu0 0.0
    %2936 = vmatprep.subr.mxu0 0.0
    %2937 = vmatpush1.msra.mxu0 0.0
    %2938 = vmatprep.subr.mxu0 0.0
    %2939 = vmatpush1.msra.mxu0 0.0
    %2940 = vmatprep.mubr.f32.mxu0 0.0
    %2941 = vmatmul.mubr.f32.gmra.mrb[0].mxu0 %v2802
    %v2942 = vpop.f32.mrb[0].mxu0
    %v2943 = vadd.f32 0.0, %v2942
    %v2944 = vpop.f32.mrb[0].mxu0
    %2945 = vdwg.mxu0
    %v2946 = vadd.f32 %v2804, %v2872
    %v2947 = vxor.u32 %v2946, 2147483648
    %v2948 = vmul.f32 %v2947, 1.442695
    %v2949 = vpow.pop %v2948
    %v2950 = vadd.f32 %v2949, 1.0
    %v2951 = vrcp.pop %v2950
    %v2952 = vmul.f32 1.0, %v2951
    %v2954 = vrot.slane %v2804, 2
    %v2956 = vadd.f32 %v2954, %v2874
    %v2957 = vxor.u32 %v2956, 2147483648
    %v2958 = vmul.f32 %v2957, 1.442695
    %v2959 = vpow.pop %v2958
    %v2960 = vadd.f32 %v2959, 1.0
    %v2961 = vrcp.pop %v2960
    %v2962 = vmul.f32 1.0, %v2961
    %v2963 = vadd.f32 %v2943, %v2451
    %v2964 = vmul.f32 %v2952, %v2963
    %v2965 = vrot.slane %v2804, 4
    %v2967 = vadd.f32 %v2965, %v2964
    %v2968 = vtanh.pop %v2967
    %v2969 = vsub.f32 1.0, %v2962
    %v2970 = vmul.f32 %v2969, %v2968
    %v2971 = vmul.f32 %v2962, %v2802
    %v2972 = vadd.f32 %v2970, %v2971
    %2973 = vst [vmem:[%s1188] sm:$0x3] %v2972
    %v2974 = vld [vmem:[%s1190] sm:$0x3f]
    %2975 = vmatprep.subr.mxu0 %v1936
    %2976 = vmatpush1.msra.mxu0 %v1935
    %2977 = vmatprep.subr.mxu0 %v1939
    %2978 = vmatpush1.msra.mxu0 %v1938
    %2979 = vmatprep.subr.mxu0 %v1942
    %2980 = vmatpush1.msra.mxu0 %v1941
    %2981 = vmatprep.subr.mxu0 %v1945
    %2982 = vmatpush1.msra.mxu0 %v1944
    %2983 = vmatprep.subr.mxu0 %v1948
    %2984 = vmatpush1.msra.mxu0 %v1947
    %2985 = vmatprep.subr.mxu0 %v1951
    %2986 = vmatpush1.msra.mxu0 %v1950
    %2987 = vmatprep.subr.mxu0 %v1954
    %2988 = vmatpush1.msra.mxu0 %v1953
    %2989 = vmatprep.subr.mxu0 %v1957
    %2990 = vmatpush1.msra.mxu0 %v1956
    %2991 = vmatprep.subr.mxu0 %v1960
    %2992 = vmatpush1.msra.mxu0 %v1959
    %2993 = vmatprep.subr.mxu0 %v1963
    %2994 = vmatpush1.msra.mxu0 %v1962
    %2995 = vmatprep.subr.mxu0 %v1966
    %2996 = vmatpush1.msra.mxu0 %v1965
    %2997 = vmatprep.subr.mxu0 %v1969
    %2998 = vmatpush1.msra.mxu0 %v1968
    %2999 = vmatprep.subr.mxu0 %v1972
    %3000 = vmatpush1.msra.mxu0 %v1971
    %3001 = vmatprep.subr.mxu0 %v1975
    %3002 = vmatpush1.msra.mxu0 %v1974
    %3003 = vmatprep.subr.mxu0 %v1978
    %3004 = vmatpush1.msra.mxu0 %v1977
    %3005 = vmatprep.subr.mxu0 %v1981
    %3006 = vmatpush1.msra.mxu0 %v1980
    %3007 = vmatprep.subr.mxu0 0.0
    %3008 = vmatpush1.msra.mxu0 0.0
    %3009 = vmatprep.subr.mxu0 0.0
    %3010 = vmatpush1.msra.mxu0 0.0
    %3011 = vmatprep.subr.mxu0 0.0
    %3012 = vmatpush1.msra.mxu0 0.0
    %3013 = vmatprep.subr.mxu0 0.0
    %3014 = vmatpush1.msra.mxu0 0.0
    %3015 = vmatprep.subr.mxu0 0.0
    %3016 = vmatpush1.msra.mxu0 0.0
    %3017 = vmatprep.subr.mxu0 0.0
    %3018 = vmatpush1.msra.mxu0 0.0
    %3019 = vmatprep.subr.mxu0 0.0
    %3020 = vmatpush1.msra.mxu0 0.0
    %3021 = vmatprep.subr.mxu0 0.0
    %3022 = vmatpush1.msra.mxu0 0.0
    %3023 = vmatprep.subr.mxu0 0.0
    %3024 = vmatpush1.msra.mxu0 0.0
    %3025 = vmatprep.subr.mxu0 0.0
    %3026 = vmatpush1.msra.mxu0 0.0
    %3027 = vmatprep.subr.mxu0 0.0
    %3028 = vmatpush1.msra.mxu0 0.0
    %3029 = vmatprep.subr.mxu0 0.0
    %3030 = vmatpush1.msra.mxu0 0.0
    %3031 = vmatprep.subr.mxu0 0.0
    %3032 = vmatpush1.msra.mxu0 0.0
    %3033 = vmatprep.subr.mxu0 0.0
    %3034 = vmatpush1.msra.mxu0 0.0
    %3035 = vmatprep.subr.mxu0 0.0
    %3036 = vmatpush1.msra.mxu0 0.0
    %3037 = vmatprep.subr.mxu0 0.0
    %3038 = vmatpush1.msra.mxu0 0.0
    %3039 = vmatprep.mubr.f32.mxu0 0.0
    %3040 = vmatmul.mubr.f32.gmra.mrb[0].mxu0 %v2972
    %v3041 = vpop.f32.mrb[0].mxu0
    %v3042 = vadd.f32 0.0, %v3041
    %v3043 = vpop.f32.mrb[0].mxu0
    %v3044 = vadd.f32 0.0, %v3043
    %3045 = vdwg.mxu0
    %3046 = vmatprep.subr.mxu0 0.0
    %3047 = vmatpush1.msra.mxu0 %v1937
    %3048 = vmatprep.subr.mxu0 0.0
    %3049 = vmatpush1.msra.mxu0 %v1940
    %3050 = vmatprep.subr.mxu0 0.0
    %3051 = vmatpush1.msra.mxu0 %v1943
    %3052 = vmatprep.subr.mxu0 0.0
    %3053 = vmatpush1.msra.mxu0 %v1946
    %3054 = vmatprep.subr.mxu0 0.0
    %3055 = vmatpush1.msra.mxu0 %v1949
    %3056 = vmatprep.subr.mxu0 0.0
    %3057 = vmatpush1.msra.mxu0 %v1952
    %3058 = vmatprep.subr.mxu0 0.0
    %3059 = vmatpush1.msra.mxu0 %v1955
    %3060 = vmatprep.subr.mxu0 0.0
    %3061 = vmatpush1.msra.mxu0 %v1958
    %3062 = vmatprep.subr.mxu0 0.0
    %3063 = vmatpush1.msra.mxu0 %v1961
    %3064 = vmatprep.subr.mxu0 0.0
    %3065 = vmatpush1.msra.mxu0 %v1964
    %3066 = vmatprep.subr.mxu0 0.0
    %3067 = vmatpush1.msra.mxu0 %v1967
    %3068 = vmatprep.subr.mxu0 0.0
    %3069 = vmatpush1.msra.mxu0 %v1970
    %3070 = vmatprep.subr.mxu0 0.0
    %3071 = vmatpush1.msra.mxu0 %v1973
    %3072 = vmatprep.subr.mxu0 0.0
    %3073 = vmatpush1.msra.mxu0 %v1976
    %3074 = vmatprep.subr.mxu0 0.0
    %3075 = vmatpush1.msra.mxu0 %v1979
    %3076 = vmatprep.subr.mxu0 0.0
    %3077 = vmatpush1.msra.mxu0 %v1982
    %3078 = vmatprep.subr.mxu0 0.0
    %3079 = vmatpush1.msra.mxu0 0.0
    %3080 = vmatprep.subr.mxu0 0.0
    %3081 = vmatpush1.msra.mxu0 0.0
    %3082 = vmatprep.subr.mxu0 0.0
    %3083 = vmatpush1.msra.mxu0 0.0
    %3084 = vmatprep.subr.mxu0 0.0
    %3085 = vmatpush1.msra.mxu0 0.0
    %3086 = vmatprep.subr.mxu0 0.0
    %3087 = vmatpush1.msra.mxu0 0.0
    %3088 = vmatprep.subr.mxu0 0.0
    %3089 = vmatpush1.msra.mxu0 0.0
    %3090 = vmatprep.subr.mxu0 0.0
    %3091 = vmatpush1.msra.mxu0 0.0
    %3092 = vmatprep.subr.mxu0 0.0
    %3093 = vmatpush1.msra.mxu0 0.0
    %3094 = vmatprep.subr.mxu0 0.0
    %3095 = vmatpush1.msra.mxu0 0.0
    %3096 = vmatprep.subr.mxu0 0.0
    %3097 = vmatpush1.msra.mxu0 0.0
    %3098 = vmatprep.subr.mxu0 0.0
    %3099 = vmatpush1.msra.mxu0 0.0
    %3100 = vmatprep.subr.mxu0 0.0
    %3101 = vmatpush1.msra.mxu0 0.0
    %3102 = vmatprep.subr.mxu0 0.0
    %3103 = vmatpush1.msra.mxu0 0.0
    %3104 = vmatprep.subr.mxu0 0.0
    %3105 = vmatpush1.msra.mxu0 0.0
    %3106 = vmatprep.subr.mxu0 0.0
    %3107 = vmatpush1.msra.mxu0 0.0
    %3108 = vmatprep.subr.mxu0 0.0
    %3109 = vmatpush1.msra.mxu0 0.0
    %3110 = vmatprep.mubr.f32.mxu0 0.0
    %3111 = vmatmul.mubr.f32.gmra.mrb[0].mxu0 %v2972
    %v3112 = vpop.f32.mrb[0].mxu0
    %v3113 = vadd.f32 0.0, %v3112
    %v3114 = vpop.f32.mrb[0].mxu0
    %3115 = vdwg.mxu0
    %v3116 = vadd.f32 %v2974, %v3042
    %v3117 = vxor.u32 %v3116, 2147483648
    %v3118 = vmul.f32 %v3117, 1.442695
    %v3119 = vpow.pop %v3118
    %v3120 = vadd.f32 %v3119, 1.0
    %v3121 = vrcp.pop %v3120
    %v3122 = vmul.f32 1.0, %v3121
    %v3124 = vrot.slane %v2974, 2
    %v3126 = vadd.f32 %v3124, %v3044
    %v3127 = vxor.u32 %v3126, 2147483648
    %v3128 = vmul.f32 %v3127, 1.442695
    %v3129 = vpow.pop %v3128
    %v3130 = vadd.f32 %v3129, 1.0
    %v3131 = vrcp.pop %v3130
    %v3132 = vmul.f32 1.0, %v3131
    %v3133 = vadd.f32 %v3113, %v2451
    %v3134 = vmul.f32 %v3122, %v3133
    %v3135 = vrot.slane %v2974, 4
    %v3137 = vadd.f32 %v3135, %v3134
    %v3138 = vtanh.pop %v3137
    %v3139 = vsub.f32 1.0, %v3132
    %v3140 = vmul.f32 %v3139, %v3138
    %v3141 = vmul.f32 %v3132, %v2972
    %v3142 = vadd.f32 %v3140, %v3141
    %3143 = vst [vmem:[%s1360] sm:$0x3] %v3142
    %v3144 = vld [vmem:[%s1362] sm:$0x3f]
    %3145 = vmatprep.subr.mxu0 %v1936
    %3146 = vmatpush1.msra.mxu0 %v1935
    %3147 = vmatprep.subr.mxu0 %v1939
    %3148 = vmatpush1.msra.mxu0 %v1938
    %3149 = vmatprep.subr.mxu0 %v1942
    %3150 = vmatpush1.msra.mxu0 %v1941
    %3151 = vmatprep.subr.mxu0 %v1945
    %3152 = vmatpush1.msra.mxu0 %v1944
    %3153 = vmatprep.subr.mxu0 %v1948
    %3154 = vmatpush1.msra.mxu0 %v1947
    %3155 = vmatprep.subr.mxu0 %v1951
    %3156 = vmatpush1.msra.mxu0 %v1950
    %3157 = vmatprep.subr.mxu0 %v1954
    %3158 = vmatpush1.msra.mxu0 %v1953
    %3159 = vmatprep.subr.mxu0 %v1957
    %3160 = vmatpush1.msra.mxu0 %v1956
    %3161 = vmatprep.subr.mxu0 %v1960
    %3162 = vmatpush1.msra.mxu0 %v1959
    %3163 = vmatprep.subr.mxu0 %v1963
    %3164 = vmatpush1.msra.mxu0 %v1962
    %3165 = vmatprep.subr.mxu0 %v1966
    %3166 = vmatpush1.msra.mxu0 %v1965
    %3167 = vmatprep.subr.mxu0 %v1969
    %3168 = vmatpush1.msra.mxu0 %v1968
    %3169 = vmatprep.subr.mxu0 %v1972
    %3170 = vmatpush1.msra.mxu0 %v1971
    %3171 = vmatprep.subr.mxu0 %v1975
    %3172 = vmatpush1.msra.mxu0 %v1974
    %3173 = vmatprep.subr.mxu0 %v1978
    %3174 = vmatpush1.msra.mxu0 %v1977
    %3175 = vmatprep.subr.mxu0 %v1981
    %3176 = vmatpush1.msra.mxu0 %v1980
    %3177 = vmatprep.subr.mxu0 0.0
    %3178 = vmatpush1.msra.mxu0 0.0
    %3179 = vmatprep.subr.mxu0 0.0
    %3180 = vmatpush1.msra.mxu0 0.0
    %3181 = vmatprep.subr.mxu0 0.0
    %3182 = vmatpush1.msra.mxu0 0.0
    %3183 = vmatprep.subr.mxu0 0.0
    %3184 = vmatpush1.msra.mxu0 0.0
    %3185 = vmatprep.subr.mxu0 0.0
    %3186 = vmatpush1.msra.mxu0 0.0
    %3187 = vmatprep.subr.mxu0 0.0
    %3188 = vmatpush1.msra.mxu0 0.0
    %3189 = vmatprep.subr.mxu0 0.0
    %3190 = vmatpush1.msra.mxu0 0.0
    %3191 = vmatprep.subr.mxu0 0.0
    %3192 = vmatpush1.msra.mxu0 0.0
    %3193 = vmatprep.subr.mxu0 0.0
    %3194 = vmatpush1.msra.mxu0 0.0
    %3195 = vmatprep.subr.mxu0 0.0
    %3196 = vmatpush1.msra.mxu0 0.0
    %3197 = vmatprep.subr.mxu0 0.0
    %3198 = vmatpush1.msra.mxu0 0.0
    %3199 = vmatprep.subr.mxu0 0.0
    %3200 = vmatpush1.msra.mxu0 0.0
    %3201 = vmatprep.subr.mxu0 0.0
    %3202 = vmatpush1.msra.mxu0 0.0
    %3203 = vmatprep.subr.mxu0 0.0
    %3204 = vmatpush1.msra.mxu0 0.0
    %3205 = vmatprep.subr.mxu0 0.0
    %3206 = vmatpush1.msra.mxu0 0.0
    %3207 = vmatprep.subr.mxu0 0.0
    %3208 = vmatpush1.msra.mxu0 0.0
    %3209 = vmatprep.mubr.f32.mxu0 0.0
    %3210 = vmatmul.mubr.f32.gmra.mrb[0].mxu0 %v3142
    %v3211 = vpop.f32.mrb[0].mxu0
    %v3212 = vadd.f32 0.0, %v3211
    %v3213 = vpop.f32.mrb[0].mxu0
    %v3214 = vadd.f32 0.0, %v3213
    %3215 = vdwg.mxu0
    %3216 = vmatprep.subr.mxu0 0.0
    %3217 = vmatpush1.msra.mxu0 %v1937
    %3218 = vmatprep.subr.mxu0 0.0
    %3219 = vmatpush1.msra.mxu0 %v1940
    %3220 = vmatprep.subr.mxu0 0.0
    %3221 = vmatpush1.msra.mxu0 %v1943
    %3222 = vmatprep.subr.mxu0 0.0
    %3223 = vmatpush1.msra.mxu0 %v1946
    %3224 = vmatprep.subr.mxu0 0.0
    %3225 = vmatpush1.msra.mxu0 %v1949
    %3226 = vmatprep.subr.mxu0 0.0
    %3227 = vmatpush1.msra.mxu0 %v1952
    %3228 = vmatprep.subr.mxu0 0.0
    %3229 = vmatpush1.msra.mxu0 %v1955
    %3230 = vmatprep.subr.mxu0 0.0
    %3231 = vmatpush1.msra.mxu0 %v1958
    %3232 = vmatprep.subr.mxu0 0.0
    %3233 = vmatpush1.msra.mxu0 %v1961
    %3234 = vmatprep.subr.mxu0 0.0
    %3235 = vmatpush1.msra.mxu0 %v1964
    %3236 = vmatprep.subr.mxu0 0.0
    %3237 = vmatpush1.msra.mxu0 %v1967
    %3238 = vmatprep.subr.mxu0 0.0
    %3239 = vmatpush1.msra.mxu0 %v1970
    %3240 = vmatprep.subr.mxu0 0.0
    %3241 = vmatpush1.msra.mxu0 %v1973
    %3242 = vmatprep.subr.mxu0 0.0
    %3243 = vmatpush1.msra.mxu0 %v1976
    %3244 = vmatprep.subr.mxu0 0.0
    %3245 = vmatpush1.msra.mxu0 %v1979
    %3246 = vmatprep.subr.mxu0 0.0
    %3247 = vmatpush1.msra.mxu0 %v1982
    %3248 = vmatprep.subr.mxu0 0.0
    %3249 = vmatpush1.msra.mxu0 0.0
    %3250 = vmatprep.subr.mxu0 0.0
    %3251 = vmatpush1.msra.mxu0 0.0
    %3252 = vmatprep.subr.mxu0 0.0
    %3253 = vmatpush1.msra.mxu0 0.0
    %3254 = vmatprep.subr.mxu0 0.0
    %3255 = vmatpush1.msra.mxu0 0.0
    %3256 = vmatprep.subr.mxu0 0.0
    %3257 = vmatpush1.msra.mxu0 0.0
    %3258 = vmatprep.subr.mxu0 0.0
    %3259 = vmatpush1.msra.mxu0 0.0
    %3260 = vmatprep.subr.mxu0 0.0
    %3261 = vmatpush1.msra.mxu0 0.0
    %3262 = vmatprep.subr.mxu0 0.0
    %3263 = vmatpush1.msra.mxu0 0.0
    %3264 = vmatprep.subr.mxu0 0.0
    %3265 = vmatpush1.msra.mxu0 0.0
    %3266 = vmatprep.subr.mxu0 0.0
    %3267 = vmatpush1.msra.mxu0 0.0
    %3268 = vmatprep.subr.mxu0 0.0
    %3269 = vmatpush1.msra.mxu0 0.0
    %3270 = vmatprep.subr.mxu0 0.0
    %3271 = vmatpush1.msra.mxu0 0.0
    %3272 = vmatprep.subr.mxu0 0.0
    %3273 = vmatpush1.msra.mxu0 0.0
    %3274 = vmatprep.subr.mxu0 0.0
    %3275 = vmatpush1.msra.mxu0 0.0
    %3276 = vmatprep.subr.mxu0 0.0
    %3277 = vmatpush1.msra.mxu0 0.0
    %3278 = vmatprep.subr.mxu0 0.0
    %3279 = vmatpush1.msra.mxu0 0.0
    %3280 = vmatprep.mubr.f32.mxu0 0.0
    %3281 = vmatmul.mubr.f32.gmra.mrb[0].mxu0 %v3142
    %v3282 = vpop.f32.mrb[0].mxu0
    %v3283 = vadd.f32 0.0, %v3282
    %v3284 = vpop.f32.mrb[0].mxu0
    %3285 = vdwg.mxu0
    %v3286 = vadd.f32 %v3144, %v3212
    %v3287 = vxor.u32 %v3286, 2147483648
    %v3288 = vmul.f32 %v3287, 1.442695
    %v3289 = vpow.pop %v3288
    %v3290 = vadd.f32 %v3289, 1.0
    %v3291 = vrcp.pop %v3290
    %v3292 = vmul.f32 1.0, %v3291
    %v3294 = vrot.slane %v3144, 2
    %v3296 = vadd.f32 %v3294, %v3214
    %v3297 = vxor.u32 %v3296, 2147483648
    %v3298 = vmul.f32 %v3297, 1.442695
    %v3299 = vpow.pop %v3298
    %v3300 = vadd.f32 %v3299, 1.0
    %v3301 = vrcp.pop %v3300
    %v3302 = vmul.f32 1.0, %v3301
    %v3303 = vadd.f32 %v3283, %v2451
    %v3304 = vmul.f32 %v3292, %v3303
    %v3305 = vrot.slane %v3144, 4
    %v3307 = vadd.f32 %v3305, %v3304
    %v3308 = vtanh.pop %v3307
    %v3309 = vsub.f32 1.0, %v3302
    %v3310 = vmul.f32 %v3309, %v3308
    %v3311 = vmul.f32 %v3302, %v3142
    %v3312 = vadd.f32 %v3310, %v3311
    %3313 = vst [vmem:[%s1532] sm:$0x3] %v3312
    %v3314 = vld [vmem:[%s1534] sm:$0x3f]
    %3315 = vmatprep.subr.mxu0 %v1936
    %3316 = vmatpush1.msra.mxu0 %v1935
    %3317 = vmatprep.subr.mxu0 %v1939
    %3318 = vmatpush1.msra.mxu0 %v1938
    %3319 = vmatprep.subr.mxu0 %v1942
    %3320 = vmatpush1.msra.mxu0 %v1941
    %3321 = vmatprep.subr.mxu0 %v1945
    %3322 = vmatpush1.msra.mxu0 %v1944
    %3323 = vmatprep.subr.mxu0 %v1948
    %3324 = vmatpush1.msra.mxu0 %v1947
    %3325 = vmatprep.subr.mxu0 %v1951
    %3326 = vmatpush1.msra.mxu0 %v1950
    %3327 = vmatprep.subr.mxu0 %v1954
    %3328 = vmatpush1.msra.mxu0 %v1953
    %3329 = vmatprep.subr.mxu0 %v1957
    %3330 = vmatpush1.msra.mxu0 %v1956
    %3331 = vmatprep.subr.mxu0 %v1960
    %3332 = vmatpush1.msra.mxu0 %v1959
    %3333 = vmatprep.subr.mxu0 %v1963
    %3334 = vmatpush1.msra.mxu0 %v1962
    %3335 = vmatprep.subr.mxu0 %v1966
    %3336 = vmatpush1.msra.mxu0 %v1965
    %3337 = vmatprep.subr.mxu0 %v1969
    %3338 = vmatpush1.msra.mxu0 %v1968
    %3339 = vmatprep.subr.mxu0 %v1972
    %3340 = vmatpush1.msra.mxu0 %v1971
    %3341 = vmatprep.subr.mxu0 %v1975
    %3342 = vmatpush1.msra.mxu0 %v1974
    %3343 = vmatprep.subr.mxu0 %v1978
    %3344 = vmatpush1.msra.mxu0 %v1977
    %3345 = vmatprep.subr.mxu0 %v1981
    %3346 = vmatpush1.msra.mxu0 %v1980
    %3347 = vmatprep.subr.mxu0 0.0
    %3348 = vmatpush1.msra.mxu0 0.0
    %3349 = vmatprep.subr.mxu0 0.0
    %3350 = vmatpush1.msra.mxu0 0.0
    %3351 = vmatprep.subr.mxu0 0.0
    %3352 = vmatpush1.msra.mxu0 0.0
    %3353 = vmatprep.subr.mxu0 0.0
    %3354 = vmatpush1.msra.mxu0 0.0
    %3355 = vmatprep.subr.mxu0 0.0
    %3356 = vmatpush1.msra.mxu0 0.0
    %3357 = vmatprep.subr.mxu0 0.0
    %3358 = vmatpush1.msra.mxu0 0.0
    %3359 = vmatprep.subr.mxu0 0.0
    %3360 = vmatpush1.msra.mxu0 0.0
    %3361 = vmatprep.subr.mxu0 0.0
    %3362 = vmatpush1.msra.mxu0 0.0
    %3363 = vmatprep.subr.mxu0 0.0
    %3364 = vmatpush1.msra.mxu0 0.0
    %3365 = vmatprep.subr.mxu0 0.0
    %3366 = vmatpush1.msra.mxu0 0.0
    %3367 = vmatprep.subr.mxu0 0.0
    %3368 = vmatpush1.msra.mxu0 0.0
    %3369 = vmatprep.subr.mxu0 0.0
    %3370 = vmatpush1.msra.mxu0 0.0
    %3371 = vmatprep.subr.mxu0 0.0
    %3372 = vmatpush1.msra.mxu0 0.0
    %3373 = vmatprep.subr.mxu0 0.0
    %3374 = vmatpush1.msra.mxu0 0.0
    %3375 = vmatprep.subr.mxu0 0.0
    %3376 = vmatpush1.msra.mxu0 0.0
    %3377 = vmatprep.subr.mxu0 0.0
    %3378 = vmatpush1.msra.mxu0 0.0
    %3379 = vmatprep.mubr.f32.mxu0 0.0
    %3380 = vmatmul.mubr.f32.gmra.mrb[0].mxu0 %v3312
    %v3381 = vpop.f32.mrb[0].mxu0
    %v3382 = vadd.f32 0.0, %v3381
    %v3383 = vpop.f32.mrb[0].mxu0
    %v3384 = vadd.f32 0.0, %v3383
    %3385 = vdwg.mxu0
    %3386 = vmatprep.subr.mxu0 0.0
    %3387 = vmatpush1.msra.mxu0 %v1937
    %3388 = vmatprep.subr.mxu0 0.0
    %3389 = vmatpush1.msra.mxu0 %v1940
    %3390 = vmatprep.subr.mxu0 0.0
    %3391 = vmatpush1.msra.mxu0 %v1943
    %3392 = vmatprep.subr.mxu0 0.0
    %3393 = vmatpush1.msra.mxu0 %v1946
    %3394 = vmatprep.subr.mxu0 0.0
    %3395 = vmatpush1.msra.mxu0 %v1949
    %3396 = vmatprep.subr.mxu0 0.0
    %3397 = vmatpush1.msra.mxu0 %v1952
    %3398 = vmatprep.subr.mxu0 0.0
    %3399 = vmatpush1.msra.mxu0 %v1955
    %3400 = vmatprep.subr.mxu0 0.0
    %3401 = vmatpush1.msra.mxu0 %v1958
    %3402 = vmatprep.subr.mxu0 0.0
    %3403 = vmatpush1.msra.mxu0 %v1961
    %3404 = vmatprep.subr.mxu0 0.0
    %3405 = vmatpush1.msra.mxu0 %v1964
    %3406 = vmatprep.subr.mxu0 0.0
    %3407 = vmatpush1.msra.mxu0 %v1967
    %3408 = vmatprep.subr.mxu0 0.0
    %3409 = vmatpush1.msra.mxu0 %v1970
    %3410 = vmatprep.subr.mxu0 0.0
    %3411 = vmatpush1.msra.mxu0 %v1973
    %3412 = vmatprep.subr.mxu0 0.0
    %3413 = vmatpush1.msra.mxu0 %v1976
    %3414 = vmatprep.subr.mxu0 0.0
    %3415 = vmatpush1.msra.mxu0 %v1979
    %3416 = vmatprep.subr.mxu0 0.0
    %3417 = vmatpush1.msra.mxu0 %v1982
    %3418 = vmatprep.subr.mxu0 0.0
    %3419 = vmatpush1.msra.mxu0 0.0
    %3420 = vmatprep.subr.mxu0 0.0
    %3421 = vmatpush1.msra.mxu0 0.0
    %3422 = vmatprep.subr.mxu0 0.0
    %3423 = vmatpush1.msra.mxu0 0.0
    %3424 = vmatprep.subr.mxu0 0.0
    %3425 = vmatpush1.msra.mxu0 0.0
    %3426 = vmatprep.subr.mxu0 0.0
    %3427 = vmatpush1.msra.mxu0 0.0
    %3428 = vmatprep.subr.mxu0 0.0
    %3429 = vmatpush1.msra.mxu0 0.0
    %3430 = vmatprep.subr.mxu0 0.0
    %3431 = vmatpush1.msra.mxu0 0.0
    %3432 = vmatprep.subr.mxu0 0.0
    %3433 = vmatpush1.msra.mxu0 0.0
    %3434 = vmatprep.subr.mxu0 0.0
    %3435 = vmatpush1.msra.mxu0 0.0
    %3436 = vmatprep.subr.mxu0 0.0
    %3437 = vmatpush1.msra.mxu0 0.0
    %3438 = vmatprep.subr.mxu0 0.0
    %3439 = vmatpush1.msra.mxu0 0.0
    %3440 = vmatprep.subr.mxu0 0.0
    %3441 = vmatpush1.msra.mxu0 0.0
    %3442 = vmatprep.subr.mxu0 0.0
    %3443 = vmatpush1.msra.mxu0 0.0
    %3444 = vmatprep.subr.mxu0 0.0
    %3445 = vmatpush1.msra.mxu0 0.0
    %3446 = vmatprep.subr.mxu0 0.0
    %3447 = vmatpush1.msra.mxu0 0.0
    %3448 = vmatprep.subr.mxu0 0.0
    %3449 = vmatpush1.msra.mxu0 0.0
    %3450 = vmatprep.mubr.f32.mxu0 0.0
    %3451 = vmatmul.mubr.f32.gmra.mrb[0].mxu0 %v3312
    %v3452 = vpop.f32.mrb[0].mxu0
    %v3453 = vadd.f32 0.0, %v3452
    %v3454 = vpop.f32.mrb[0].mxu0
    %3455 = vdwg.mxu0
    %v3456 = vadd.f32 %v3314, %v3382
    %v3457 = vxor.u32 %v3456, 2147483648
    %v3458 = vmul.f32 %v3457, 1.442695
    %v3459 = vpow.pop %v3458
    %v3460 = vadd.f32 %v3459, 1.0
    %v3461 = vrcp.pop %v3460
    %v3462 = vmul.f32 1.0, %v3461
    %v3464 = vrot.slane %v3314, 2
    %v3466 = vadd.f32 %v3464, %v3384
    %v3467 = vxor.u32 %v3466, 2147483648
    %v3468 = vmul.f32 %v3467, 1.442695
    %v3469 = vpow.pop %v3468
    %v3470 = vadd.f32 %v3469, 1.0
    %v3471 = vrcp.pop %v3470
    %v3472 = vmul.f32 1.0, %v3471
    %v3473 = vadd.f32 %v3453, %v2451
    %v3474 = vmul.f32 %v3462, %v3473
    %v3475 = vrot.slane %v3314, 4
    %v3477 = vadd.f32 %v3475, %v3474
    %v3478 = vtanh.pop %v3477
    %v3479 = vsub.f32 1.0, %v3472
    %v3480 = vmul.f32 %v3479, %v3478
    %v3481 = vmul.f32 %v3472, %v3312
    %v3482 = vadd.f32 %v3480, %v3481
    %3483 = vst [vmem:[%s1704] sm:$0x3] %v3482
    %v3484 = vld [vmem:[%s1706] sm:$0x3f]
    %3485 = vmatprep.subr.mxu0 %v1936
    %3486 = vmatpush1.msra.mxu0 %v1935
    %3487 = vmatprep.subr.mxu0 %v1939
    %3488 = vmatpush1.msra.mxu0 %v1938
    %3489 = vmatprep.subr.mxu0 %v1942
    %3490 = vmatpush1.msra.mxu0 %v1941
    %3491 = vmatprep.subr.mxu0 %v1945
    %3492 = vmatpush1.msra.mxu0 %v1944
    %3493 = vmatprep.subr.mxu0 %v1948
    %3494 = vmatpush1.msra.mxu0 %v1947
    %3495 = vmatprep.subr.mxu0 %v1951
    %3496 = vmatpush1.msra.mxu0 %v1950
    %3497 = vmatprep.subr.mxu0 %v1954
    %3498 = vmatpush1.msra.mxu0 %v1953
    %3499 = vmatprep.subr.mxu0 %v1957
    %3500 = vmatpush1.msra.mxu0 %v1956
    %3501 = vmatprep.subr.mxu0 %v1960
    %3502 = vmatpush1.msra.mxu0 %v1959
    %3503 = vmatprep.subr.mxu0 %v1963
    %3504 = vmatpush1.msra.mxu0 %v1962
    %3505 = vmatprep.subr.mxu0 %v1966
    %3506 = vmatpush1.msra.mxu0 %v1965
    %3507 = vmatprep.subr.mxu0 %v1969
    %3508 = vmatpush1.msra.mxu0 %v1968
    %3509 = vmatprep.subr.mxu0 %v1972
    %3510 = vmatpush1.msra.mxu0 %v1971
    %3511 = vmatprep.subr.mxu0 %v1975
    %3512 = vmatpush1.msra.mxu0 %v1974
    %3513 = vmatprep.subr.mxu0 %v1978
    %3514 = vmatpush1.msra.mxu0 %v1977
    %3515 = vmatprep.subr.mxu0 %v1981
    %3516 = vmatpush1.msra.mxu0 %v1980
    %3517 = vmatprep.subr.mxu0 0.0
    %3518 = vmatpush1.msra.mxu0 0.0
    %3519 = vmatprep.subr.mxu0 0.0
    %3520 = vmatpush1.msra.mxu0 0.0
    %3521 = vmatprep.subr.mxu0 0.0
    %3522 = vmatpush1.msra.mxu0 0.0
    %3523 = vmatprep.subr.mxu0 0.0
    %3524 = vmatpush1.msra.mxu0 0.0
    %3525 = vmatprep.subr.mxu0 0.0
    %3526 = vmatpush1.msra.mxu0 0.0
    %3527 = vmatprep.subr.mxu0 0.0
    %3528 = vmatpush1.msra.mxu0 0.0
    %3529 = vmatprep.subr.mxu0 0.0
    %3530 = vmatpush1.msra.mxu0 0.0
    %3531 = vmatprep.subr.mxu0 0.0
    %3532 = vmatpush1.msra.mxu0 0.0
    %3533 = vmatprep.subr.mxu0 0.0
    %3534 = vmatpush1.msra.mxu0 0.0
    %3535 = vmatprep.subr.mxu0 0.0
    %3536 = vmatpush1.msra.mxu0 0.0
    %3537 = vmatprep.subr.mxu0 0.0
    %3538 = vmatpush1.msra.mxu0 0.0
    %3539 = vmatprep.subr.mxu0 0.0
    %3540 = vmatpush1.msra.mxu0 0.0
    %3541 = vmatprep.subr.mxu0 0.0
    %3542 = vmatpush1.msra.mxu0 0.0
    %3543 = vmatprep.subr.mxu0 0.0
    %3544 = vmatpush1.msra.mxu0 0.0
    %3545 = vmatprep.subr.mxu0 0.0
    %3546 = vmatpush1.msra.mxu0 0.0
    %3547 = vmatprep.subr.mxu0 0.0
    %3548 = vmatpush1.msra.mxu0 0.0
    %3549 = vmatprep.mubr.f32.mxu0 0.0
    %3550 = vmatmul.mubr.f32.gmra.mrb[0].mxu0 %v3482
    %v3551 = vpop.f32.mrb[0].mxu0
    %v3552 = vadd.f32 0.0, %v3551
    %v3553 = vpop.f32.mrb[0].mxu0
    %v3554 = vadd.f32 0.0, %v3553
    %3555 = vdwg.mxu0
    %3556 = vmatprep.subr.mxu0 0.0
    %3557 = vmatpush1.msra.mxu0 %v1937
    %3558 = vmatprep.subr.mxu0 0.0
    %3559 = vmatpush1.msra.mxu0 %v1940
    %3560 = vmatprep.subr.mxu0 0.0
    %3561 = vmatpush1.msra.mxu0 %v1943
    %3562 = vmatprep.subr.mxu0 0.0
    %3563 = vmatpush1.msra.mxu0 %v1946
    %3564 = vmatprep.subr.mxu0 0.0
    %3565 = vmatpush1.msra.mxu0 %v1949
    %3566 = vmatprep.subr.mxu0 0.0
    %3567 = vmatpush1.msra.mxu0 %v1952
    %3568 = vmatprep.subr.mxu0 0.0
    %3569 = vmatpush1.msra.mxu0 %v1955
    %3570 = vmatprep.subr.mxu0 0.0
    %3571 = vmatpush1.msra.mxu0 %v1958
    %3572 = vmatprep.subr.mxu0 0.0
    %3573 = vmatpush1.msra.mxu0 %v1961
    %3574 = vmatprep.subr.mxu0 0.0
    %3575 = vmatpush1.msra.mxu0 %v1964
    %3576 = vmatprep.subr.mxu0 0.0
    %3577 = vmatpush1.msra.mxu0 %v1967
    %3578 = vmatprep.subr.mxu0 0.0
    %3579 = vmatpush1.msra.mxu0 %v1970
    %3580 = vmatprep.subr.mxu0 0.0
    %3581 = vmatpush1.msra.mxu0 %v1973
    %3582 = vmatprep.subr.mxu0 0.0
    %3583 = vmatpush1.msra.mxu0 %v1976
    %3584 = vmatprep.subr.mxu0 0.0
    %3585 = vmatpush1.msra.mxu0 %v1979
    %3586 = vmatprep.subr.mxu0 0.0
    %3587 = vmatpush1.msra.mxu0 %v1982
    %3588 = vmatprep.subr.mxu0 0.0
    %3589 = vmatpush1.msra.mxu0 0.0
    %3590 = vmatprep.subr.mxu0 0.0
    %3591 = vmatpush1.msra.mxu0 0.0
    %3592 = vmatprep.subr.mxu0 0.0
    %3593 = vmatpush1.msra.mxu0 0.0
    %3594 = vmatprep.subr.mxu0 0.0
    %3595 = vmatpush1.msra.mxu0 0.0
    %3596 = vmatprep.subr.mxu0 0.0
    %3597 = vmatpush1.msra.mxu0 0.0
    %3598 = vmatprep.subr.mxu0 0.0
    %3599 = vmatpush1.msra.mxu0 0.0
    %3600 = vmatprep.subr.mxu0 0.0
    %3601 = vmatpush1.msra.mxu0 0.0
    %3602 = vmatprep.subr.mxu0 0.0
    %3603 = vmatpush1.msra.mxu0 0.0
    %3604 = vmatprep.subr.mxu0 0.0
    %3605 = vmatpush1.msra.mxu0 0.0
    %3606 = vmatprep.subr.mxu0 0.0
    %3607 = vmatpush1.msra.mxu0 0.0
    %3608 = vmatprep.subr.mxu0 0.0
    %3609 = vmatpush1.msra.mxu0 0.0
    %3610 = vmatprep.subr.mxu0 0.0
    %3611 = vmatpush1.msra.mxu0 0.0
    %3612 = vmatprep.subr.mxu0 0.0
    %3613 = vmatpush1.msra.mxu0 0.0
    %3614 = vmatprep.subr.mxu0 0.0
    %3615 = vmatpush1.msra.mxu0 0.0
    %3616 = vmatprep.subr.mxu0 0.0
    %3617 = vmatpush1.msra.mxu0 0.0
    %3618 = vmatprep.subr.mxu0 0.0
    %3619 = vmatpush1.msra.mxu0 0.0
    %3620 = vmatprep.mubr.f32.mxu0 0.0
    %3621 = vmatmul.mubr.f32.gmra.mrb[0].mxu0 %v3482
    %v3622 = vpop.f32.mrb[0].mxu0
    %v3623 = vadd.f32 0.0, %v3622
    %v3624 = vpop.f32.mrb[0].mxu0
    %3625 = vdwg.mxu0
    %v3626 = vadd.f32 %v3484, %v3552
    %v3627 = vxor.u32 %v3626, 2147483648
    %v3628 = vmul.f32 %v3627, 1.442695
    %v3629 = vpow.pop %v3628
    %v3630 = vadd.f32 %v3629, 1.0
    %v3631 = vrcp.pop %v3630
    %v3632 = vmul.f32 1.0, %v3631
    %v3634 = vrot.slane %v3484, 2
    %v3636 = vadd.f32 %v3634, %v3554
    %v3637 = vxor.u32 %v3636, 2147483648
    %v3638 = vmul.f32 %v3637, 1.442695
    %v3639 = vpow.pop %v3638
    %v3640 = vadd.f32 %v3639, 1.0
    %v3641 = vrcp.pop %v3640
    %v3642 = vmul.f32 1.0, %v3641
    %v3643 = vadd.f32 %v3623, %v2451
    %v3644 = vmul.f32 %v3632, %v3643
    %v3645 = vrot.slane %v3484, 4
    %v3647 = vadd.f32 %v3645, %v3644
    %v3648 = vtanh.pop %v3647
    %v3649 = vsub.f32 1.0, %v3642
    %v3650 = vmul.f32 %v3649, %v3648
    %v3651 = vmul.f32 %v3642, %v3482
    %v3652 = vadd.f32 %v3650, %v3651
    %3653 = vst [vmem:[%s1876] sm:$0x3] %v3652
    %v3654 = vld [vmem:[#allocation3] sm:$0x3]
    %v3655 = vld [vmem:[#allocation3 + $0x2] sm:$0x3]
    %v3656 = vld [vmem:[#allocation3 + $0x4] sm:$0x3]
    %v3657 = vld [vmem:[#allocation3 + $0x6] sm:$0x3]
    %v3658 = vld [vmem:[#allocation3 + $0x8] sm:$0x3]
    %v3659 = vld [vmem:[#allocation3 + $0xa] sm:$0x3]
    %v3660 = vld [vmem:[#allocation3 + $0xc] sm:$0x3]
    %v3661 = vld [vmem:[#allocation3 + $0xe] sm:$0x3]
    %v3662 = vld [vmem:[#allocation13] sm:$0xff]
    %v3663 = vld [vmem:[#allocation13 + $0x8] sm:$0xff]
    %v3664 = vld [vmem:[#allocation13 + $0x10] sm:$0xff]
    %v3665 = vld [vmem:[#allocation13 + $0x18] sm:$0xff]
    %v3666 = vld [vmem:[#allocation13 + $0x20] sm:$0xff]
    %v3667 = vld [vmem:[#allocation13 + $0x28] sm:$0xff]
    %v3668 = vld [vmem:[#allocation13 + $0x30] sm:$0xff]
    %v3669 = vld [vmem:[#allocation13 + $0x38] sm:$0xff]
    %v3670 = vld [vmem:[#allocation13 + $0x40] sm:$0xff]
    %v3671 = vld [vmem:[#allocation13 + $0x48] sm:$0xff]
    %v3672 = vld [vmem:[#allocation13 + $0x50] sm:$0xff]
    %v3673 = vld [vmem:[#allocation13 + $0x58] sm:$0xff]
    %v3674 = vld [vmem:[#allocation13 + $0x60] sm:$0xff]
    %v3675 = vld [vmem:[#allocation13 + $0x68] sm:$0xff]
    %v3676 = vld [vmem:[#allocation13 + $0x70] sm:$0xff]
    %v3677 = vld [vmem:[#allocation13 + $0x78] sm:$0xff]
    %v3678 = vld [vmem:[%s11] sm:$0x1]
    %v3680 = vlaneseq
    %v3681 = vshrl.u32 %v3680, 7
    %v3682 = vsub.s32 0, %v3681
    %v3683 = vrot.slane %v3678, %v3682
    %v3693 = vcombine.low %v3654, %v3655
    %v3694 = vcombine.low %v3656, %v3657
    %v3696 = vunpack.c.l.s4 1983009808
    %v3697 = vunpack.c.0.s8 %v3696
    %v3698 = vlaneseq
    %v3699 = vshrl.u32 %v3698, 7
    %v3700 = vsub.s32 %v3697, %v3699
    %v3701 = vrot.slane %v3693, %v3700
    %v3703 = vunpack.c.l.s4 1983009808
    %v3704 = vunpack.c.0.s8 %v3703
    %v3705 = vlaneseq
    %v3706 = vshrl.u32 %v3705, 7
    %v3707 = vsub.s32 %v3704, %v3706
    %v3708 = vrot.slane %v3694, %v3707
    %v3709 = vcombine.low %v3701, %v3708
    %v3710 = vcombine.low %v3658, %v3659
    %v3711 = vcombine.low %v3660, %v3661
    %v3713 = vunpack.c.l.s4 1983009808
    %v3714 = vunpack.c.0.s8 %v3713
    %v3715 = vlaneseq
    %v3716 = vshrl.u32 %v3715, 7
    %v3717 = vsub.s32 %v3714, %v3716
    %v3718 = vrot.slane %v3710, %v3717
    %v3720 = vunpack.c.l.s4 1983009808
    %v3721 = vunpack.c.0.s8 %v3720
    %v3722 = vlaneseq
    %v3723 = vshrl.u32 %v3722, 7
    %v3724 = vsub.s32 %v3721, %v3723
    %v3725 = vrot.slane %v3711, %v3724
    %v3726 = vcombine.low %v3718, %v3725
    %3729 = vmatprep.subr.mxu0 0.0
    %3730 = vmatpush1.msra.mxu0 %v3662
    %3731 = vmatprep.subr.mxu0 0.0
    %3732 = vmatpush1.msra.mxu0 %v3663
    %3733 = vmatprep.subr.mxu0 0.0
    %3734 = vmatpush1.msra.mxu0 %v3664
    %3735 = vmatprep.subr.mxu0 0.0
    %3736 = vmatpush1.msra.mxu0 %v3665
    %3737 = vmatprep.subr.mxu0 0.0
    %3738 = vmatpush1.msra.mxu0 %v3666
    %3739 = vmatprep.subr.mxu0 0.0
    %3740 = vmatpush1.msra.mxu0 %v3667
    %3741 = vmatprep.subr.mxu0 0.0
    %3742 = vmatpush1.msra.mxu0 %v3668
    %3743 = vmatprep.subr.mxu0 0.0
    %3744 = vmatpush1.msra.mxu0 %v3669
    %3745 = vmatprep.subr.mxu0 0.0
    %3746 = vmatpush1.msra.mxu0 %v3670
    %3747 = vmatprep.subr.mxu0 0.0
    %3748 = vmatpush1.msra.mxu0 %v3671
    %3749 = vmatprep.subr.mxu0 0.0
    %3750 = vmatpush1.msra.mxu0 %v3672
    %3751 = vmatprep.subr.mxu0 0.0
    %3752 = vmatpush1.msra.mxu0 %v3673
    %3753 = vmatprep.subr.mxu0 0.0
    %3754 = vmatpush1.msra.mxu0 %v3674
    %3755 = vmatprep.subr.mxu0 0.0
    %3756 = vmatpush1.msra.mxu0 %v3675
    %3757 = vmatprep.subr.mxu0 0.0
    %3758 = vmatpush1.msra.mxu0 %v3676
    %3759 = vmatprep.subr.mxu0 0.0
    %3760 = vmatpush1.msra.mxu0 %v3677
    %3761 = vmatprep.subr.mxu0 0.0
    %3762 = vmatpush1.msra.mxu0 0.0
    %3763 = vmatprep.subr.mxu0 0.0
    %3764 = vmatpush1.msra.mxu0 0.0
    %3765 = vmatprep.subr.mxu0 0.0
    %3766 = vmatpush1.msra.mxu0 0.0
    %3767 = vmatprep.subr.mxu0 0.0
    %3768 = vmatpush1.msra.mxu0 0.0
    %3769 = vmatprep.subr.mxu0 0.0
    %3770 = vmatpush1.msra.mxu0 0.0
    %3771 = vmatprep.subr.mxu0 0.0
    %3772 = vmatpush1.msra.mxu0 0.0
    %3773 = vmatprep.subr.mxu0 0.0
    %3774 = vmatpush1.msra.mxu0 0.0
    %3775 = vmatprep.subr.mxu0 0.0
    %3776 = vmatpush1.msra.mxu0 0.0
    %3777 = vmatprep.subr.mxu0 0.0
    %3778 = vmatpush1.msra.mxu0 0.0
    %3779 = vmatprep.subr.mxu0 0.0
    %3780 = vmatpush1.msra.mxu0 0.0
    %3781 = vmatprep.subr.mxu0 0.0
    %3782 = vmatpush1.msra.mxu0 0.0
    %3783 = vmatprep.subr.mxu0 0.0
    %3784 = vmatpush1.msra.mxu0 0.0
    %3785 = vmatprep.subr.mxu0 0.0
    %3786 = vmatpush1.msra.mxu0 0.0
    %3787 = vmatprep.subr.mxu0 0.0
    %3788 = vmatpush1.msra.mxu0 0.0
    %3789 = vmatprep.subr.mxu0 0.0
    %3790 = vmatpush1.msra.mxu0 0.0
    %3791 = vmatprep.subr.mxu0 0.0
    %3792 = vmatpush1.msra.mxu0 0.0
    %3793 = vmatprep.mubr.f32.mxu0 0.0
    %3794 = vmatmul.mubr.f32.gmra.mrb[0].mxu0 %v3709
    %v3795 = vpop.f32.mrb[0].mxu0
    %v3796 = vadd.f32 %v3683, %v3795
    %v3797 = vpop.f32.mrb[0].mxu0
    %3798 = vmatprep.mubr.f32.mxu0 0.0
    %3799 = vmatmul.mubr.f32.gmra.mrb[0].mxu0 %v3726
    %v3800 = vpop.f32.mrb[0].mxu0
    %v3801 = vadd.f32 %v3683, %v3800
    %v3802 = vpop.f32.mrb[0].mxu0
    %3803 = vdwg.mxu0
    %v3804 = vxor.u32 %v3796, 2147483648
    %v3805 = vxor.u32 %v3801, 2147483648
    %v3806 = vmul.f32 %v3804, 1.442695
    %v3807 = vpow.pop %v3806
    %v3808 = vmul.f32 %v3805, 1.442695
    %v3809 = vpow.pop %v3808
    %v3810 = vadd.f32 %v3807, 1.0
    %v3811 = vadd.f32 %v3809, 1.0
    %v3812 = vrcp.pop %v3810
    %v3813 = vmul.f32 1.0, %v3812
    %v3814 = vrcp.pop %v3811
    %v3815 = vmul.f32 1.0, %v3814
    %v3818 = vcombine.high %v3813, %v3813
    %v3820 = vunpack.c.l.s4 1983009808
    %v3821 = vunpack.c.0.s8 %v3820
    %v3822 = vlaneseq
    %v3823 = vshrl.u32 %v3822, 7
    %v3824 = vsub.s32 %v3821, %v3823
    %v3825 = vrot.slane %v3813, %v3824
    %v3827 = vunpack.c.l.s4 1983009808
    %v3828 = vunpack.c.0.s8 %v3827
    %v3829 = vlaneseq
    %v3830 = vshrl.u32 %v3829, 7
    %v3831 = vsub.s32 %v3828, %v3830
    %v3832 = vrot.slane %v3818, %v3831
    %v3833 = vcombine.high %v3825, %v3825
    %v3834 = vcombine.high %v3832, %v3832
    %v3835 = vcombine.high %v3815, %v3815
    %v3837 = vunpack.c.l.s4 1983009808
    %v3838 = vunpack.c.0.s8 %v3837
    %v3839 = vlaneseq
    %v3840 = vshrl.u32 %v3839, 7
    %v3841 = vsub.s32 %v3838, %v3840
    %v3842 = vrot.slane %v3815, %v3841
    %v3844 = vunpack.c.l.s4 1983009808
    %v3845 = vunpack.c.0.s8 %v3844
    %v3846 = vlaneseq
    %v3847 = vshrl.u32 %v3846, 7
    %v3848 = vsub.s32 %v3845, %v3847
    %v3849 = vrot.slane %v3835, %v3848
    %v3850 = vcombine.high %v3842, %v3842
    %v3851 = vcombine.high %v3849, %v3849
    %v3860 = vld [vmem:[%s1] sm:$0x3]
    %vm3861 = vcmp.gt.s32.totalorder %v3860, 0
    %vm3862 = vcmp.gt.s32.totalorder %v3860, 1
    %vm3863 = vcmp.gt.s32.totalorder %v3860, 2
    %vm3864 = vcmp.gt.s32.totalorder %v3860, 3
    %vm3865 = vcmp.gt.s32.totalorder %v3860, 4
    %vm3866 = vcmp.gt.s32.totalorder %v3860, 5
    %vm3867 = vcmp.gt.s32.totalorder %v3860, 6
    %vm3868 = vcmp.gt.s32.totalorder %v3860, 7
    %v3869 = vld [vmem:[%s12] sm:$0x1]
    %v3870 = vsel %vm3861, 1, 0
    %v3871 = vsel %vm3862, 1, 0
    %v3872 = vsel %vm3863, 1, 0
    %v3873 = vsel %vm3864, 1, 0
    %v3874 = vsel %vm3865, 1, 0
    %v3875 = vsel %vm3866, 1, 0
    %v3876 = vsel %vm3867, 1, 0
    %v3877 = vsel %vm3868, 1, 0
    %3878 = vset.pattern.permute.xlu0 0
    %3879 = vperm.xlu0 %3878, %v3870
    %v3880 = vpop.permute.xlu0 %3879
    %3881 = vset.pattern.permute.xlu0 0
    %3882 = vperm.xlu0 %3881, %v3871
    %v3883 = vpop.permute.xlu0 %3882
    %3884 = vset.pattern.permute.xlu0 0
    %3885 = vperm.xlu0 %3884, %v3872
    %v3886 = vpop.permute.xlu0 %3885
    %3887 = vset.pattern.permute.xlu0 0
    %3888 = vperm.xlu0 %3887, %v3873
    %v3889 = vpop.permute.xlu0 %3888
    %3890 = vset.pattern.permute.xlu0 0
    %3891 = vperm.xlu0 %3890, %v3874
    %v3892 = vpop.permute.xlu0 %3891
    %3893 = vset.pattern.permute.xlu0 0
    %3894 = vperm.xlu0 %3893, %v3875
    %v3895 = vpop.permute.xlu0 %3894
    %3896 = vset.pattern.permute.xlu0 0
    %3897 = vperm.xlu0 %3896, %v3876
    %v3898 = vpop.permute.xlu0 %3897
    %3899 = vset.pattern.permute.xlu0 0
    %3900 = vperm.xlu0 %3899, %v3877
    %v3901 = vpop.permute.xlu0 %3900
    %vm3902 = vcmp.eq.s32.totalorder %v3880, 1
    %vm3903 = vcmp.eq.s32.totalorder %v3883, 1
    %vm3904 = vcmp.eq.s32.totalorder %v3886, 1
    %vm3905 = vcmp.eq.s32.totalorder %v3889, 1
    %vm3906 = vcmp.eq.s32.totalorder %v3892, 1
    %vm3907 = vcmp.eq.s32.totalorder %v3895, 1
    %vm3908 = vcmp.eq.s32.totalorder %v3898, 1
    %vm3909 = vcmp.eq.s32.totalorder %v3901, 1
    %v3911 = vlaneseq
    %v3912 = vshrl.u32 %v3911, 7
    %v3913 = vsub.s32 0, %v3912
    %v3914 = vrot.slane %v3869, %v3913
    %v3916 = vsel %vm3902, %v3825, %v3914
    %v3917 = vsel %vm3903, %v3833, %v3914
    %v3918 = vsel %vm3904, %v3832, %v3914
    %v3919 = vsel %vm3905, %v3834, %v3914
    %v3920 = vsel %vm3906, %v3842, %v3914
    %v3921 = vsel %vm3907, %v3850, %v3914
    %v3922 = vsel %vm3908, %v3849, %v3914
    %v3923 = vsel %vm3909, %v3851, %v3914
    %3924 = vst [vmem:[#allocation15] sm:$0x3] %v3916
    %3925 = vst [vmem:[#allocation15 + $0x2] sm:$0x3] %v3917
    %3926 = vst [vmem:[#allocation15 + $0x4] sm:$0x3] %v3918
    %3927 = vst [vmem:[#allocation15 + $0x6] sm:$0x3] %v3919
    %3928 = vst [vmem:[#allocation15 + $0x8] sm:$0x3] %v3920
    %3929 = vst [vmem:[#allocation15 + $0xa] sm:$0x3] %v3921
    %3930 = vst [vmem:[#allocation15 + $0xc] sm:$0x3] %v3922
    %3931 = vst [vmem:[#allocation15 + $0xe] sm:$0x3] %v3923
    // Predicated region
    $region78: #{tpu_custom_call.1} parent=1 // pred_check
      _
    $region79: #{tpu_custom_call.1} parent=1 // pred_check_branch
      %3933 = sbr.rel (0) target = $region81
    $region80: #{tpu_custom_call.1} parent=1 // pred_region
      %s3935 = ssub.s32 256, 256
      %3936 = vsyncadd [#allocation6], %s3935
      %s3937 = sshll.u32 [#allocation15], 4
      %s3938 = int_to_ptr.vmem [resolvable:$true] %s3937
      %3943 = dma.vmem_to_hbm [thread:$0]  %s3938, 256, %s13, [#allocation6], 32, 32, 2
    $region81: #{tpu_custom_call.1} parent=1 // pred_fallthru
      _
    // Predicated region
    $region82: #{tpu_custom_call.1} parent=1 // pred_check
      _
    $region83: #{tpu_custom_call.1} parent=1 // pred_check_branch
      %3945 = sbr.rel (0) target = $region85
    $region84: #{tpu_custom_call.1} parent=1 // pred_region
      %3946 = dma.done [#allocation6], 256
    $region85: #{tpu_custom_call.1} parent=1 // pred_fallthru
      _
    %3947 = vsyncpa [#allocation5], 1
    %3948 = vsyncpa [#allocation8], 1
    %3949 = vsyncpa [#allocation11], 1
    %3950 = vsyncpa [#allocation14], 1
    %3951 = vsyncpa [#allocation6], 1

</llo_original>
